<compile_context>
chip_gen: v7x
topology: tpu7x:2x2x1
jax: 0.10.0
libtpu: 0.0.40
codegen_flags: <defaults>
</compile_context>

<pallas_src>
import functools
import math

import jax
import jax.numpy as jnp
from jax import lax
from jax.experimental import pallas as pl
from jax.experimental.pallas import tpu as pltpu


PARAM_ORDER = [
    "wq1", "bq1", "wk1", "bk1", "wv1", "bv1", "wo1", "bo1",
    "wq2", "bq2", "wk2", "bk2", "wv2", "bv2", "wo2", "bo2",
    "w1", "b1", "w2", "b2",
]
_MATMUL_WEIGHTS = {"wq1", "wk1", "wv1", "wo1",
                   "wq2", "wk2", "wv2", "wo2", "w1", "w2"}


# ---------------------------------------------------------------------------
# In-kernel math helpers (traced inside the Pallas kernel body).
# ---------------------------------------------------------------------------
def _l2_normalize(x, eps=1e-12):
    # torch.nn.functional.normalize(x, p=2, dim=-1):  x / max(||x||, eps)
    ss = jnp.sum(x * x, axis=-1, keepdims=True)
    return x * lax.rsqrt(jnp.maximum(ss, eps * eps))   # rsqrt -> EUP


def _mha(q_in, kv_in, wq, bq, wk, bk, wv, bv, wo, bo, *, num_heads, d_head):
    """q_in: (Sq, D) f32, kv_in: (Sk, D) f32. Weights bf16 (fused over heads),
    biases f32. Returns (Sq, D) f32."""
    scale = 1.0 / math.sqrt(d_head)
    qb = q_in.astype(jnp.bfloat16)
    kb = kv_in.astype(jnp.bfloat16)

    # Fused projections: one wide MXU matmul each, f32 accumulation, bias once.
    q = jnp.dot(qb, wq, preferred_element_type=jnp.float32) + bq   # (Sq, H*dh)
    k = jnp.dot(kb, wk, preferred_element_type=jnp.float32) + bk   # (Sk, H*dh)
    v = jnp.dot(kb, wv, preferred_element_type=jnp.float32) + bv   # (Sk, H*dh)

    # Pre-scale Q once (cheaper than scaling every (Sq, Sk) score tile).
    q16 = (q * scale).astype(jnp.bfloat16)
    k16 = k.astype(jnp.bfloat16)
    v16 = v.astype(jnp.bfloat16)

    # Contract on d_head directly (no materialized transpose).
    dn = (((1,), (1,)), ((), ()))
    ctx = []
    for h in range(num_heads):                       # static unroll over heads
        sl = slice(h * d_head, (h + 1) * d_head)
        s = lax.dot_general(q16[:, sl], k16[:, sl], dn,
                            preferred_element_type=jnp.float32)
        s = s - jnp.max(s, axis=-1, keepdims=True)
        p = jnp.exp(s)                                            # EUP
        inv = pl.reciprocal(jnp.sum(p, axis=-1, keepdims=True), approx=True)
        attn = (p * inv).astype(jnp.bfloat16)
        ctx.append(jnp.dot(attn, v16[:, sl],
                           preferred_element_type=jnp.float32))
    # Single full-width output projection over the concatenated heads.
    ctx = jnp.concatenate(ctx, axis=-1).astype(jnp.bfloat16)       # (Sq, H*dh)
    return jnp.dot(ctx, wo, preferred_element_type=jnp.float32) + bo


# ---------------------------------------------------------------------------
# Pallas kernel: one decoder-layer forward for one (batch, query-tile) cell.
# ---------------------------------------------------------------------------
def decoder_kernel(xq_ref, xkv_ref, enc_ref,
                   wq1, bq1, wk1, bk1, wv1, bv1, wo1, bo1,
                   wq2, bq2, wk2, bk2, wv2, bv2, wo2, bo2,
                   w1, b1, w2, b2,
                   out_ref, *, num_heads, d_head):
    xq = xq_ref[...]     # (tq, D) f32  query tile
    xkv = xkv_ref[...]   # (S, D)  f32  full sequence (K/V for self-attention)
    enc = enc_ref[...]   # (Se, D) f32  encoder output (K/V for cross-attention)

    # 1) self-attention (mask_tgt=None) + residual + L2 normalize
    h = _mha(xq, xkv,
             wq1[...], bq1[...], wk1[...], bk1[...], wv1[...], bv1[...],
             wo1[...], bo1[...], num_heads=num_heads, d_head=d_head)
    x = _l2_normalize(xq + h)

    # 2) cross-attention against encoder output (mask_src=None)
    h = _mha(x, enc,
             wq2[...], bq2[...], wk2[...], bk2[...], wv2[...], bv2[...],
             wo2[...], bo2[...], num_heads=num_heads, d_head=d_head)
    x = _l2_normalize(x + h)

    # 3) feed forward: Linear -> ReLU -> Linear (bf16 operands, f32 accum)
    ff = jnp.maximum(
        jnp.dot(x.astype(jnp.bfloat16), w1[...],
                preferred_element_type=jnp.float32) + b1[...], 0.0)
    h = jnp.dot(ff.astype(jnp.bfloat16), w2[...],
                preferred_element_type=jnp.float32) + b2[...]
    x = _l2_normalize(x + h)

    out_ref[...] = x.astype(out_ref.dtype)


def decoder_forward(x, encoder_x, params, *, num_heads, d_head):
    B, S, D = x.shape
    Se = encoder_x.shape[1]

    # bf16 matmul weights in HBM (half the DMA / VMEM); biases stay f32.
    weights = []
    for name in PARAM_ORDER:
        w = params[name]
        if name in _MATMUL_WEIGHTS:
            w = w.astype(jnp.bfloat16)
        weights.append(w)

    # Query-tile the sequence (second "parallel" grid axis for megacore).
    tq = S if S <= 256 else 256
    n_s = pl.cdiv(S, tq)

    def _const2d(w):
        # Full-array weight block; block index constant -> stays VMEM-resident.
        return pl.BlockSpec(w.shape, lambda b, s: (0, 0))

    in_specs = [
        pl.BlockSpec((pl.Squeezed(), tq, D), lambda b, s: (b, s, 0)),   # x query tile
        pl.BlockSpec((pl.Squeezed(), S, D), lambda b, s: (b, 0, 0)),    # x full (K/V)
        pl.BlockSpec((pl.Squeezed(), Se, D), lambda b, s: (b, 0, 0)),   # encoder_x
    ] + [_const2d(w) for w in weights]
    out_specs = pl.BlockSpec((pl.Squeezed(), tq, D), lambda b, s: (b, s, 0))

    # Explicit VMEM budget with headroom (instead of the 16/32 MiB scoped default).
    weight_bytes = sum(int(w.size) * w.dtype.itemsize for w in weights)
    act_bytes = 4 * D * (2 * tq + S + Se)
    vmem_limit = int(min(64 * 1024 * 1024,
                         2 * weight_bytes + 4 * act_bytes + (8 << 20)))

    kernel = functools.partial(decoder_kernel, num_heads=num_heads, d_head=d_head)
    return pl.pallas_call(
        kernel,
        out_shape=jax.ShapeDtypeStruct((B, S, D), jnp.float32),
        grid_spec=pltpu.PrefetchScalarGridSpec(
            num_scalar_prefetch=0,
            grid=(B, n_s),
            in_specs=in_specs,
            out_specs=out_specs,
        ),
        compiler_params=pltpu.CompilerParams(
            dimension_semantics=("parallel", "parallel"),
            vmem_limit_bytes=vmem_limit),
    )(x, x, encoder_x, *weights)


# ---------------------------------------------------------------------------
# Deterministic parameter init + pure-JAX reference for a sanity check.
# ---------------------------------------------------------------------------
def init_params(key, d_model, num_heads, d_head, d_ff):
    ks = jax.random.split(key, 20)
    s = 0.05
    Hdh = num_heads * d_head

    def n(k, shape):
        return jax.random.normal(k, shape, jnp.float32) * s

    p = {}
    i = 0
    for tag in ("1", "2"):
        for name in ("q", "k", "v"):
            p[f"w{name}{tag}"] = n(ks[i], (d_model, Hdh)); i += 1
            p[f"b{name}{tag}"] = n(ks[i], (1, Hdh)); i += 1
        p[f"wo{tag}"] = n(ks[i], (Hdh, d_model)); i += 1
        p[f"bo{tag}"] = n(ks[i], (1, d_model)); i += 1
    p["w1"] = n(ks[i], (d_model, d_ff)); i += 1
    p["b1"] = n(ks[i], (1, d_ff)); i += 1
    p["w2"] = n(ks[i], (d_ff, d_model)); i += 1
    p["b2"] = n(ks[i], (1, d_model)); i += 1
    return p


def reference_forward(x, enc, p, num_heads, d_head):
    def l2n(v):
        return v / jnp.maximum(
            jnp.sqrt(jnp.sum(v * v, axis=-1, keepdims=True)), 1e-12)

    def mha(q_in, kv_in, wq, bq, wk, bk, wv, bv, wo, bo):
        B, Sq, _ = q_in.shape
        Sk = kv_in.shape[1]
        H = num_heads
        q = (q_in @ wq + bq).reshape(B, Sq, H, d_head)
        k = (kv_in @ wk + bk).reshape(B, Sk, H, d_head)
        v = (kv_in @ wv + bv).reshape(B, Sk, H, d_head)
        sc = jnp.einsum("bqhd,bkhd->bhqk", q, k) / math.sqrt(d_head)
        a = jax.nn.softmax(sc, axis=-1)
        ctx = jnp.einsum("bhqk,bkhd->bqhd", a, v).reshape(B, Sq, H * d_head)
        return ctx @ wo + bo

    h = mha(x, x, p["wq1"], p["bq1"], p["wk1"], p["bk1"],
            p["wv1"], p["bv1"], p["wo1"], p["bo1"])
    x = l2n(x + h)
    h = mha(x, enc, p["wq2"], p["bq2"], p["wk2"], p["bk2"],
            p["wv2"], p["bv2"], p["wo2"], p["bo2"])
    x = l2n(x + h)
    h = jnp.maximum(x @ p["w1"] + p["b1"], 0.0) @ p["w2"] + p["b2"]
    return l2n(x + h)


if __name__ == "__main__":
    # small shapes consistent with the module (d_model divisible by heads)
    B, S, Se = 2, 8, 8
    d_model, num_heads = 32, 4
    d_head = d_model // num_heads   # d_q = d_k = d_v
    d_ff = 64

    key = jax.random.PRNGKey(0)
    kx, kenc, kp = jax.random.split(key, 3)
    x = jax.random.normal(kx, (B, S, d_model), jnp.float32)
    encoder_x = jax.random.normal(kenc, (B, Se, d_model), jnp.float32)
    params = init_params(kp, d_model, num_heads, d_head, d_ff)

    out = decoder_forward(x, encoder_x, params,
                          num_heads=num_heads, d_head=d_head)
    out = jax.block_until_ready(out)

    ref = reference_forward(x, encoder_x, params, num_heads, d_head)
    assert out.shape == (B, S, d_model)
    # bf16 MXU operands + approx reciprocal -> looser tolerance than pure f32.
    assert jnp.allclose(out, ref, atol=2e-2, rtol=2e-2), "mismatch vs JAX reference"

    print("KERNEL_OK")
</pallas_src>

<mosaic_0001>
module attributes {stable_mosaic.version = 11 : i64} {
  func.func @decoder_kernel(%arg0: i32, %arg1: i32, %arg2: memref<1x8x32xf32, #tpu.memory_space<vmem>>, %arg3: memref<1x8x32xf32, #tpu.memory_space<vmem>>, %arg4: memref<1x8x32xf32, #tpu.memory_space<vmem>>, %arg5: memref<32x32xbf16, #tpu.memory_space<vmem>>, %arg6: memref<1x32xf32, #tpu.memory_space<vmem>>, %arg7: memref<32x32xbf16, #tpu.memory_space<vmem>>, %arg8: memref<1x32xf32, #tpu.memory_space<vmem>>, %arg9: memref<32x32xbf16, #tpu.memory_space<vmem>>, %arg10: memref<1x32xf32, #tpu.memory_space<vmem>>, %arg11: memref<32x32xbf16, #tpu.memory_space<vmem>>, %arg12: memref<1x32xf32, #tpu.memory_space<vmem>>, %arg13: memref<32x32xbf16, #tpu.memory_space<vmem>>, %arg14: memref<1x32xf32, #tpu.memory_space<vmem>>, %arg15: memref<32x32xbf16, #tpu.memory_space<vmem>>, %arg16: memref<1x32xf32, #tpu.memory_space<vmem>>, %arg17: memref<32x32xbf16, #tpu.memory_space<vmem>>, %arg18: memref<1x32xf32, #tpu.memory_space<vmem>>, %arg19: memref<32x32xbf16, #tpu.memory_space<vmem>>, %arg20: memref<1x32xf32, #tpu.memory_space<vmem>>, %arg21: memref<32x64xbf16, #tpu.memory_space<vmem>>, %arg22: memref<1x64xf32, #tpu.memory_space<vmem>>, %arg23: memref<64x32xbf16, #tpu.memory_space<vmem>>, %arg24: memref<1x32xf32, #tpu.memory_space<vmem>>, %arg25: memref<1x8x32xf32, #tpu.memory_space<vmem>>) attributes {dimension_semantics = [#tpu.dimension_semantics<parallel>, #tpu.dimension_semantics<parallel>], iteration_bounds = array<i64: 2, 1>, scalar_prefetch = 0 : i64, scratch_operands = 0 : i64, tpu.core_type = #tpu.core_type<tc>, window_params = [{transform_indices = @transform_0, window_bounds = array<i64: 1, 8, 32>}, {transform_indices = @transform_1, window_bounds = array<i64: 1, 8, 32>}, {transform_indices = @transform_2, window_bounds = array<i64: 1, 8, 32>}, {pipeline_mode = #tpu.pipeline_mode<synchronous>, transform_indices = @transform_3, window_bounds = array<i64: 32, 32>}, {pipeline_mode = #tpu.pipeline_mode<synchronous>, transform_indices = @transform_4, window_bounds = array<i64: 1, 32>}, {pipeline_mode = #tpu.pipeline_mode<synchronous>, transform_indices = @transform_5, window_bounds = array<i64: 32, 32>}, {pipeline_mode = #tpu.pipeline_mode<synchronous>, transform_indices = @transform_6, window_bounds = array<i64: 1, 32>}, {pipeline_mode = #tpu.pipeline_mode<synchronous>, transform_indices = @transform_7, window_bounds = array<i64: 32, 32>}, {pipeline_mode = #tpu.pipeline_mode<synchronous>, transform_indices = @transform_8, window_bounds = array<i64: 1, 32>}, {pipeline_mode = #tpu.pipeline_mode<synchronous>, transform_indices = @transform_9, window_bounds = array<i64: 32, 32>}, {pipeline_mode = #tpu.pipeline_mode<synchronous>, transform_indices = @transform_10, window_bounds = array<i64: 1, 32>}, {pipeline_mode = #tpu.pipeline_mode<synchronous>, transform_indices = @transform_11, window_bounds = array<i64: 32, 32>}, {pipeline_mode = #tpu.pipeline_mode<synchronous>, transform_indices = @transform_12, window_bounds = array<i64: 1, 32>}, {pipeline_mode = #tpu.pipeline_mode<synchronous>, transform_indices = @transform_13, window_bounds = array<i64: 32, 32>}, {pipeline_mode = #tpu.pipeline_mode<synchronous>, transform_indices = @transform_14, window_bounds = array<i64: 1, 32>}, {pipeline_mode = #tpu.pipeline_mode<synchronous>, transform_indices = @transform_15, window_bounds = array<i64: 32, 32>}, {pipeline_mode = #tpu.pipeline_mode<synchronous>, transform_indices = @transform_16, window_bounds = array<i64: 1, 32>}, {pipeline_mode = #tpu.pipeline_mode<synchronous>, transform_indices = @transform_17, window_bounds = array<i64: 32, 32>}, {pipeline_mode = #tpu.pipeline_mode<synchronous>, transform_indices = @transform_18, window_bounds = array<i64: 1, 32>}, {pipeline_mode = #tpu.pipeline_mode<synchronous>, transform_indices = @transform_19, window_bounds = array<i64: 32, 64>}, {pipeline_mode = #tpu.pipeline_mode<synchronous>, transform_indices = @transform_20, window_bounds = array<i64: 1, 64>}, {pipeline_mode = #tpu.pipeline_mode<synchronous>, transform_indices = @transform_21, window_bounds = array<i64: 64, 32>}, {pipeline_mode = #tpu.pipeline_mode<synchronous>, transform_indices = @transform_22, window_bounds = array<i64: 1, 32>}, {transform_indices = @transform_23, window_bounds = array<i64: 1, 8, 32>}]} {
    %c0 = arith.constant 0 : index
    %c0_0 = arith.constant 0 : index
    %c0_1 = arith.constant 0 : index
    %0 = vector.load %arg2[%c0, %c0_0, %c0_1] : memref<1x8x32xf32, #tpu.memory_space<vmem>>, vector<1x8x32xf32>
    %1 = vector.shape_cast %0 : vector<1x8x32xf32> to vector<8x32xf32>
    %c0_2 = arith.constant 0 : index
    %c0_3 = arith.constant 0 : index
    %c0_4 = arith.constant 0 : index
    %2 = vector.load %arg3[%c0_2, %c0_3, %c0_4] : memref<1x8x32xf32, #tpu.memory_space<vmem>>, vector<1x8x32xf32>
    %3 = vector.shape_cast %2 : vector<1x8x32xf32> to vector<8x32xf32>
    %c0_5 = arith.constant 0 : index
    %c0_6 = arith.constant 0 : index
    %c0_7 = arith.constant 0 : index
    %4 = vector.load %arg4[%c0_5, %c0_6, %c0_7] : memref<1x8x32xf32, #tpu.memory_space<vmem>>, vector<1x8x32xf32>
    %5 = vector.shape_cast %4 : vector<1x8x32xf32> to vector<8x32xf32>
    %c0_8 = arith.constant 0 : index
    %c0_9 = arith.constant 0 : index
    %6 = vector.load %arg5[%c0_8, %c0_9] : memref<32x32xbf16, #tpu.memory_space<vmem>>, vector<32x32xbf16>
    %c0_10 = arith.constant 0 : index
    %c0_11 = arith.constant 0 : index
    %7 = vector.load %arg6[%c0_10, %c0_11] : memref<1x32xf32, #tpu.memory_space<vmem>>, vector<1x32xf32>
    %c0_12 = arith.constant 0 : index
    %c0_13 = arith.constant 0 : index
    %8 = vector.load %arg7[%c0_12, %c0_13] : memref<32x32xbf16, #tpu.memory_space<vmem>>, vector<32x32xbf16>
    %c0_14 = arith.constant 0 : index
    %c0_15 = arith.constant 0 : index
    %9 = vector.load %arg8[%c0_14, %c0_15] : memref<1x32xf32, #tpu.memory_space<vmem>>, vector<1x32xf32>
    %c0_16 = arith.constant 0 : index
    %c0_17 = arith.constant 0 : index
    %10 = vector.load %arg9[%c0_16, %c0_17] : memref<32x32xbf16, #tpu.memory_space<vmem>>, vector<32x32xbf16>
    %c0_18 = arith.constant 0 : index
    %c0_19 = arith.constant 0 : index
    %11 = vector.load %arg10[%c0_18, %c0_19] : memref<1x32xf32, #tpu.memory_space<vmem>>, vector<1x32xf32>
    %c0_20 = arith.constant 0 : index
    %c0_21 = arith.constant 0 : index
    %12 = vector.load %arg11[%c0_20, %c0_21] : memref<32x32xbf16, #tpu.memory_space<vmem>>, vector<32x32xbf16>
    %c0_22 = arith.constant 0 : index
    %c0_23 = arith.constant 0 : index
    %13 = vector.load %arg12[%c0_22, %c0_23] : memref<1x32xf32, #tpu.memory_space<vmem>>, vector<1x32xf32>
    %14 = arith.truncf %1 : vector<8x32xf32> to vector<8x32xbf16>
    %15 = arith.truncf %3 : vector<8x32xf32> to vector<8x32xbf16>
    %cst = arith.constant dense<0.000000e+00> : vector<8x32xf32>
    %16 = tpu.matmul %14, %6, %cst {dimension_numbers = #tpu.dot_dimension_numbers<[1], [0], [0], [1], [0, 0, 1, 1], [], []>} : vector<8x32xbf16>, vector<32x32xbf16>, vector<8x32xf32> -> vector<8x32xf32>
    %17 = vector.broadcast %7 : vector<1x32xf32> to vector<8x32xf32>
    %18 = arith.addf %16, %17 : vector<8x32xf32>
    %cst_24 = arith.constant dense<0.000000e+00> : vector<8x32xf32>
    %19 = tpu.matmul %15, %8, %cst_24 {dimension_numbers = #tpu.dot_dimension_numbers<[1], [0], [0], [1], [0, 0, 1, 1], [], []>} : vector<8x32xbf16>, vector<32x32xbf16>, vector<8x32xf32> -> vector<8x32xf32>
    %20 = vector.broadcast %9 : vector<1x32xf32> to vector<8x32xf32>
    %21 = arith.addf %19, %20 : vector<8x32xf32>
    %cst_25 = arith.constant dense<0.000000e+00> : vector<8x32xf32>
    %22 = tpu.matmul %15, %10, %cst_25 {dimension_numbers = #tpu.dot_dimension_numbers<[1], [0], [0], [1], [0, 0, 1, 1], [], []>} : vector<8x32xbf16>, vector<32x32xbf16>, vector<8x32xf32> -> vector<8x32xf32>
    %23 = vector.broadcast %11 : vector<1x32xf32> to vector<8x32xf32>
    %24 = arith.addf %22, %23 : vector<8x32xf32>
    %cst_26 = arith.constant 0.353553385 : f32
    %25 = vector.broadcast %cst_26 : f32 to vector<8x32xf32>
    %26 = arith.mulf %18, %25 : vector<8x32xf32>
    %27 = arith.truncf %26 : vector<8x32xf32> to vector<8x32xbf16>
    %28 = arith.truncf %21 : vector<8x32xf32> to vector<8x32xbf16>
    %29 = arith.truncf %24 : vector<8x32xf32> to vector<8x32xbf16>
    %30 = vector.extract_strided_slice %27 {offsets = [0, 0], sizes = [8, 8], strides = [1, 1]} : vector<8x32xbf16> to vector<8x8xbf16>
    %31 = vector.extract_strided_slice %28 {offsets = [0, 0], sizes = [8, 8], strides = [1, 1]} : vector<8x32xbf16> to vector<8x8xbf16>
    %cst_27 = arith.constant dense<0.000000e+00> : vector<8x8xf32>
    %32 = tpu.matmul %30, %31, %cst_27 {dimension_numbers = #tpu.dot_dimension_numbers<[1], [1], [0], [0], [0, 0, 1, 0], [], []>} : vector<8x8xbf16>, vector<8x8xbf16>, vector<8x8xf32> -> vector<8x8xf32>
    %cst_28 = arith.constant dense<0xFF800000> : vector<8xf32>
    %33 = vector.multi_reduction <maximumf>, %32, %cst_28 [1] : vector<8x8xf32> to vector<8xf32>
    %34 = vector.shape_cast %33 : vector<8xf32> to vector<8x1xf32>
    %35 = vector.broadcast %34 : vector<8x1xf32> to vector<8x8xf32>
    %36 = arith.subf %32, %35 : vector<8x8xf32>
    %37 = math.exp %36 : vector<8x8xf32>
    %cst_29 = arith.constant dense<0.000000e+00> : vector<8xf32>
    %38 = vector.multi_reduction <add>, %37, %cst_29 [1] : vector<8x8xf32> to vector<8xf32>
    %39 = vector.shape_cast %38 : vector<8xf32> to vector<8x1xf32>
    %40 = tpu.reciprocal %39 {approx = true} : vector<8x1xf32> -> vector<8x1xf32>
    %41 = vector.broadcast %40 : vector<8x1xf32> to vector<8x8xf32>
    %42 = arith.mulf %37, %41 : vector<8x8xf32>
    %43 = arith.truncf %42 : vector<8x8xf32> to vector<8x8xbf16>
    %44 = vector.extract_strided_slice %29 {offsets = [0, 0], sizes = [8, 8], strides = [1, 1]} : vector<8x32xbf16> to vector<8x8xbf16>
    %cst_30 = arith.constant dense<0.000000e+00> : vector<8x8xf32>
    %45 = tpu.matmul %43, %44, %cst_30 {dimension_numbers = #tpu.dot_dimension_numbers<[1], [0], [0], [1], [0, 0, 1, 1], [], []>} : vector<8x8xbf16>, vector<8x8xbf16>, vector<8x8xf32> -> vector<8x8xf32>
    %46 = vector.extract_strided_slice %27 {offsets = [0, 8], sizes = [8, 8], strides = [1, 1]} : vector<8x32xbf16> to vector<8x8xbf16>
    %47 = vector.extract_strided_slice %28 {offsets = [0, 8], sizes = [8, 8], strides = [1, 1]} : vector<8x32xbf16> to vector<8x8xbf16>
    %cst_31 = arith.constant dense<0.000000e+00> : vector<8x8xf32>
    %48 = tpu.matmul %46, %47, %cst_31 {dimension_numbers = #tpu.dot_dimension_numbers<[1], [1], [0], [0], [0, 0, 1, 0], [], []>} : vector<8x8xbf16>, vector<8x8xbf16>, vector<8x8xf32> -> vector<8x8xf32>
    %cst_32 = arith.constant dense<0xFF800000> : vector<8xf32>
    %49 = vector.multi_reduction <maximumf>, %48, %cst_32 [1] : vector<8x8xf32> to vector<8xf32>
    %50 = vector.shape_cast %49 : vector<8xf32> to vector<8x1xf32>
    %51 = vector.broadcast %50 : vector<8x1xf32> to vector<8x8xf32>
    %52 = arith.subf %48, %51 : vector<8x8xf32>
    %53 = math.exp %52 : vector<8x8xf32>
    %cst_33 = arith.constant dense<0.000000e+00> : vector<8xf32>
    %54 = vector.multi_reduction <add>, %53, %cst_33 [1] : vector<8x8xf32> to vector<8xf32>
    %55 = vector.shape_cast %54 : vector<8xf32> to vector<8x1xf32>
    %56 = tpu.reciprocal %55 {approx = true} : vector<8x1xf32> -> vector<8x1xf32>
    %57 = vector.broadcast %56 : vector<8x1xf32> to vector<8x8xf32>
    %58 = arith.mulf %53, %57 : vector<8x8xf32>
    %59 = arith.truncf %58 : vector<8x8xf32> to vector<8x8xbf16>
    %60 = vector.extract_strided_slice %29 {offsets = [0, 8], sizes = [8, 8], strides = [1, 1]} : vector<8x32xbf16> to vector<8x8xbf16>
    %cst_34 = arith.constant dense<0.000000e+00> : vector<8x8xf32>
    %61 = tpu.matmul %59, %60, %cst_34 {dimension_numbers = #tpu.dot_dimension_numbers<[1], [0], [0], [1], [0, 0, 1, 1], [], []>} : vector<8x8xbf16>, vector<8x8xbf16>, vector<8x8xf32> -> vector<8x8xf32>
    %62 = vector.extract_strided_slice %27 {offsets = [0, 16], sizes = [8, 8], strides = [1, 1]} : vector<8x32xbf16> to vector<8x8xbf16>
    %63 = vector.extract_strided_slice %28 {offsets = [0, 16], sizes = [8, 8], strides = [1, 1]} : vector<8x32xbf16> to vector<8x8xbf16>
    %cst_35 = arith.constant dense<0.000000e+00> : vector<8x8xf32>
    %64 = tpu.matmul %62, %63, %cst_35 {dimension_numbers = #tpu.dot_dimension_numbers<[1], [1], [0], [0], [0, 0, 1, 0], [], []>} : vector<8x8xbf16>, vector<8x8xbf16>, vector<8x8xf32> -> vector<8x8xf32>
    %cst_36 = arith.constant dense<0xFF800000> : vector<8xf32>
    %65 = vector.multi_reduction <maximumf>, %64, %cst_36 [1] : vector<8x8xf32> to vector<8xf32>
    %66 = vector.shape_cast %65 : vector<8xf32> to vector<8x1xf32>
    %67 = vector.broadcast %66 : vector<8x1xf32> to vector<8x8xf32>
    %68 = arith.subf %64, %67 : vector<8x8xf32>
    %69 = math.exp %68 : vector<8x8xf32>
    %cst_37 = arith.constant dense<0.000000e+00> : vector<8xf32>
    %70 = vector.multi_reduction <add>, %69, %cst_37 [1] : vector<8x8xf32> to vector<8xf32>
    %71 = vector.shape_cast %70 : vector<8xf32> to vector<8x1xf32>
    %72 = tpu.reciprocal %71 {approx = true} : vector<8x1xf32> -> vector<8x1xf32>
    %73 = vector.broadcast %72 : vector<8x1xf32> to vector<8x8xf32>
    %74 = arith.mulf %69, %73 : vector<8x8xf32>
    %75 = arith.truncf %74 : vector<8x8xf32> to vector<8x8xbf16>
    %76 = vector.extract_strided_slice %29 {offsets = [0, 16], sizes = [8, 8], strides = [1, 1]} : vector<8x32xbf16> to vector<8x8xbf16>
    %cst_38 = arith.constant dense<0.000000e+00> : vector<8x8xf32>
    %77 = tpu.matmul %75, %76, %cst_38 {dimension_numbers = #tpu.dot_dimension_numbers<[1], [0], [0], [1], [0, 0, 1, 1], [], []>} : vector<8x8xbf16>, vector<8x8xbf16>, vector<8x8xf32> -> vector<8x8xf32>
    %78 = vector.extract_strided_slice %27 {offsets = [0, 24], sizes = [8, 8], strides = [1, 1]} : vector<8x32xbf16> to vector<8x8xbf16>
    %79 = vector.extract_strided_slice %28 {offsets = [0, 24], sizes = [8, 8], strides = [1, 1]} : vector<8x32xbf16> to vector<8x8xbf16>
    %cst_39 = arith.constant dense<0.000000e+00> : vector<8x8xf32>
    %80 = tpu.matmul %78, %79, %cst_39 {dimension_numbers = #tpu.dot_dimension_numbers<[1], [1], [0], [0], [0, 0, 1, 0], [], []>} : vector<8x8xbf16>, vector<8x8xbf16>, vector<8x8xf32> -> vector<8x8xf32>
    %cst_40 = arith.constant dense<0xFF800000> : vector<8xf32>
    %81 = vector.multi_reduction <maximumf>, %80, %cst_40 [1] : vector<8x8xf32> to vector<8xf32>
    %82 = vector.shape_cast %81 : vector<8xf32> to vector<8x1xf32>
    %83 = vector.broadcast %82 : vector<8x1xf32> to vector<8x8xf32>
    %84 = arith.subf %80, %83 : vector<8x8xf32>
    %85 = math.exp %84 : vector<8x8xf32>
    %cst_41 = arith.constant dense<0.000000e+00> : vector<8xf32>
    %86 = vector.multi_reduction <add>, %85, %cst_41 [1] : vector<8x8xf32> to vector<8xf32>
    %87 = vector.shape_cast %86 : vector<8xf32> to vector<8x1xf32>
    %88 = tpu.reciprocal %87 {approx = true} : vector<8x1xf32> -> vector<8x1xf32>
    %89 = vector.broadcast %88 : vector<8x1xf32> to vector<8x8xf32>
    %90 = arith.mulf %85, %89 : vector<8x8xf32>
    %91 = arith.truncf %90 : vector<8x8xf32> to vector<8x8xbf16>
    %92 = vector.extract_strided_slice %29 {offsets = [0, 24], sizes = [8, 8], strides = [1, 1]} : vector<8x32xbf16> to vector<8x8xbf16>
    %cst_42 = arith.constant dense<0.000000e+00> : vector<8x8xf32>
    %93 = tpu.matmul %91, %92, %cst_42 {dimension_numbers = #tpu.dot_dimension_numbers<[1], [0], [0], [1], [0, 0, 1, 1], [], []>} : vector<8x8xbf16>, vector<8x8xbf16>, vector<8x8xf32> -> vector<8x8xf32>
    %94 = tpu.concatenate %45, %61, %77, %93 in 1 : vector<8x8xf32>, vector<8x8xf32>, vector<8x8xf32>, vector<8x8xf32> -> vector<8x32xf32>
    %95 = arith.truncf %94 : vector<8x32xf32> to vector<8x32xbf16>
    %cst_43 = arith.constant dense<0.000000e+00> : vector<8x32xf32>
    %96 = tpu.matmul %95, %12, %cst_43 {dimension_numbers = #tpu.dot_dimension_numbers<[1], [0], [0], [1], [0, 0, 1, 1], [], []>} : vector<8x32xbf16>, vector<32x32xbf16>, vector<8x32xf32> -> vector<8x32xf32>
    %97 = vector.broadcast %13 : vector<1x32xf32> to vector<8x32xf32>
    %98 = arith.addf %96, %97 : vector<8x32xf32>
    %99 = arith.addf %1, %98 : vector<8x32xf32>
    %100 = arith.mulf %99, %99 : vector<8x32xf32>
    %cst_44 = arith.constant dense<0.000000e+00> : vector<8xf32>
    %101 = vector.multi_reduction <add>, %100, %cst_44 [1] : vector<8x32xf32> to vector<8xf32>
    %102 = vector.shape_cast %101 : vector<8xf32> to vector<8x1xf32>
    %cst_45 = arith.constant 1.000000e-24 : f32
    %103 = vector.broadcast %cst_45 : f32 to vector<8x1xf32>
    %104 = arith.maximumf %102, %103 : vector<8x1xf32>
    %105 = math.rsqrt %104 : vector<8x1xf32>
    %106 = vector.broadcast %105 : vector<8x1xf32> to vector<8x32xf32>
    %107 = arith.mulf %99, %106 : vector<8x32xf32>
    %c0_46 = arith.constant 0 : index
    %c0_47 = arith.constant 0 : index
    %108 = vector.load %arg13[%c0_46, %c0_47] : memref<32x32xbf16, #tpu.memory_space<vmem>>, vector<32x32xbf16>
    %c0_48 = arith.constant 0 : index
    %c0_49 = arith.constant 0 : index
    %109 = vector.load %arg14[%c0_48, %c0_49] : memref<1x32xf32, #tpu.memory_space<vmem>>, vector<1x32xf32>
    %c0_50 = arith.constant 0 : index
    %c0_51 = arith.constant 0 : index
    %110 = vector.load %arg15[%c0_50, %c0_51] : memref<32x32xbf16, #tpu.memory_space<vmem>>, vector<32x32xbf16>
    %c0_52 = arith.constant 0 : index
    %c0_53 = arith.constant 0 : index
    %111 = vector.load %arg16[%c0_52, %c0_53] : memref<1x32xf32, #tpu.memory_space<vmem>>, vector<1x32xf32>
    %c0_54 = arith.constant 0 : index
    %c0_55 = arith.constant 0 : index
    %112 = vector.load %arg17[%c0_54, %c0_55] : memref<32x32xbf16, #tpu.memory_space<vmem>>, vector<32x32xbf16>
    %c0_56 = arith.constant 0 : index
    %c0_57 = arith.constant 0 : index
    %113 = vector.load %arg18[%c0_56, %c0_57] : memref<1x32xf32, #tpu.memory_space<vmem>>, vector<1x32xf32>
    %c0_58 = arith.constant 0 : index
    %c0_59 = arith.constant 0 : index
    %114 = vector.load %arg19[%c0_58, %c0_59] : memref<32x32xbf16, #tpu.memory_space<vmem>>, vector<32x32xbf16>
    %c0_60 = arith.constant 0 : index
    %c0_61 = arith.constant 0 : index
    %115 = vector.load %arg20[%c0_60, %c0_61] : memref<1x32xf32, #tpu.memory_space<vmem>>, vector<1x32xf32>
    %116 = arith.truncf %107 : vector<8x32xf32> to vector<8x32xbf16>
    %117 = arith.truncf %5 : vector<8x32xf32> to vector<8x32xbf16>
    %cst_62 = arith.constant dense<0.000000e+00> : vector<8x32xf32>
    %118 = tpu.matmul %116, %108, %cst_62 {dimension_numbers = #tpu.dot_dimension_numbers<[1], [0], [0], [1], [0, 0, 1, 1], [], []>} : vector<8x32xbf16>, vector<32x32xbf16>, vector<8x32xf32> -> vector<8x32xf32>
    %119 = vector.broadcast %109 : vector<1x32xf32> to vector<8x32xf32>
    %120 = arith.addf %118, %119 : vector<8x32xf32>
    %cst_63 = arith.constant dense<0.000000e+00> : vector<8x32xf32>
    %121 = tpu.matmul %117, %110, %cst_63 {dimension_numbers = #tpu.dot_dimension_numbers<[1], [0], [0], [1], [0, 0, 1, 1], [], []>} : vector<8x32xbf16>, vector<32x32xbf16>, vector<8x32xf32> -> vector<8x32xf32>
    %122 = vector.broadcast %111 : vector<1x32xf32> to vector<8x32xf32>
    %123 = arith.addf %121, %122 : vector<8x32xf32>
    %cst_64 = arith.constant dense<0.000000e+00> : vector<8x32xf32>
    %124 = tpu.matmul %117, %112, %cst_64 {dimension_numbers = #tpu.dot_dimension_numbers<[1], [0], [0], [1], [0, 0, 1, 1], [], []>} : vector<8x32xbf16>, vector<32x32xbf16>, vector<8x32xf32> -> vector<8x32xf32>
    %125 = vector.broadcast %113 : vector<1x32xf32> to vector<8x32xf32>
    %126 = arith.addf %124, %125 : vector<8x32xf32>
    %cst_65 = arith.constant 0.353553385 : f32
    %127 = vector.broadcast %cst_65 : f32 to vector<8x32xf32>
    %128 = arith.mulf %120, %127 : vector<8x32xf32>
    %129 = arith.truncf %128 : vector<8x32xf32> to vector<8x32xbf16>
    %130 = arith.truncf %123 : vector<8x32xf32> to vector<8x32xbf16>
    %131 = arith.truncf %126 : vector<8x32xf32> to vector<8x32xbf16>
    %132 = vector.extract_strided_slice %129 {offsets = [0, 0], sizes = [8, 8], strides = [1, 1]} : vector<8x32xbf16> to vector<8x8xbf16>
    %133 = vector.extract_strided_slice %130 {offsets = [0, 0], sizes = [8, 8], strides = [1, 1]} : vector<8x32xbf16> to vector<8x8xbf16>
    %cst_66 = arith.constant dense<0.000000e+00> : vector<8x8xf32>
    %134 = tpu.matmul %132, %133, %cst_66 {dimension_numbers = #tpu.dot_dimension_numbers<[1], [1], [0], [0], [0, 0, 1, 0], [], []>} : vector<8x8xbf16>, vector<8x8xbf16>, vector<8x8xf32> -> vector<8x8xf32>
    %cst_67 = arith.constant dense<0xFF800000> : vector<8xf32>
    %135 = vector.multi_reduction <maximumf>, %134, %cst_67 [1] : vector<8x8xf32> to vector<8xf32>
    %136 = vector.shape_cast %135 : vector<8xf32> to vector<8x1xf32>
    %137 = vector.broadcast %136 : vector<8x1xf32> to vector<8x8xf32>
    %138 = arith.subf %134, %137 : vector<8x8xf32>
    %139 = math.exp %138 : vector<8x8xf32>
    %cst_68 = arith.constant dense<0.000000e+00> : vector<8xf32>
    %140 = vector.multi_reduction <add>, %139, %cst_68 [1] : vector<8x8xf32> to vector<8xf32>
    %141 = vector.shape_cast %140 : vector<8xf32> to vector<8x1xf32>
    %142 = tpu.reciprocal %141 {approx = true} : vector<8x1xf32> -> vector<8x1xf32>
    %143 = vector.broadcast %142 : vector<8x1xf32> to vector<8x8xf32>
    %144 = arith.mulf %139, %143 : vector<8x8xf32>
    %145 = arith.truncf %144 : vector<8x8xf32> to vector<8x8xbf16>
    %146 = vector.extract_strided_slice %131 {offsets = [0, 0], sizes = [8, 8], strides = [1, 1]} : vector<8x32xbf16> to vector<8x8xbf16>
    %cst_69 = arith.constant dense<0.000000e+00> : vector<8x8xf32>
    %147 = tpu.matmul %145, %146, %cst_69 {dimension_numbers = #tpu.dot_dimension_numbers<[1], [0], [0], [1], [0, 0, 1, 1], [], []>} : vector<8x8xbf16>, vector<8x8xbf16>, vector<8x8xf32> -> vector<8x8xf32>
    %148 = vector.extract_strided_slice %129 {offsets = [0, 8], sizes = [8, 8], strides = [1, 1]} : vector<8x32xbf16> to vector<8x8xbf16>
    %149 = vector.extract_strided_slice %130 {offsets = [0, 8], sizes = [8, 8], strides = [1, 1]} : vector<8x32xbf16> to vector<8x8xbf16>
    %cst_70 = arith.constant dense<0.000000e+00> : vector<8x8xf32>
    %150 = tpu.matmul %148, %149, %cst_70 {dimension_numbers = #tpu.dot_dimension_numbers<[1], [1], [0], [0], [0, 0, 1, 0], [], []>} : vector<8x8xbf16>, vector<8x8xbf16>, vector<8x8xf32> -> vector<8x8xf32>
    %cst_71 = arith.constant dense<0xFF800000> : vector<8xf32>
    %151 = vector.multi_reduction <maximumf>, %150, %cst_71 [1] : vector<8x8xf32> to vector<8xf32>
    %152 = vector.shape_cast %151 : vector<8xf32> to vector<8x1xf32>
    %153 = vector.broadcast %152 : vector<8x1xf32> to vector<8x8xf32>
    %154 = arith.subf %150, %153 : vector<8x8xf32>
    %155 = math.exp %154 : vector<8x8xf32>
    %cst_72 = arith.constant dense<0.000000e+00> : vector<8xf32>
    %156 = vector.multi_reduction <add>, %155, %cst_72 [1] : vector<8x8xf32> to vector<8xf32>
    %157 = vector.shape_cast %156 : vector<8xf32> to vector<8x1xf32>
    %158 = tpu.reciprocal %157 {approx = true} : vector<8x1xf32> -> vector<8x1xf32>
    %159 = vector.broadcast %158 : vector<8x1xf32> to vector<8x8xf32>
    %160 = arith.mulf %155, %159 : vector<8x8xf32>
    %161 = arith.truncf %160 : vector<8x8xf32> to vector<8x8xbf16>
    %162 = vector.extract_strided_slice %131 {offsets = [0, 8], sizes = [8, 8], strides = [1, 1]} : vector<8x32xbf16> to vector<8x8xbf16>
    %cst_73 = arith.constant dense<0.000000e+00> : vector<8x8xf32>
    %163 = tpu.matmul %161, %162, %cst_73 {dimension_numbers = #tpu.dot_dimension_numbers<[1], [0], [0], [1], [0, 0, 1, 1], [], []>} : vector<8x8xbf16>, vector<8x8xbf16>, vector<8x8xf32> -> vector<8x8xf32>
    %164 = vector.extract_strided_slice %129 {offsets = [0, 16], sizes = [8, 8], strides = [1, 1]} : vector<8x32xbf16> to vector<8x8xbf16>
    %165 = vector.extract_strided_slice %130 {offsets = [0, 16], sizes = [8, 8], strides = [1, 1]} : vector<8x32xbf16> to vector<8x8xbf16>
    %cst_74 = arith.constant dense<0.000000e+00> : vector<8x8xf32>
    %166 = tpu.matmul %164, %165, %cst_74 {dimension_numbers = #tpu.dot_dimension_numbers<[1], [1], [0], [0], [0, 0, 1, 0], [], []>} : vector<8x8xbf16>, vector<8x8xbf16>, vector<8x8xf32> -> vector<8x8xf32>
    %cst_75 = arith.constant dense<0xFF800000> : vector<8xf32>
    %167 = vector.multi_reduction <maximumf>, %166, %cst_75 [1] : vector<8x8xf32> to vector<8xf32>
    %168 = vector.shape_cast %167 : vector<8xf32> to vector<8x1xf32>
    %169 = vector.broadcast %168 : vector<8x1xf32> to vector<8x8xf32>
    %170 = arith.subf %166, %169 : vector<8x8xf32>
    %171 = math.exp %170 : vector<8x8xf32>
    %cst_76 = arith.constant dense<0.000000e+00> : vector<8xf32>
    %172 = vector.multi_reduction <add>, %171, %cst_76 [1] : vector<8x8xf32> to vector<8xf32>
    %173 = vector.shape_cast %172 : vector<8xf32> to vector<8x1xf32>
    %174 = tpu.reciprocal %173 {approx = true} : vector<8x1xf32> -> vector<8x1xf32>
    %175 = vector.broadcast %174 : vector<8x1xf32> to vector<8x8xf32>
    %176 = arith.mulf %171, %175 : vector<8x8xf32>
    %177 = arith.truncf %176 : vector<8x8xf32> to vector<8x8xbf16>
    %178 = vector.extract_strided_slice %131 {offsets = [0, 16], sizes = [8, 8], strides = [1, 1]} : vector<8x32xbf16> to vector<8x8xbf16>
    %cst_77 = arith.constant dense<0.000000e+00> : vector<8x8xf32>
    %179 = tpu.matmul %177, %178, %cst_77 {dimension_numbers = #tpu.dot_dimension_numbers<[1], [0], [0], [1], [0, 0, 1, 1], [], []>} : vector<8x8xbf16>, vector<8x8xbf16>, vector<8x8xf32> -> vector<8x8xf32>
    %180 = vector.extract_strided_slice %129 {offsets = [0, 24], sizes = [8, 8], strides = [1, 1]} : vector<8x32xbf16> to vector<8x8xbf16>
    %181 = vector.extract_strided_slice %130 {offsets = [0, 24], sizes = [8, 8], strides = [1, 1]} : vector<8x32xbf16> to vector<8x8xbf16>
    %cst_78 = arith.constant dense<0.000000e+00> : vector<8x8xf32>
    %182 = tpu.matmul %180, %181, %cst_78 {dimension_numbers = #tpu.dot_dimension_numbers<[1], [1], [0], [0], [0, 0, 1, 0], [], []>} : vector<8x8xbf16>, vector<8x8xbf16>, vector<8x8xf32> -> vector<8x8xf32>
    %cst_79 = arith.constant dense<0xFF800000> : vector<8xf32>
    %183 = vector.multi_reduction <maximumf>, %182, %cst_79 [1] : vector<8x8xf32> to vector<8xf32>
    %184 = vector.shape_cast %183 : vector<8xf32> to vector<8x1xf32>
    %185 = vector.broadcast %184 : vector<8x1xf32> to vector<8x8xf32>
    %186 = arith.subf %182, %185 : vector<8x8xf32>
    %187 = math.exp %186 : vector<8x8xf32>
    %cst_80 = arith.constant dense<0.000000e+00> : vector<8xf32>
    %188 = vector.multi_reduction <add>, %187, %cst_80 [1] : vector<8x8xf32> to vector<8xf32>
    %189 = vector.shape_cast %188 : vector<8xf32> to vector<8x1xf32>
    %190 = tpu.reciprocal %189 {approx = true} : vector<8x1xf32> -> vector<8x1xf32>
    %191 = vector.broadcast %190 : vector<8x1xf32> to vector<8x8xf32>
    %192 = arith.mulf %187, %191 : vector<8x8xf32>
    %193 = arith.truncf %192 : vector<8x8xf32> to vector<8x8xbf16>
    %194 = vector.extract_strided_slice %131 {offsets = [0, 24], sizes = [8, 8], strides = [1, 1]} : vector<8x32xbf16> to vector<8x8xbf16>
    %cst_81 = arith.constant dense<0.000000e+00> : vector<8x8xf32>
    %195 = tpu.matmul %193, %194, %cst_81 {dimension_numbers = #tpu.dot_dimension_numbers<[1], [0], [0], [1], [0, 0, 1, 1], [], []>} : vector<8x8xbf16>, vector<8x8xbf16>, vector<8x8xf32> -> vector<8x8xf32>
    %196 = tpu.concatenate %147, %163, %179, %195 in 1 : vector<8x8xf32>, vector<8x8xf32>, vector<8x8xf32>, vector<8x8xf32> -> vector<8x32xf32>
    %197 = arith.truncf %196 : vector<8x32xf32> to vector<8x32xbf16>
    %cst_82 = arith.constant dense<0.000000e+00> : vector<8x32xf32>
    %198 = tpu.matmul %197, %114, %cst_82 {dimension_numbers = #tpu.dot_dimension_numbers<[1], [0], [0], [1], [0, 0, 1, 1], [], []>} : vector<8x32xbf16>, vector<32x32xbf16>, vector<8x32xf32> -> vector<8x32xf32>
    %199 = vector.broadcast %115 : vector<1x32xf32> to vector<8x32xf32>
    %200 = arith.addf %198, %199 : vector<8x32xf32>
    %201 = arith.addf %107, %200 : vector<8x32xf32>
    %202 = arith.mulf %201, %201 : vector<8x32xf32>
    %cst_83 = arith.constant dense<0.000000e+00> : vector<8xf32>
    %203 = vector.multi_reduction <add>, %202, %cst_83 [1] : vector<8x32xf32> to vector<8xf32>
    %204 = vector.shape_cast %203 : vector<8xf32> to vector<8x1xf32>
    %cst_84 = arith.constant 1.000000e-24 : f32
    %205 = vector.broadcast %cst_84 : f32 to vector<8x1xf32>
    %206 = arith.maximumf %204, %205 : vector<8x1xf32>
    %207 = math.rsqrt %206 : vector<8x1xf32>
    %208 = vector.broadcast %207 : vector<8x1xf32> to vector<8x32xf32>
    %209 = arith.mulf %201, %208 : vector<8x32xf32>
    %210 = arith.truncf %209 : vector<8x32xf32> to vector<8x32xbf16>
    %c0_85 = arith.constant 0 : index
    %c0_86 = arith.constant 0 : index
    %211 = vector.load %arg21[%c0_85, %c0_86] : memref<32x64xbf16, #tpu.memory_space<vmem>>, vector<32x64xbf16>
    %cst_87 = arith.constant dense<0.000000e+00> : vector<8x64xf32>
    %212 = tpu.matmul %210, %211, %cst_87 {dimension_numbers = #tpu.dot_dimension_numbers<[1], [0], [0], [1], [0, 0, 1, 1], [], []>} : vector<8x32xbf16>, vector<32x64xbf16>, vector<8x64xf32> -> vector<8x64xf32>
    %c0_88 = arith.constant 0 : index
    %c0_89 = arith.constant 0 : index
    %213 = vector.load %arg22[%c0_88, %c0_89] : memref<1x64xf32, #tpu.memory_space<vmem>>, vector<1x64xf32>
    %214 = vector.broadcast %213 : vector<1x64xf32> to vector<8x64xf32>
    %215 = arith.addf %212, %214 : vector<8x64xf32>
    %cst_90 = arith.constant 0.000000e+00 : f32
    %216 = vector.broadcast %cst_90 : f32 to vector<8x64xf32>
    %217 = arith.maximumf %215, %216 : vector<8x64xf32>
    %218 = arith.truncf %217 : vector<8x64xf32> to vector<8x64xbf16>
    %c0_91 = arith.constant 0 : index
    %c0_92 = arith.constant 0 : index
    %219 = vector.load %arg23[%c0_91, %c0_92] : memref<64x32xbf16, #tpu.memory_space<vmem>>, vector<64x32xbf16>
    %cst_93 = arith.constant dense<0.000000e+00> : vector<8x32xf32>
    %220 = tpu.matmul %218, %219, %cst_93 {dimension_numbers = #tpu.dot_dimension_numbers<[1], [0], [0], [1], [0, 0, 1, 1], [], []>} : vector<8x64xbf16>, vector<64x32xbf16>, vector<8x32xf32> -> vector<8x32xf32>
    %c0_94 = arith.constant 0 : index
    %c0_95 = arith.constant 0 : index
    %221 = vector.load %arg24[%c0_94, %c0_95] : memref<1x32xf32, #tpu.memory_space<vmem>>, vector<1x32xf32>
    %222 = vector.broadcast %221 : vector<1x32xf32> to vector<8x32xf32>
    %223 = arith.addf %220, %222 : vector<8x32xf32>
    %224 = arith.addf %209, %223 : vector<8x32xf32>
    %225 = arith.mulf %224, %224 : vector<8x32xf32>
    %cst_96 = arith.constant dense<0.000000e+00> : vector<8xf32>
    %226 = vector.multi_reduction <add>, %225, %cst_96 [1] : vector<8x32xf32> to vector<8xf32>
    %227 = vector.shape_cast %226 : vector<8xf32> to vector<8x1xf32>
    %cst_97 = arith.constant 1.000000e-24 : f32
    %228 = vector.broadcast %cst_97 : f32 to vector<8x1xf32>
    %229 = arith.maximumf %227, %228 : vector<8x1xf32>
    %230 = math.rsqrt %229 : vector<8x1xf32>
    %231 = vector.broadcast %230 : vector<8x1xf32> to vector<8x32xf32>
    %232 = arith.mulf %224, %231 : vector<8x32xf32>
    %c0_98 = arith.constant 0 : index
    %c0_99 = arith.constant 0 : index
    %c0_100 = arith.constant 0 : index
    %233 = vector.load %arg25[%c0_98, %c0_99, %c0_100] : memref<1x8x32xf32, #tpu.memory_space<vmem>>, vector<1x8x32xf32>
    %234 = vector.shape_cast %233 : vector<1x8x32xf32> to vector<8x32xf32>
    %235 = vector.shape_cast %232 : vector<8x32xf32> to vector<1x8x32xf32>
    tpu.vector_store %arg25[%c0_98, %c0_99, %c0_100], %235 {strides = array<i32>} : memref<1x8x32xf32, #tpu.memory_space<vmem>>, vector<1x8x32xf32>,
    return
  }
  func.func @transform_0(%arg0: i32, %arg1: i32) -> (i32, i32, i32) {
    %c0_i32 = arith.constant 0 : i32
    %c0_i32_0 = arith.constant 0 : i32
    return %arg0, %arg1, %c0_i32 : i32, i32, i32
  }
  func.func @transform_1(%arg0: i32, %arg1: i32) -> (i32, i32, i32) {
    %c0_i32 = arith.constant 0 : i32
    %c0_i32_0 = arith.constant 0 : i32
    %c0_i32_1 = arith.constant 0 : i32
    return %arg0, %c0_i32, %c0_i32_0 : i32, i32, i32
  }
  func.func @transform_2(%arg0: i32, %arg1: i32) -> (i32, i32, i32) {
    %c0_i32 = arith.constant 0 : i32
    %c0_i32_0 = arith.constant 0 : i32
    %c0_i32_1 = arith.constant 0 : i32
    return %arg0, %c0_i32, %c0_i32_0 : i32, i32, i32
  }
  func.func @transform_3(%arg0: i32, %arg1: i32) -> (i32, i32) {
    %c0_i32 = arith.constant 0 : i32
    %c0_i32_0 = arith.constant 0 : i32
    %c0_i32_1 = arith.constant 0 : i32
    return %c0_i32, %c0_i32_0 : i32, i32
  }
  func.func @transform_4(%arg0: i32, %arg1: i32) -> (i32, i32) {
    %c0_i32 = arith.constant 0 : i32
    %c0_i32_0 = arith.constant 0 : i32
    %c0_i32_1 = arith.constant 0 : i32
    return %c0_i32, %c0_i32_0 : i32, i32
  }
  func.func @transform_5(%arg0: i32, %arg1: i32) -> (i32, i32) {
    %c0_i32 = arith.constant 0 : i32
    %c0_i32_0 = arith.constant 0 : i32
    %c0_i32_1 = arith.constant 0 : i32
    return %c0_i32, %c0_i32_0 : i32, i32
  }
  func.func @transform_6(%arg0: i32, %arg1: i32) -> (i32, i32) {
    %c0_i32 = arith.constant 0 : i32
    %c0_i32_0 = arith.constant 0 : i32
    %c0_i32_1 = arith.constant 0 : i32
    return %c0_i32, %c0_i32_0 : i32, i32
  }
  func.func @transform_7(%arg0: i32, %arg1: i32) -> (i32, i32) {
    %c0_i32 = arith.constant 0 : i32
    %c0_i32_0 = arith.constant 0 : i32
    %c0_i32_1 = arith.constant 0 : i32
    return %c0_i32, %c0_i32_0 : i32, i32
  }
  func.func @transform_8(%arg0: i32, %arg1: i32) -> (i32, i32) {
    %c0_i32 = arith.constant 0 : i32
    %c0_i32_0 = arith.constant 0 : i32
    %c0_i32_1 = arith.constant 0 : i32
    return %c0_i32, %c0_i32_0 : i32, i32
  }
  func.func @transform_9(%arg0: i32, %arg1: i32) -> (i32, i32) {
    %c0_i32 = arith.constant 0 : i32
    %c0_i32_0 = arith.constant 0 : i32
    %c0_i32_1 = arith.constant 0 : i32
    return %c0_i32, %c0_i32_0 : i32, i32
  }
  func.func @transform_10(%arg0: i32, %arg1: i32) -> (i32, i32) {
    %c0_i32 = arith.constant 0 : i32
    %c0_i32_0 = arith.constant 0 : i32
    %c0_i32_1 = arith.constant 0 : i32
    return %c0_i32, %c0_i32_0 : i32, i32
  }
  func.func @transform_11(%arg0: i32, %arg1: i32) -> (i32, i32) {
    %c0_i32 = arith.constant 0 : i32
    %c0_i32_0 = arith.constant 0 : i32
    %c0_i32_1 = arith.constant 0 : i32
    return %c0_i32, %c0_i32_0 : i32, i32
  }
  func.func @transform_12(%arg0: i32, %arg1: i32) -> (i32, i32) {
    %c0_i32 = arith.constant 0 : i32
    %c0_i32_0 = arith.constant 0 : i32
    %c0_i32_1 = arith.constant 0 : i32
    return %c0_i32, %c0_i32_0 : i32, i32
  }
  func.func @transform_13(%arg0: i32, %arg1: i32) -> (i32, i32) {
    %c0_i32 = arith.constant 0 : i32
    %c0_i32_0 = arith.constant 0 : i32
    %c0_i32_1 = arith.constant 0 : i32
    return %c0_i32, %c0_i32_0 : i32, i32
  }
  func.func @transform_14(%arg0: i32, %arg1: i32) -> (i32, i32) {
    %c0_i32 = arith.constant 0 : i32
    %c0_i32_0 = arith.constant 0 : i32
    %c0_i32_1 = arith.constant 0 : i32
    return %c0_i32, %c0_i32_0 : i32, i32
  }
  func.func @transform_15(%arg0: i32, %arg1: i32) -> (i32, i32) {
    %c0_i32 = arith.constant 0 : i32
    %c0_i32_0 = arith.constant 0 : i32
    %c0_i32_1 = arith.constant 0 : i32
    return %c0_i32, %c0_i32_0 : i32, i32
  }
  func.func @transform_16(%arg0: i32, %arg1: i32) -> (i32, i32) {
    %c0_i32 = arith.constant 0 : i32
    %c0_i32_0 = arith.constant 0 : i32
    %c0_i32_1 = arith.constant 0 : i32
    return %c0_i32, %c0_i32_0 : i32, i32
  }
  func.func @transform_17(%arg0: i32, %arg1: i32) -> (i32, i32) {
    %c0_i32 = arith.constant 0 : i32
    %c0_i32_0 = arith.constant 0 : i32
    %c0_i32_1 = arith.constant 0 : i32
    return %c0_i32, %c0_i32_0 : i32, i32
  }
  func.func @transform_18(%arg0: i32, %arg1: i32) -> (i32, i32) {
    %c0_i32 = arith.constant 0 : i32
    %c0_i32_0 = arith.constant 0 : i32
    %c0_i32_1 = arith.constant 0 : i32
    return %c0_i32, %c0_i32_0 : i32, i32
  }
  func.func @transform_19(%arg0: i32, %arg1: i32) -> (i32, i32) {
    %c0_i32 = arith.constant 0 : i32
    %c0_i32_0 = arith.constant 0 : i32
    %c0_i32_1 = arith.constant 0 : i32
    return %c0_i32, %c0_i32_0 : i32, i32
  }
  func.func @transform_20(%arg0: i32, %arg1: i32) -> (i32, i32) {
    %c0_i32 = arith.constant 0 : i32
    %c0_i32_0 = arith.constant 0 : i32
    %c0_i32_1 = arith.constant 0 : i32
    return %c0_i32, %c0_i32_0 : i32, i32
  }
  func.func @transform_21(%arg0: i32, %arg1: i32) -> (i32, i32) {
    %c0_i32 = arith.constant 0 : i32
    %c0_i32_0 = arith.constant 0 : i32
    %c0_i32_1 = arith.constant 0 : i32
    return %c0_i32, %c0_i32_0 : i32, i32
  }
  func.func @transform_22(%arg0: i32, %arg1: i32) -> (i32, i32) {
    %c0_i32 = arith.constant 0 : i32
    %c0_i32_0 = arith.constant 0 : i32
    %c0_i32_1 = arith.constant 0 : i32
    return %c0_i32, %c0_i32_0 : i32, i32
  }
  func.func @transform_23(%arg0: i32, %arg1: i32) -> (i32, i32, i32) {
    %c0_i32 = arith.constant 0 : i32
    %c0_i32_0 = arith.constant 0 : i32
    return %arg0, %arg1, %c0_i32 : i32, i32, i32
  }
}

</mosaic_0001>

<llo_original>
// kernel: tpu_custom_call.1
$region0: #{tpu_custom_call.1}
  #allocation0 [shape = 'u32[]', space=smem, size = 0x4, offset = 0x4, fixed_abs, tag = 'smem constant byte address 0x4 - core index']
  #allocation1 [shape = 'u32[144,128]{1,0:T(1,128)}', space=vmem, size = 0x12000, scoped, tag = 'internal scratch']
  %s0 = inlined_call_operand.vmem [shape: f32[2,8,32], index: 0, kind: input, shape index: {}]
  %s1 = inlined_call_operand.vmem [shape: f32[2,8,32], index: 1, kind: input, shape index: {}]
  %s2 = inlined_call_operand.vmem [shape: f32[2,8,32], index: 2, kind: input, shape index: {}]
  %s3 = inlined_call_operand.hbm [shape: bf16[32,32], index: 3, kind: input, shape index: {}]
  %s4 = inlined_call_operand.hbm [shape: f32[1,32], index: 4, kind: input, shape index: {}]
  %s5 = inlined_call_operand.hbm [shape: bf16[32,32], index: 5, kind: input, shape index: {}]
  %s6 = inlined_call_operand.hbm [shape: f32[1,32], index: 6, kind: input, shape index: {}]
  %s7 = inlined_call_operand.hbm [shape: bf16[32,32], index: 7, kind: input, shape index: {}]
  %s8 = inlined_call_operand.hbm [shape: f32[1,32], index: 8, kind: input, shape index: {}]
  %s9 = inlined_call_operand.vmem [shape: bf16[32,32], index: 9, kind: input, shape index: {}]
  %s10 = inlined_call_operand.hbm [shape: f32[1,32], index: 10, kind: input, shape index: {}]
  %s11 = inlined_call_operand.hbm [shape: bf16[32,32], index: 11, kind: input, shape index: {}]
  %s12 = inlined_call_operand.hbm [shape: f32[1,32], index: 12, kind: input, shape index: {}]
  %s13 = inlined_call_operand.vmem [shape: bf16[32,32], index: 13, kind: input, shape index: {}]
  %s14 = inlined_call_operand.hbm [shape: f32[1,32], index: 14, kind: input, shape index: {}]
  %s15 = inlined_call_operand.hbm [shape: bf16[32,32], index: 15, kind: input, shape index: {}]
  %s16 = inlined_call_operand.hbm [shape: f32[1,32], index: 16, kind: input, shape index: {}]
  %s17 = inlined_call_operand.vmem [shape: bf16[32,32], index: 17, kind: input, shape index: {}]
  %s18 = inlined_call_operand.vmem [shape: f32[1,32], index: 18, kind: input, shape index: {}]
  %s19 = inlined_call_operand.hbm [shape: bf16[32,64], index: 19, kind: input, shape index: {}]
  %s20 = inlined_call_operand.vmem [shape: f32[1,64], index: 20, kind: input, shape index: {}]
  %s21 = inlined_call_operand.vmem [shape: bf16[64,32], index: 21, kind: input, shape index: {}]
  %s22 = inlined_call_operand.vmem [shape: f32[1,32], index: 22, kind: input, shape index: {}]
  %s23 = inlined_call_operand.hbm [shape: f32[2,8,32], index: 23, kind: output, shape index: {}]
  %s24 = sld [smem:[#allocation0]]
  $region177: #{tpu_custom_call.1} parent=0
    _
  %s26 = ssub.s32 1, %s24
  %s27 = scalar_select 0, %s26, %s24
  $region1: #{tpu_custom_call.1} parent=0
    #allocation2 [shape = 'u8[8192]{0}', space=vmem, size = 0x2000, scoped, tag = 'input window, operand 3, single buffered']
    #allocation3 [shape = 's32[2]{0}', space=sflag, size = 0x8, scoped, tag = 'scoped memory for tpu_custom_call.1']
    #allocation4 [shape = 's32[2]{0}', space=sflag, size = 0x8, scoped, tag = 'scoped memory for tpu_custom_call.1']
    #allocation5 [shape = 'u8[512]{0}', space=vmem, size = 0x400, scoped, tag = 'input window, operand 4, single buffered']
    #allocation6 [shape = 's32[1]{0}', space=sflag, size = 0x4, scoped, tag = 'scoped memory for tpu_custom_call.1']
    #allocation7 [shape = 'u8[8192]{0}', space=vmem, size = 0x2000, scoped, tag = 'input window, operand 5, single buffered']
    #allocation8 [shape = 'u8[512]{0}', space=vmem, size = 0x400, scoped, tag = 'input window, operand 6, single buffered']
    #allocation9 [shape = 's32[1]{0}', space=sflag, size = 0x4, scoped, tag = 'scoped memory for tpu_custom_call.1']
    #allocation10 [shape = 'u8[8192]{0}', space=vmem, size = 0x2000, scoped, tag = 'input window, operand 7, single buffered']
    #allocation11 [shape = 'u8[512]{0}', space=vmem, size = 0x400, scoped, tag = 'input window, operand 8, single buffered']
    #allocation12 [shape = 's32[1]{0}', space=sflag, size = 0x4, scoped, tag = 'scoped memory for tpu_custom_call.1']
    #allocation13 [shape = 'u8[512]{0}', space=vmem, size = 0x400, scoped, tag = 'input window, operand 10, single buffered']
    #allocation14 [shape = 'u8[8192]{0}', space=vmem, size = 0x2000, scoped, tag = 'input window, operand 11, single buffered']
    #allocation15 [shape = 's32[1]{0}', space=sflag, size = 0x4, scoped, tag = 'scoped memory for tpu_custom_call.1']
    #allocation16 [shape = 'u8[512]{0}', space=vmem, size = 0x400, scoped, tag = 'input window, operand 12, single buffered']
    #allocation17 [shape = 'u8[512]{0}', space=vmem, size = 0x400, scoped, tag = 'input window, operand 14, single buffered']
    #allocation18 [shape = 's32[1]{0}', space=sflag, size = 0x4, scoped, tag = 'scoped memory for tpu_custom_call.1']
    #allocation19 [shape = 'u8[8192]{0}', space=vmem, size = 0x2000, scoped, tag = 'input window, operand 15, single buffered']
    #allocation20 [shape = 'u8[512]{0}', space=vmem, size = 0x400, scoped, tag = 'input window, operand 16, single buffered']
    #allocation21 [shape = 's32[1]{0}', space=sflag, size = 0x4, scoped, tag = 'scoped memory for tpu_custom_call.1']
    #allocation22 [shape = 'u8[8192]{0}', space=vmem, size = 0x2000, scoped, tag = 'input window, operand 19, single buffered']
    #allocation23 [shape = 'u8[8192]{0}', space=vmem, size = 0x2000, scoped, tag = 'output window, operand 0']
    %28 = vsyncpa [#allocation3], 0
    %29 = vsyncpa [#allocation6], 0
    %30 = vsyncpa [#allocation9], 0
    %31 = vsyncpa [#allocation12], 0
    %32 = vsyncpa [#allocation15], 0
    %33 = vsyncpa [#allocation18], 0
    %34 = vsyncpa [#allocation21], 0
    %35 = vsyncpa [#allocation4], 0
    %s36 = scalar_lea.sflag [#allocation4], 1
    %37 = vsyncpa %s36, 0
    loop: start=0, step=1, limit=4
    $region2: #{tpu_custom_call.1} parent=1 // loop_pre_header
      _
    $region3: #{tpu_custom_call.1} parent=1 // loop_header
      %s39 = sphi 0, %s43
      %p40 = scmp.ge.s32.totalorder %s39, 4
      %s46 = sphi 0, %s58
      %s47 = sphi 0, %s54
      %s48 = sphi 0, %s46
      %s49 = sphi 0, %s47
      %s50 = sphi 0, %s48
      %s51 = sphi 0, %s49
      %s63 = sphi 0, %s65
      %s66 = sphi 0, %s63
      %s67 = sphi 0, %s66
      %s83 = sphi 0, %s67
      %s89 = sphi 0, %s91
      %s92 = sphi 0, %s89
      %s93 = sphi 0, %s92
      %s109 = sphi 0, %s93
      %s115 = sphi 0, %s117
      %s118 = sphi 0, %s115
      %s119 = sphi 0, %s118
      %s135 = sphi 0, %s119
      %s139 = sphi 0, %s139
      %s141 = sphi 0, %s139
      %s142 = sphi 0, %s141
      %s156 = sphi 0, %s142
      %s160 = sphi 0, %s160
      %s162 = sphi 0, %s160
      %s163 = sphi 0, %s162
      %s177 = sphi 0, %s163
      %s181 = sphi 0, %s181
      %s183 = sphi 0, %s181
      %s184 = sphi 0, %s183
      %s198 = sphi 0, %s184
      %s202 = sphi 0, %s202
      %s204 = sphi 0, %s202
      %s205 = sphi 0, %s204
      %s219 = sphi 0, %s205
      %s223 = sphi 0, %s223
      %s225 = sphi 0, %s223
      %s226 = sphi 0, %s225
      %s240 = sphi 0, %s226
      %s244 = sphi 0, %s244
      %s246 = sphi 0, %s244
      %s247 = sphi 0, %s246
      %s261 = sphi 0, %s247
      %s265 = sphi 0, %s265
      %s267 = sphi 0, %s265
      %s268 = sphi 0, %s267
      %s282 = sphi 0, %s268
      %s286 = sphi 0, %s286
      %s288 = sphi 0, %s286
      %s289 = sphi 0, %s288
      %s303 = sphi 0, %s289
      %s307 = sphi 0, %s307
      %s309 = sphi 0, %s307
      %s310 = sphi 0, %s309
      %s324 = sphi 0, %s310
      %s328 = sphi 0, %s328
      %s330 = sphi 0, %s328
      %s331 = sphi 0, %s330
      %s345 = sphi 0, %s331
      %s349 = sphi 0, %s349
      %s351 = sphi 0, %s349
      %s352 = sphi 0, %s351
      %s366 = sphi 0, %s352
      %s370 = sphi 0, %s370
      %s372 = sphi 0, %s370
      %s373 = sphi 0, %s372
      %s387 = sphi 0, %s373
      %s391 = sphi 0, %s391
      %s393 = sphi 0, %s391
      %s394 = sphi 0, %s393
      %s408 = sphi 0, %s394
      %s412 = sphi 0, %s412
      %s414 = sphi 0, %s412
      %s415 = sphi 0, %s414
      %s429 = sphi 0, %s415
      %s433 = sphi 0, %s433
      %s435 = sphi 0, %s433
      %s436 = sphi 0, %s435
      %s450 = sphi 0, %s436
      %s454 = sphi 0, %s454
      %s456 = sphi 0, %s454
      %s457 = sphi 0, %s456
      %s471 = sphi 0, %s457
      %s475 = sphi 0, %s475
      %s477 = sphi 0, %s475
      %s478 = sphi 0, %s477
      %s492 = sphi 0, %s478
      %s496 = sphi 0, %s496
      %s498 = sphi 0, %s496
      %s499 = sphi 0, %s498
      %s513 = sphi 0, %s499
      %s517 = sphi 0, %s517
      %s519 = sphi 0, %s517
      %s520 = sphi 0, %s519
      %s534 = sphi 0, %s520
      %s538 = sphi 0, %s538
      %s540 = sphi 0, %s538
      %s541 = sphi 0, %s540
      %s555 = sphi 0, %s541
      %s563 = sphi 0, %s565
      %s566 = sphi 0, %s563
      %s567 = sphi 0, %s566
      %s583 = sphi 0, %s567
    $region4: #{tpu_custom_call.1} parent=1 // loop_header_branch
      %42 = sbr.rel (%p40) target = $region8
    $region5: #{tpu_custom_call.1} parent=1 // loop_body
      %s44 = ssub.s32 %s39, 1
      %s45 = ssub.s32 %s39, 2
      %s52 = sadd.s32 1, %s47
      %p53 = scmp.ge.s32.totalorder %s52, 1
      %s54 = scalar_select %p53, 0, %s52
      %s55 = sadd.s32 1, %s46
      %s56 = scalar_select %p53, %s55, %s46
      %p57 = scmp.ge.s32.totalorder %s56, 2
      %s58 = scalar_select %p57, 0, %s56
      %s59 = ssub.s32 %s46, %s58
      %s60 = ssub.s32 %s47, %s54
      %s61 = sor.u32 %s59, %s60
      %p62 = scmp.eq.s32.totalorder %s61, 0
      %s64 = sadd.s32 %s63, 1
      %s65 = scalar_select %p62, %s63, %s64
      %p68 = pneg %p62
      %p69 = scmp.eq.s32.totalorder %s39, 1
      %p70 = por %p68, %p69
      %p71 = scmp.ne.s32.totalorder %s63, %s66
      %p72 = scmp.eq.s32.totalorder %s39, 0
      %p73 = por %p71, %p72
      %p74 = scmp.ne.s32.totalorder %s63, %s66
      %p75 = scmp.eq.s32.totalorder %s44, 1
      %p76 = por %p74, %p75
      %p77 = scmp.ne.s32.totalorder %s66, %s67
      %p78 = scmp.eq.s32.totalorder %s44, 0
      %p79 = por %p77, %p78
      %p80 = scmp.ne.s32.totalorder %s66, %s67
      %p81 = scmp.eq.s32.totalorder %s45, 1
      %p82 = por %p80, %p81
      %p84 = scmp.ne.s32.totalorder %s67, %s83
      %p85 = scmp.eq.s32.totalorder %s45, 0
      %p86 = por %p84, %p85
      %s87 = ssub.s32 %s46, %s58
      %p88 = scmp.eq.s32.totalorder %s87, 0
      %s90 = sadd.s32 %s89, 1
      %s91 = scalar_select %p88, %s89, %s90
      %p94 = pneg %p88
      %p95 = scmp.eq.s32.totalorder %s39, 1
      %p96 = por %p94, %p95
      %p97 = scmp.ne.s32.totalorder %s89, %s92
      %p98 = scmp.eq.s32.totalorder %s39, 0
      %p99 = por %p97, %p98
      %p100 = scmp.ne.s32.totalorder %s89, %s92
      %p101 = scmp.eq.s32.totalorder %s44, 1
      %p102 = por %p100, %p101
      %p103 = scmp.ne.s32.totalorder %s92, %s93
      %p104 = scmp.eq.s32.totalorder %s44, 0
      %p105 = por %p103, %p104
      %p106 = scmp.ne.s32.totalorder %s92, %s93
      %p107 = scmp.eq.s32.totalorder %s45, 1
      %p108 = por %p106, %p107
      %p110 = scmp.ne.s32.totalorder %s93, %s109
      %p111 = scmp.eq.s32.totalorder %s45, 0
      %p112 = por %p110, %p111
      %s113 = ssub.s32 %s46, %s58
      %p114 = scmp.eq.s32.totalorder %s113, 0
      %s116 = sadd.s32 %s115, 1
      %s117 = scalar_select %p114, %s115, %s116
      %p120 = pneg %p114
      %p121 = scmp.eq.s32.totalorder %s39, 1
      %p122 = por %p120, %p121
      %p123 = scmp.ne.s32.totalorder %s115, %s118
      %p124 = scmp.eq.s32.totalorder %s39, 0
      %p125 = por %p123, %p124
      %p126 = scmp.ne.s32.totalorder %s115, %s118
      %p127 = scmp.eq.s32.totalorder %s44, 1
      %p128 = por %p126, %p127
      %p129 = scmp.ne.s32.totalorder %s118, %s119
      %p130 = scmp.eq.s32.totalorder %s44, 0
      %p131 = por %p129, %p130
      %p132 = scmp.ne.s32.totalorder %s118, %s119
      %p133 = scmp.eq.s32.totalorder %s45, 1
      %p134 = por %p132, %p133
      %p136 = scmp.ne.s32.totalorder %s119, %s135
      %p137 = scmp.eq.s32.totalorder %s45, 0
      %p138 = por %p136, %p137
      %s140 = sadd.s32 %s139, 1
      %p143 = scmp.eq.s32.totalorder %s39, 1
      %p144 = scmp.ne.s32.totalorder %s139, %s141
      %p145 = scmp.eq.s32.totalorder %s39, 0
      %p146 = por %p144, %p145
      %p147 = scmp.ne.s32.totalorder %s139, %s141
      %p148 = scmp.eq.s32.totalorder %s44, 1
      %p149 = por %p147, %p148
      %p150 = scmp.ne.s32.totalorder %s141, %s142
      %p151 = scmp.eq.s32.totalorder %s44, 0
      %p152 = por %p150, %p151
      %p153 = scmp.ne.s32.totalorder %s141, %s142
      %p154 = scmp.eq.s32.totalorder %s45, 1
      %p155 = por %p153, %p154
      %p157 = scmp.ne.s32.totalorder %s142, %s156
      %p158 = scmp.eq.s32.totalorder %s45, 0
      %p159 = por %p157, %p158
      %s161 = sadd.s32 %s160, 1
      %p164 = scmp.eq.s32.totalorder %s39, 1
      %p165 = scmp.ne.s32.totalorder %s160, %s162
      %p166 = scmp.eq.s32.totalorder %s39, 0
      %p167 = por %p165, %p166
      %p168 = scmp.ne.s32.totalorder %s160, %s162
      %p169 = scmp.eq.s32.totalorder %s44, 1
      %p170 = por %p168, %p169
      %p171 = scmp.ne.s32.totalorder %s162, %s163
      %p172 = scmp.eq.s32.totalorder %s44, 0
      %p173 = por %p171, %p172
      %p174 = scmp.ne.s32.totalorder %s162, %s163
      %p175 = scmp.eq.s32.totalorder %s45, 1
      %p176 = por %p174, %p175
      %p178 = scmp.ne.s32.totalorder %s163, %s177
      %p179 = scmp.eq.s32.totalorder %s45, 0
      %p180 = por %p178, %p179
      %s182 = sadd.s32 %s181, 1
      %p185 = scmp.eq.s32.totalorder %s39, 1
      %p186 = scmp.ne.s32.totalorder %s181, %s183
      %p187 = scmp.eq.s32.totalorder %s39, 0
      %p188 = por %p186, %p187
      %p189 = scmp.ne.s32.totalorder %s181, %s183
      %p190 = scmp.eq.s32.totalorder %s44, 1
      %p191 = por %p189, %p190
      %p192 = scmp.ne.s32.totalorder %s183, %s184
      %p193 = scmp.eq.s32.totalorder %s44, 0
      %p194 = por %p192, %p193
      %p195 = scmp.ne.s32.totalorder %s183, %s184
      %p196 = scmp.eq.s32.totalorder %s45, 1
      %p197 = por %p195, %p196
      %p199 = scmp.ne.s32.totalorder %s184, %s198
      %p200 = scmp.eq.s32.totalorder %s45, 0
      %p201 = por %p199, %p200
      %s203 = sadd.s32 %s202, 1
      %p206 = scmp.eq.s32.totalorder %s39, 1
      %p207 = scmp.ne.s32.totalorder %s202, %s204
      %p208 = scmp.eq.s32.totalorder %s39, 0
      %p209 = por %p207, %p208
      %p210 = scmp.ne.s32.totalorder %s202, %s204
      %p211 = scmp.eq.s32.totalorder %s44, 1
      %p212 = por %p210, %p211
      %p213 = scmp.ne.s32.totalorder %s204, %s205
      %p214 = scmp.eq.s32.totalorder %s44, 0
      %p215 = por %p213, %p214
      %p216 = scmp.ne.s32.totalorder %s204, %s205
      %p217 = scmp.eq.s32.totalorder %s45, 1
      %p218 = por %p216, %p217
      %p220 = scmp.ne.s32.totalorder %s205, %s219
      %p221 = scmp.eq.s32.totalorder %s45, 0
      %p222 = por %p220, %p221
      %s224 = sadd.s32 %s223, 1
      %p227 = scmp.eq.s32.totalorder %s39, 1
      %p228 = scmp.ne.s32.totalorder %s223, %s225
      %p229 = scmp.eq.s32.totalorder %s39, 0
      %p230 = por %p228, %p229
      %p231 = scmp.ne.s32.totalorder %s223, %s225
      %p232 = scmp.eq.s32.totalorder %s44, 1
      %p233 = por %p231, %p232
      %p234 = scmp.ne.s32.totalorder %s225, %s226
      %p235 = scmp.eq.s32.totalorder %s44, 0
      %p236 = por %p234, %p235
      %p237 = scmp.ne.s32.totalorder %s225, %s226
      %p238 = scmp.eq.s32.totalorder %s45, 1
      %p239 = por %p237, %p238
      %p241 = scmp.ne.s32.totalorder %s226, %s240
      %p242 = scmp.eq.s32.totalorder %s45, 0
      %p243 = por %p241, %p242
      %s245 = sadd.s32 %s244, 1
      %p248 = scmp.eq.s32.totalorder %s39, 1
      %p249 = scmp.ne.s32.totalorder %s244, %s246
      %p250 = scmp.eq.s32.totalorder %s39, 0
      %p251 = por %p249, %p250
      %p252 = scmp.ne.s32.totalorder %s244, %s246
      %p253 = scmp.eq.s32.totalorder %s44, 1
      %p254 = por %p252, %p253
      %p255 = scmp.ne.s32.totalorder %s246, %s247
      %p256 = scmp.eq.s32.totalorder %s44, 0
      %p257 = por %p255, %p256
      %p258 = scmp.ne.s32.totalorder %s246, %s247
      %p259 = scmp.eq.s32.totalorder %s45, 1
      %p260 = por %p258, %p259
      %p262 = scmp.ne.s32.totalorder %s247, %s261
      %p263 = scmp.eq.s32.totalorder %s45, 0
      %p264 = por %p262, %p263
      %s266 = sadd.s32 %s265, 1
      %p269 = scmp.eq.s32.totalorder %s39, 1
      %p270 = scmp.ne.s32.totalorder %s265, %s267
      %p271 = scmp.eq.s32.totalorder %s39, 0
      %p272 = por %p270, %p271
      %p273 = scmp.ne.s32.totalorder %s265, %s267
      %p274 = scmp.eq.s32.totalorder %s44, 1
      %p275 = por %p273, %p274
      %p276 = scmp.ne.s32.totalorder %s267, %s268
      %p277 = scmp.eq.s32.totalorder %s44, 0
      %p278 = por %p276, %p277
      %p279 = scmp.ne.s32.totalorder %s267, %s268
      %p280 = scmp.eq.s32.totalorder %s45, 1
      %p281 = por %p279, %p280
      %p283 = scmp.ne.s32.totalorder %s268, %s282
      %p284 = scmp.eq.s32.totalorder %s45, 0
      %p285 = por %p283, %p284
      %s287 = sadd.s32 %s286, 1
      %p290 = scmp.eq.s32.totalorder %s39, 1
      %p291 = scmp.ne.s32.totalorder %s286, %s288
      %p292 = scmp.eq.s32.totalorder %s39, 0
      %p293 = por %p291, %p292
      %p294 = scmp.ne.s32.totalorder %s286, %s288
      %p295 = scmp.eq.s32.totalorder %s44, 1
      %p296 = por %p294, %p295
      %p297 = scmp.ne.s32.totalorder %s288, %s289
      %p298 = scmp.eq.s32.totalorder %s44, 0
      %p299 = por %p297, %p298
      %p300 = scmp.ne.s32.totalorder %s288, %s289
      %p301 = scmp.eq.s32.totalorder %s45, 1
      %p302 = por %p300, %p301
      %p304 = scmp.ne.s32.totalorder %s289, %s303
      %p305 = scmp.eq.s32.totalorder %s45, 0
      %p306 = por %p304, %p305
      %s308 = sadd.s32 %s307, 1
      %p311 = scmp.eq.s32.totalorder %s39, 1
      %p312 = scmp.ne.s32.totalorder %s307, %s309
      %p313 = scmp.eq.s32.totalorder %s39, 0
      %p314 = por %p312, %p313
      %p315 = scmp.ne.s32.totalorder %s307, %s309
      %p316 = scmp.eq.s32.totalorder %s44, 1
      %p317 = por %p315, %p316
      %p318 = scmp.ne.s32.totalorder %s309, %s310
      %p319 = scmp.eq.s32.totalorder %s44, 0
      %p320 = por %p318, %p319
      %p321 = scmp.ne.s32.totalorder %s309, %s310
      %p322 = scmp.eq.s32.totalorder %s45, 1
      %p323 = por %p321, %p322
      %p325 = scmp.ne.s32.totalorder %s310, %s324
      %p326 = scmp.eq.s32.totalorder %s45, 0
      %p327 = por %p325, %p326
      %s329 = sadd.s32 %s328, 1
      %p332 = scmp.eq.s32.totalorder %s39, 1
      %p333 = scmp.ne.s32.totalorder %s328, %s330
      %p334 = scmp.eq.s32.totalorder %s39, 0
      %p335 = por %p333, %p334
      %p336 = scmp.ne.s32.totalorder %s328, %s330
      %p337 = scmp.eq.s32.totalorder %s44, 1
      %p338 = por %p336, %p337
      %p339 = scmp.ne.s32.totalorder %s330, %s331
      %p340 = scmp.eq.s32.totalorder %s44, 0
      %p341 = por %p339, %p340
      %p342 = scmp.ne.s32.totalorder %s330, %s331
      %p343 = scmp.eq.s32.totalorder %s45, 1
      %p344 = por %p342, %p343
      %p346 = scmp.ne.s32.totalorder %s331, %s345
      %p347 = scmp.eq.s32.totalorder %s45, 0
      %p348 = por %p346, %p347
      %s350 = sadd.s32 %s349, 1
      %p353 = scmp.eq.s32.totalorder %s39, 1
      %p354 = scmp.ne.s32.totalorder %s349, %s351
      %p355 = scmp.eq.s32.totalorder %s39, 0
      %p356 = por %p354, %p355
      %p357 = scmp.ne.s32.totalorder %s349, %s351
      %p358 = scmp.eq.s32.totalorder %s44, 1
      %p359 = por %p357, %p358
      %p360 = scmp.ne.s32.totalorder %s351, %s352
      %p361 = scmp.eq.s32.totalorder %s44, 0
      %p362 = por %p360, %p361
      %p363 = scmp.ne.s32.totalorder %s351, %s352
      %p364 = scmp.eq.s32.totalorder %s45, 1
      %p365 = por %p363, %p364
      %p367 = scmp.ne.s32.totalorder %s352, %s366
      %p368 = scmp.eq.s32.totalorder %s45, 0
      %p369 = por %p367, %p368
      %s371 = sadd.s32 %s370, 1
      %p374 = scmp.eq.s32.totalorder %s39, 1
      %p375 = scmp.ne.s32.totalorder %s370, %s372
      %p376 = scmp.eq.s32.totalorder %s39, 0
      %p377 = por %p375, %p376
      %p378 = scmp.ne.s32.totalorder %s370, %s372
      %p379 = scmp.eq.s32.totalorder %s44, 1
      %p380 = por %p378, %p379
      %p381 = scmp.ne.s32.totalorder %s372, %s373
      %p382 = scmp.eq.s32.totalorder %s44, 0
      %p383 = por %p381, %p382
      %p384 = scmp.ne.s32.totalorder %s372, %s373
      %p385 = scmp.eq.s32.totalorder %s45, 1
      %p386 = por %p384, %p385
      %p388 = scmp.ne.s32.totalorder %s373, %s387
      %p389 = scmp.eq.s32.totalorder %s45, 0
      %p390 = por %p388, %p389
      %s392 = sadd.s32 %s391, 1
      %p395 = scmp.eq.s32.totalorder %s39, 1
      %p396 = scmp.ne.s32.totalorder %s391, %s393
      %p397 = scmp.eq.s32.totalorder %s39, 0
      %p398 = por %p396, %p397
      %p399 = scmp.ne.s32.totalorder %s391, %s393
      %p400 = scmp.eq.s32.totalorder %s44, 1
      %p401 = por %p399, %p400
      %p402 = scmp.ne.s32.totalorder %s393, %s394
      %p403 = scmp.eq.s32.totalorder %s44, 0
      %p404 = por %p402, %p403
      %p405 = scmp.ne.s32.totalorder %s393, %s394
      %p406 = scmp.eq.s32.totalorder %s45, 1
      %p407 = por %p405, %p406
      %p409 = scmp.ne.s32.totalorder %s394, %s408
      %p410 = scmp.eq.s32.totalorder %s45, 0
      %p411 = por %p409, %p410
      %s413 = sadd.s32 %s412, 1
      %p416 = scmp.eq.s32.totalorder %s39, 1
      %p417 = scmp.ne.s32.totalorder %s412, %s414
      %p418 = scmp.eq.s32.totalorder %s39, 0
      %p419 = por %p417, %p418
      %p420 = scmp.ne.s32.totalorder %s412, %s414
      %p421 = scmp.eq.s32.totalorder %s44, 1
      %p422 = por %p420, %p421
      %p423 = scmp.ne.s32.totalorder %s414, %s415
      %p424 = scmp.eq.s32.totalorder %s44, 0
      %p425 = por %p423, %p424
      %p426 = scmp.ne.s32.totalorder %s414, %s415
      %p427 = scmp.eq.s32.totalorder %s45, 1
      %p428 = por %p426, %p427
      %p430 = scmp.ne.s32.totalorder %s415, %s429
      %p431 = scmp.eq.s32.totalorder %s45, 0
      %p432 = por %p430, %p431
      %s434 = sadd.s32 %s433, 1
      %p437 = scmp.eq.s32.totalorder %s39, 1
      %p438 = scmp.ne.s32.totalorder %s433, %s435
      %p439 = scmp.eq.s32.totalorder %s39, 0
      %p440 = por %p438, %p439
      %p441 = scmp.ne.s32.totalorder %s433, %s435
      %p442 = scmp.eq.s32.totalorder %s44, 1
      %p443 = por %p441, %p442
      %p444 = scmp.ne.s32.totalorder %s435, %s436
      %p445 = scmp.eq.s32.totalorder %s44, 0
      %p446 = por %p444, %p445
      %p447 = scmp.ne.s32.totalorder %s435, %s436
      %p448 = scmp.eq.s32.totalorder %s45, 1
      %p449 = por %p447, %p448
      %p451 = scmp.ne.s32.totalorder %s436, %s450
      %p452 = scmp.eq.s32.totalorder %s45, 0
      %p453 = por %p451, %p452
      %s455 = sadd.s32 %s454, 1
      %p458 = scmp.eq.s32.totalorder %s39, 1
      %p459 = scmp.ne.s32.totalorder %s454, %s456
      %p460 = scmp.eq.s32.totalorder %s39, 0
      %p461 = por %p459, %p460
      %p462 = scmp.ne.s32.totalorder %s454, %s456
      %p463 = scmp.eq.s32.totalorder %s44, 1
      %p464 = por %p462, %p463
      %p465 = scmp.ne.s32.totalorder %s456, %s457
      %p466 = scmp.eq.s32.totalorder %s44, 0
      %p467 = por %p465, %p466
      %p468 = scmp.ne.s32.totalorder %s456, %s457
      %p469 = scmp.eq.s32.totalorder %s45, 1
      %p470 = por %p468, %p469
      %p472 = scmp.ne.s32.totalorder %s457, %s471
      %p473 = scmp.eq.s32.totalorder %s45, 0
      %p474 = por %p472, %p473
      %s476 = sadd.s32 %s475, 1
      %p479 = scmp.eq.s32.totalorder %s39, 1
      %p480 = scmp.ne.s32.totalorder %s475, %s477
      %p481 = scmp.eq.s32.totalorder %s39, 0
      %p482 = por %p480, %p481
      %p483 = scmp.ne.s32.totalorder %s475, %s477
      %p484 = scmp.eq.s32.totalorder %s44, 1
      %p485 = por %p483, %p484
      %p486 = scmp.ne.s32.totalorder %s477, %s478
      %p487 = scmp.eq.s32.totalorder %s44, 0
      %p488 = por %p486, %p487
      %p489 = scmp.ne.s32.totalorder %s477, %s478
      %p490 = scmp.eq.s32.totalorder %s45, 1
      %p491 = por %p489, %p490
      %p493 = scmp.ne.s32.totalorder %s478, %s492
      %p494 = scmp.eq.s32.totalorder %s45, 0
      %p495 = por %p493, %p494
      %s497 = sadd.s32 %s496, 1
      %p500 = scmp.eq.s32.totalorder %s39, 1
      %p501 = scmp.ne.s32.totalorder %s496, %s498
      %p502 = scmp.eq.s32.totalorder %s39, 0
      %p503 = por %p501, %p502
      %p504 = scmp.ne.s32.totalorder %s496, %s498
      %p505 = scmp.eq.s32.totalorder %s44, 1
      %p506 = por %p504, %p505
      %p507 = scmp.ne.s32.totalorder %s498, %s499
      %p508 = scmp.eq.s32.totalorder %s44, 0
      %p509 = por %p507, %p508
      %p510 = scmp.ne.s32.totalorder %s498, %s499
      %p511 = scmp.eq.s32.totalorder %s45, 1
      %p512 = por %p510, %p511
      %p514 = scmp.ne.s32.totalorder %s499, %s513
      %p515 = scmp.eq.s32.totalorder %s45, 0
      %p516 = por %p514, %p515
      %s518 = sadd.s32 %s517, 1
      %p521 = scmp.eq.s32.totalorder %s39, 1
      %p522 = scmp.ne.s32.totalorder %s517, %s519
      %p523 = scmp.eq.s32.totalorder %s39, 0
      %p524 = por %p522, %p523
      %p525 = scmp.ne.s32.totalorder %s517, %s519
      %p526 = scmp.eq.s32.totalorder %s44, 1
      %p527 = por %p525, %p526
      %p528 = scmp.ne.s32.totalorder %s519, %s520
      %p529 = scmp.eq.s32.totalorder %s44, 0
      %p530 = por %p528, %p529
      %p531 = scmp.ne.s32.totalorder %s519, %s520
      %p532 = scmp.eq.s32.totalorder %s45, 1
      %p533 = por %p531, %p532
      %p535 = scmp.ne.s32.totalorder %s520, %s534
      %p536 = scmp.eq.s32.totalorder %s45, 0
      %p537 = por %p535, %p536
      %s539 = sadd.s32 %s538, 1
      %p542 = scmp.eq.s32.totalorder %s39, 1
      %p543 = scmp.ne.s32.totalorder %s538, %s540
      %p544 = scmp.eq.s32.totalorder %s39, 0
      %p545 = por %p543, %p544
      %p546 = scmp.ne.s32.totalorder %s538, %s540
      %p547 = scmp.eq.s32.totalorder %s44, 1
      %p548 = por %p546, %p547
      %p549 = scmp.ne.s32.totalorder %s540, %s541
      %p550 = scmp.eq.s32.totalorder %s44, 0
      %p551 = por %p549, %p550
      %p552 = scmp.ne.s32.totalorder %s540, %s541
      %p553 = scmp.eq.s32.totalorder %s45, 1
      %p554 = por %p552, %p553
      %p556 = scmp.ne.s32.totalorder %s541, %s555
      %p557 = scmp.eq.s32.totalorder %s45, 0
      %p558 = por %p556, %p557
      %s559 = ssub.s32 %s46, %s58
      %s560 = ssub.s32 %s47, %s54
      %s561 = sor.u32 %s559, %s560
      %p562 = scmp.eq.s32.totalorder %s561, 0
      %s564 = sadd.s32 %s563, 1
      %s565 = scalar_select %p562, %s563, %s564
      %p568 = pneg %p562
      %p569 = scmp.eq.s32.totalorder %s39, 1
      %p570 = por %p568, %p569
      %p571 = scmp.ne.s32.totalorder %s563, %s566
      %p572 = scmp.eq.s32.totalorder %s39, 0
      %p573 = por %p571, %p572
      %p574 = scmp.ne.s32.totalorder %s563, %s566
      %p575 = scmp.eq.s32.totalorder %s44, 1
      %p576 = por %p574, %p575
      %p577 = scmp.ne.s32.totalorder %s566, %s567
      %p578 = scmp.eq.s32.totalorder %s44, 0
      %p579 = por %p577, %p578
      %p580 = scmp.ne.s32.totalorder %s566, %s567
      %p581 = scmp.eq.s32.totalorder %s45, 1
      %p582 = por %p580, %p581
      %p584 = scmp.ne.s32.totalorder %s567, %s583
      %p585 = scmp.eq.s32.totalorder %s45, 0
      %p586 = por %p584, %p585
      %p587 = scmp.le.s32.totalorder 1, %s39
      %p588 = scmp.lt.s32.totalorder %s39, 3
      %p589 = pnand %p587, %p588
      %p590 = pneg %p589
      // Predicated region
      $region9: #{tpu_custom_call.1} parent=5 // pred_check
        _
      $region10: #{tpu_custom_call.1} parent=5 // pred_check_branch
        %592 = sbr.rel (%p589) target = $region12
      $region11: #{tpu_custom_call.1} parent=5 // pred_region
        %s593 = ssub.s32 %s39, 1
        // Predicated region
        $region13: #{tpu_custom_call.1} parent=11 // pred_check
          %p594 = pneg %p152
        $region14: #{tpu_custom_call.1} parent=11 // pred_check_branch
          %596 = sbr.rel (%p594) target = $region16
        $region15: #{tpu_custom_call.1} parent=11 // pred_region
          %s598 = ssub.s32 256, 256
          %599 = vsyncadd [#allocation3], %s598
          %s600 = sshll.u32 [#allocation2], 4
          %s601 = int_to_ptr.vmem [resolvable:$true] %s600
          %606 = dma.hbm_to_vmem [thread:$0]  %s3, 256, %s601, [#allocation3], 64, 64, 4
        $region16: #{tpu_custom_call.1} parent=11 // pred_fallthru
          _
        // Predicated region
        $region17: #{tpu_custom_call.1} parent=11 // pred_check
          %p607 = pneg %p173
        $region18: #{tpu_custom_call.1} parent=11 // pred_check_branch
          %609 = sbr.rel (%p607) target = $region20
        $region19: #{tpu_custom_call.1} parent=11 // pred_region
          %s611 = ssub.s32 16, 16
          %612 = vsyncadd [#allocation6], %s611
          %s614 = sshll.u32 [#allocation5], 4
          %s615 = int_to_ptr.vmem [resolvable:$true] %s614
          %617 = dma.hbm_to_vmem [thread:$0]  %s4, 16, %s615, [#allocation6]
        $region20: #{tpu_custom_call.1} parent=11 // pred_fallthru
          _
        // Predicated region
        $region21: #{tpu_custom_call.1} parent=11 // pred_check
          %p618 = pneg %p194
        $region22: #{tpu_custom_call.1} parent=11 // pred_check_branch
          %620 = sbr.rel (%p618) target = $region24
        $region23: #{tpu_custom_call.1} parent=11 // pred_region
          %s622 = ssub.s32 256, 256
          %623 = vsyncadd [#allocation6], %s622
          %s624 = sshll.u32 [#allocation7], 4
          %s625 = int_to_ptr.vmem [resolvable:$true] %s624
          %630 = dma.hbm_to_vmem [thread:$0]  %s5, 256, %s625, [#allocation6], 64, 64, 4
        $region24: #{tpu_custom_call.1} parent=11 // pred_fallthru
          _
        // Predicated region
        $region25: #{tpu_custom_call.1} parent=11 // pred_check
          %p631 = pneg %p215
        $region26: #{tpu_custom_call.1} parent=11 // pred_check_branch
          %633 = sbr.rel (%p631) target = $region28
        $region27: #{tpu_custom_call.1} parent=11 // pred_region
          %s635 = ssub.s32 16, 16
          %636 = vsyncadd [#allocation9], %s635
          %s638 = sshll.u32 [#allocation8], 4
          %s639 = int_to_ptr.vmem [resolvable:$true] %s638
          %641 = dma.hbm_to_vmem [thread:$0]  %s6, 16, %s639, [#allocation9]
        $region28: #{tpu_custom_call.1} parent=11 // pred_fallthru
          _
        // Predicated region
        $region29: #{tpu_custom_call.1} parent=11 // pred_check
          %p642 = pneg %p236
        $region30: #{tpu_custom_call.1} parent=11 // pred_check_branch
          %644 = sbr.rel (%p642) target = $region32
        $region31: #{tpu_custom_call.1} parent=11 // pred_region
          %s646 = ssub.s32 256, 256
          %647 = vsyncadd [#allocation9], %s646
          %s648 = sshll.u32 [#allocation10], 4
          %s649 = int_to_ptr.vmem [resolvable:$true] %s648
          %654 = dma.hbm_to_vmem [thread:$0]  %s7, 256, %s649, [#allocation9], 64, 64, 4
        $region32: #{tpu_custom_call.1} parent=11 // pred_fallthru
          _
        // Predicated region
        $region33: #{tpu_custom_call.1} parent=11 // pred_check
          %p655 = pneg %p257
        $region34: #{tpu_custom_call.1} parent=11 // pred_check_branch
          %657 = sbr.rel (%p655) target = $region36
        $region35: #{tpu_custom_call.1} parent=11 // pred_region
          %s659 = ssub.s32 16, 16
          %660 = vsyncadd [#allocation12], %s659
          %s662 = sshll.u32 [#allocation11], 4
          %s663 = int_to_ptr.vmem [resolvable:$true] %s662
          %665 = dma.hbm_to_vmem [thread:$0]  %s8, 16, %s663, [#allocation12]
        $region36: #{tpu_custom_call.1} parent=11 // pred_fallthru
          _
        // Predicated region
        $region37: #{tpu_custom_call.1} parent=11 // pred_check
          %p666 = pneg %p278
        $region38: #{tpu_custom_call.1} parent=11 // pred_check_branch
          %668 = sbr.rel (%p666) target = $region40
        $region39: #{tpu_custom_call.1} parent=11 // pred_region
          _
        $region40: #{tpu_custom_call.1} parent=11 // pred_fallthru
          _
        // Predicated region
        $region41: #{tpu_custom_call.1} parent=11 // pred_check
          %p669 = pneg %p299
        $region42: #{tpu_custom_call.1} parent=11 // pred_check_branch
          %671 = sbr.rel (%p669) target = $region44
        $region43: #{tpu_custom_call.1} parent=11 // pred_region
          %s673 = ssub.s32 16, 16
          %674 = vsyncadd [#allocation12], %s673
          %s676 = sshll.u32 [#allocation13], 4
          %s677 = int_to_ptr.vmem [resolvable:$true] %s676
          %679 = dma.hbm_to_vmem [thread:$0]  %s10, 16, %s677, [#allocation12]
        $region44: #{tpu_custom_call.1} parent=11 // pred_fallthru
          _
        // Predicated region
        $region45: #{tpu_custom_call.1} parent=11 // pred_check
          %p680 = pneg %p320
        $region46: #{tpu_custom_call.1} parent=11 // pred_check_branch
          %682 = sbr.rel (%p680) target = $region48
        $region47: #{tpu_custom_call.1} parent=11 // pred_region
          %s684 = ssub.s32 256, 256
          %685 = vsyncadd [#allocation15], %s684
          %s686 = sshll.u32 [#allocation14], 4
          %s687 = int_to_ptr.vmem [resolvable:$true] %s686
          %692 = dma.hbm_to_vmem [thread:$0]  %s11, 256, %s687, [#allocation15], 64, 64, 4
        $region48: #{tpu_custom_call.1} parent=11 // pred_fallthru
          _
        // Predicated region
        $region49: #{tpu_custom_call.1} parent=11 // pred_check
          %p693 = pneg %p341
        $region50: #{tpu_custom_call.1} parent=11 // pred_check_branch
          %695 = sbr.rel (%p693) target = $region52
        $region51: #{tpu_custom_call.1} parent=11 // pred_region
          %s697 = ssub.s32 16, 16
          %698 = vsyncadd [#allocation15], %s697
          %s700 = sshll.u32 [#allocation16], 4
          %s701 = int_to_ptr.vmem [resolvable:$true] %s700
          %703 = dma.hbm_to_vmem [thread:$0]  %s12, 16, %s701, [#allocation15]
        $region52: #{tpu_custom_call.1} parent=11 // pred_fallthru
          _
        // Predicated region
        $region53: #{tpu_custom_call.1} parent=11 // pred_check
          %p704 = pneg %p362
        $region54: #{tpu_custom_call.1} parent=11 // pred_check_branch
          %706 = sbr.rel (%p704) target = $region56
        $region55: #{tpu_custom_call.1} parent=11 // pred_region
          _
        $region56: #{tpu_custom_call.1} parent=11 // pred_fallthru
          _
        // Predicated region
        $region57: #{tpu_custom_call.1} parent=11 // pred_check
          %p707 = pneg %p383
        $region58: #{tpu_custom_call.1} parent=11 // pred_check_branch
          %709 = sbr.rel (%p707) target = $region60
        $region59: #{tpu_custom_call.1} parent=11 // pred_region
          %s711 = ssub.s32 16, 16
          %712 = vsyncadd [#allocation18], %s711
          %s714 = sshll.u32 [#allocation17], 4
          %s715 = int_to_ptr.vmem [resolvable:$true] %s714
          %717 = dma.hbm_to_vmem [thread:$0]  %s14, 16, %s715, [#allocation18]
        $region60: #{tpu_custom_call.1} parent=11 // pred_fallthru
          _
        // Predicated region
        $region61: #{tpu_custom_call.1} parent=11 // pred_check
          %p718 = pneg %p404
        $region62: #{tpu_custom_call.1} parent=11 // pred_check_branch
          %720 = sbr.rel (%p718) target = $region64
        $region63: #{tpu_custom_call.1} parent=11 // pred_region
          %s722 = ssub.s32 256, 256
          %723 = vsyncadd [#allocation18], %s722
          %s724 = sshll.u32 [#allocation19], 4
          %s725 = int_to_ptr.vmem [resolvable:$true] %s724
          %730 = dma.hbm_to_vmem [thread:$0]  %s15, 256, %s725, [#allocation18], 64, 64, 4
        $region64: #{tpu_custom_call.1} parent=11 // pred_fallthru
          _
        // Predicated region
        $region65: #{tpu_custom_call.1} parent=11 // pred_check
          %p731 = pneg %p425
        $region66: #{tpu_custom_call.1} parent=11 // pred_check_branch
          %733 = sbr.rel (%p731) target = $region68
        $region67: #{tpu_custom_call.1} parent=11 // pred_region
          %s735 = ssub.s32 16, 16
          %736 = vsyncadd [#allocation21], %s735
          %s738 = sshll.u32 [#allocation20], 4
          %s739 = int_to_ptr.vmem [resolvable:$true] %s738
          %741 = dma.hbm_to_vmem [thread:$0]  %s16, 16, %s739, [#allocation21]
        $region68: #{tpu_custom_call.1} parent=11 // pred_fallthru
          _
        // Predicated region
        $region69: #{tpu_custom_call.1} parent=11 // pred_check
          %p742 = pneg %p446
        $region70: #{tpu_custom_call.1} parent=11 // pred_check_branch
          %744 = sbr.rel (%p742) target = $region72
        $region71: #{tpu_custom_call.1} parent=11 // pred_region
          _
        $region72: #{tpu_custom_call.1} parent=11 // pred_fallthru
          _
        // Predicated region
        $region73: #{tpu_custom_call.1} parent=11 // pred_check
          %p745 = pneg %p467
        $region74: #{tpu_custom_call.1} parent=11 // pred_check_branch
          %747 = sbr.rel (%p745) target = $region76
        $region75: #{tpu_custom_call.1} parent=11 // pred_region
          _
        $region76: #{tpu_custom_call.1} parent=11 // pred_fallthru
          _
        // Predicated region
        $region77: #{tpu_custom_call.1} parent=11 // pred_check
          %p748 = pneg %p488
        $region78: #{tpu_custom_call.1} parent=11 // pred_check_branch
          %750 = sbr.rel (%p748) target = $region80
        $region79: #{tpu_custom_call.1} parent=11 // pred_region
          %s752 = ssub.s32 256, 256
          %753 = vsyncadd [#allocation21], %s752
          %s754 = sshll.u32 [#allocation22], 4
          %s755 = int_to_ptr.vmem [resolvable:$true] %s754
          %760 = dma.hbm_to_vmem [thread:$0]  %s19, 256, %s755, [#allocation21], 64, 64, 4
        $region80: #{tpu_custom_call.1} parent=11 // pred_fallthru
          _
        // Predicated region
        $region81: #{tpu_custom_call.1} parent=11 // pred_check
          %p761 = pneg %p509
        $region82: #{tpu_custom_call.1} parent=11 // pred_check_branch
          %763 = sbr.rel (%p761) target = $region84
        $region83: #{tpu_custom_call.1} parent=11 // pred_region
          _
        $region84: #{tpu_custom_call.1} parent=11 // pred_fallthru
          _
        // Predicated region
        $region85: #{tpu_custom_call.1} parent=11 // pred_check
          %p764 = pneg %p530
        $region86: #{tpu_custom_call.1} parent=11 // pred_check_branch
          %766 = sbr.rel (%p764) target = $region88
        $region87: #{tpu_custom_call.1} parent=11 // pred_region
          _
        $region88: #{tpu_custom_call.1} parent=11 // pred_fallthru
          _
        // Predicated region
        $region89: #{tpu_custom_call.1} parent=11 // pred_check
          %p767 = pneg %p551
        $region90: #{tpu_custom_call.1} parent=11 // pred_check_branch
          %769 = sbr.rel (%p767) target = $region92
        $region91: #{tpu_custom_call.1} parent=11 // pred_region
          _
        $region92: #{tpu_custom_call.1} parent=11 // pred_fallthru
          _
      $region12: #{tpu_custom_call.1} parent=5 // pred_fallthru
        _
      %p770 = scmp.lt.s32.totalorder %s39, 2
      // Predicated region
      $region93: #{tpu_custom_call.1} parent=5 // pred_check
        %p771 = pneg %p770
      $region94: #{tpu_custom_call.1} parent=5 // pred_check_branch
        %773 = sbr.rel (%p771) target = $region96
      $region95: #{tpu_custom_call.1} parent=5 // pred_region
        // Predicated region
        $region97: #{tpu_custom_call.1} parent=95 // pred_check
          %p774 = pneg %p73
        $region98: #{tpu_custom_call.1} parent=95 // pred_check_branch
          %776 = sbr.rel (%p774) target = $region100
        $region99: #{tpu_custom_call.1} parent=95 // pred_region
          %p777 = scmp.lt.s32.totalorder %s46, 1
          %s778 = scalar_select %p777, %s46, 1
          %p779 = scmp.lt.s32.totalorder %s47, 0
          %s780 = scalar_select %p779, %s47, 0
          %s781 = sadd.s32 %s780, %s778
          %s782 = smul.addr %s781, 8
          %s783 = scalar_lea.vmem %s0, %s782
        $region100: #{tpu_custom_call.1} parent=95 // pred_fallthru
          _
        // Predicated region
        $region101: #{tpu_custom_call.1} parent=95 // pred_check
          %p784 = pneg %p99
        $region102: #{tpu_custom_call.1} parent=95 // pred_check_branch
          %786 = sbr.rel (%p784) target = $region104
        $region103: #{tpu_custom_call.1} parent=95 // pred_region
          %p787 = scmp.lt.s32.totalorder %s46, 1
          %s788 = scalar_select %p787, %s46, 1
          %s789 = smul.addr %s788, 8
          %s790 = scalar_lea.vmem %s1, %s789
        $region104: #{tpu_custom_call.1} parent=95 // pred_fallthru
          _
        // Predicated region
        $region105: #{tpu_custom_call.1} parent=95 // pred_check
          %p791 = pneg %p125
        $region106: #{tpu_custom_call.1} parent=95 // pred_check_branch
          %793 = sbr.rel (%p791) target = $region108
        $region107: #{tpu_custom_call.1} parent=95 // pred_region
          %p794 = scmp.lt.s32.totalorder %s46, 1
          %s795 = scalar_select %p794, %s46, 1
          %s796 = smul.addr %s795, 8
          %s797 = scalar_lea.vmem %s2, %s796
        $region108: #{tpu_custom_call.1} parent=95 // pred_fallthru
          _
      $region96: #{tpu_custom_call.1} parent=5 // pred_fallthru
        _
      %p798 = scmp.le.s32.totalorder 1, %s39
      %p799 = scmp.lt.s32.totalorder %s39, 3
      %p800 = pnand %p798, %p799
      %p801 = pneg %p800
      // Predicated region
      $region109: #{tpu_custom_call.1} parent=5 // pred_check
        _
      $region110: #{tpu_custom_call.1} parent=5 // pred_check_branch
        %803 = sbr.rel (%p800) target = $region112
      $region111: #{tpu_custom_call.1} parent=5 // pred_region
        %s804 = ssub.s32 %s39, 1
        // Predicated region
        $region113: #{tpu_custom_call.1} parent=111 // pred_check
          %p805 = pneg %p152
        $region114: #{tpu_custom_call.1} parent=111 // pred_check_branch
          %807 = sbr.rel (%p805) target = $region116
        $region115: #{tpu_custom_call.1} parent=111 // pred_region
          %808 = dma.done [#allocation3], 256
        $region116: #{tpu_custom_call.1} parent=111 // pred_fallthru
          _
        // Predicated region
        $region117: #{tpu_custom_call.1} parent=111 // pred_check
          %p809 = pneg %p173
        $region118: #{tpu_custom_call.1} parent=111 // pred_check_branch
          %811 = sbr.rel (%p809) target = $region120
        $region119: #{tpu_custom_call.1} parent=111 // pred_region
          %812 = dma.done [#allocation6], 16
        $region120: #{tpu_custom_call.1} parent=111 // pred_fallthru
          _
        // Predicated region
        $region121: #{tpu_custom_call.1} parent=111 // pred_check
          %p813 = pneg %p194
        $region122: #{tpu_custom_call.1} parent=111 // pred_check_branch
          %815 = sbr.rel (%p813) target = $region124
        $region123: #{tpu_custom_call.1} parent=111 // pred_region
          %816 = dma.done [#allocation6], 256
        $region124: #{tpu_custom_call.1} parent=111 // pred_fallthru
          _
        // Predicated region
        $region125: #{tpu_custom_call.1} parent=111 // pred_check
          %p817 = pneg %p215
        $region126: #{tpu_custom_call.1} parent=111 // pred_check_branch
          %819 = sbr.rel (%p817) target = $region128
        $region127: #{tpu_custom_call.1} parent=111 // pred_region
          %820 = dma.done [#allocation9], 16
        $region128: #{tpu_custom_call.1} parent=111 // pred_fallthru
          _
        // Predicated region
        $region129: #{tpu_custom_call.1} parent=111 // pred_check
          %p821 = pneg %p236
        $region130: #{tpu_custom_call.1} parent=111 // pred_check_branch
          %823 = sbr.rel (%p821) target = $region132
        $region131: #{tpu_custom_call.1} parent=111 // pred_region
          %824 = dma.done [#allocation9], 256
        $region132: #{tpu_custom_call.1} parent=111 // pred_fallthru
          _
        // Predicated region
        $region133: #{tpu_custom_call.1} parent=111 // pred_check
          %p825 = pneg %p257
        $region134: #{tpu_custom_call.1} parent=111 // pred_check_branch
          %827 = sbr.rel (%p825) target = $region136
        $region135: #{tpu_custom_call.1} parent=111 // pred_region
          %828 = dma.done [#allocation12], 16
        $region136: #{tpu_custom_call.1} parent=111 // pred_fallthru
          _
        // Predicated region
        $region137: #{tpu_custom_call.1} parent=111 // pred_check
          %p829 = pneg %p299
        $region138: #{tpu_custom_call.1} parent=111 // pred_check_branch
          %831 = sbr.rel (%p829) target = $region140
        $region139: #{tpu_custom_call.1} parent=111 // pred_region
          %832 = dma.done [#allocation12], 16
        $region140: #{tpu_custom_call.1} parent=111 // pred_fallthru
          _
        // Predicated region
        $region141: #{tpu_custom_call.1} parent=111 // pred_check
          %p833 = pneg %p320
        $region142: #{tpu_custom_call.1} parent=111 // pred_check_branch
          %835 = sbr.rel (%p833) target = $region144
        $region143: #{tpu_custom_call.1} parent=111 // pred_region
          %836 = dma.done [#allocation15], 256
        $region144: #{tpu_custom_call.1} parent=111 // pred_fallthru
          _
        // Predicated region
        $region145: #{tpu_custom_call.1} parent=111 // pred_check
          %p837 = pneg %p341
        $region146: #{tpu_custom_call.1} parent=111 // pred_check_branch
          %839 = sbr.rel (%p837) target = $region148
        $region147: #{tpu_custom_call.1} parent=111 // pred_region
          %840 = dma.done [#allocation15], 16
        $region148: #{tpu_custom_call.1} parent=111 // pred_fallthru
          _
        // Predicated region
        $region149: #{tpu_custom_call.1} parent=111 // pred_check
          %p841 = pneg %p383
        $region150: #{tpu_custom_call.1} parent=111 // pred_check_branch
          %843 = sbr.rel (%p841) target = $region152
        $region151: #{tpu_custom_call.1} parent=111 // pred_region
          %844 = dma.done [#allocation18], 16
        $region152: #{tpu_custom_call.1} parent=111 // pred_fallthru
          _
        // Predicated region
        $region153: #{tpu_custom_call.1} parent=111 // pred_check
          %p845 = pneg %p404
        $region154: #{tpu_custom_call.1} parent=111 // pred_check_branch
          %847 = sbr.rel (%p845) target = $region156
        $region155: #{tpu_custom_call.1} parent=111 // pred_region
          %848 = dma.done [#allocation18], 256
        $region156: #{tpu_custom_call.1} parent=111 // pred_fallthru
          _
        // Predicated region
        $region157: #{tpu_custom_call.1} parent=111 // pred_check
          %p849 = pneg %p425
        $region158: #{tpu_custom_call.1} parent=111 // pred_check_branch
          %851 = sbr.rel (%p849) target = $region160
        $region159: #{tpu_custom_call.1} parent=111 // pred_region
          %852 = dma.done [#allocation21], 16
        $region160: #{tpu_custom_call.1} parent=111 // pred_fallthru
          _
        // Predicated region
        $region161: #{tpu_custom_call.1} parent=111 // pred_check
          %p853 = pneg %p488
        $region162: #{tpu_custom_call.1} parent=111 // pred_check_branch
          %855 = sbr.rel (%p853) target = $region164
        $region163: #{tpu_custom_call.1} parent=111 // pred_region
          %856 = dma.done [#allocation21], 256
        $region164: #{tpu_custom_call.1} parent=111 // pred_fallthru
          _
        %p857 = scmp.lt.s32.totalorder %s48, 1
        %s858 = scalar_select %p857, %s48, 1
        %p859 = scmp.lt.s32.totalorder %s49, 0
        %s860 = scalar_select %p859, %s49, 0
        %s861 = sadd.s32 %s860, %s858
        %s862 = smul.addr %s861, 8
        %s863 = scalar_lea.vmem %s0, %s862
        %p864 = pneg %p79
        %p865 = pneg %p76
        %p866 = scmp.lt.s32.totalorder %s48, 1
        %s867 = scalar_select %p866, %s48, 1
        %s868 = smul.addr %s867, 8
        %s869 = scalar_lea.vmem %s1, %s868
        %p870 = pneg %p105
        %p871 = pneg %p102
        %p872 = scmp.lt.s32.totalorder %s48, 1
        %s873 = scalar_select %p872, %s48, 1
        %s874 = smul.addr %s873, 8
        %s875 = scalar_lea.vmem %s2, %s874
        %p876 = pneg %p131
        %p877 = pneg %p128
        %p878 = pneg %p152
        %p879 = pneg %p149
        %p880 = pneg %p173
        %p881 = pneg %p170
        %p882 = pneg %p194
        %p883 = pneg %p191
        %p884 = pneg %p215
        %p885 = pneg %p212
        %p886 = pneg %p236
        %p887 = pneg %p233
        %p888 = pneg %p257
        %p889 = pneg %p254
        %p890 = pneg %p278
        %p891 = pneg %p275
        %p892 = pneg %p299
        %p893 = pneg %p296
        %p894 = pneg %p320
        %p895 = pneg %p317
        %p896 = pneg %p341
        %p897 = pneg %p338
        %p898 = pneg %p362
        %p899 = pneg %p359
        %p900 = pneg %p383
        %p901 = pneg %p380
        %p902 = pneg %p404
        %p903 = pneg %p401
        %p904 = pneg %p425
        %p905 = pneg %p422
        %p906 = pneg %p446
        %p907 = pneg %p443
        %p908 = pneg %p467
        %p909 = pneg %p464
        %p910 = pneg %p488
        %p911 = pneg %p485
        %p912 = pneg %p509
        %p913 = pneg %p506
        %p914 = pneg %p530
        %p915 = pneg %p527
        %p916 = pneg %p551
        %p917 = pneg %p548
        %p918 = pneg %p579
        %p919 = pneg %p576
        %s920 = sand.u32 %s566, 1
        %s921 = scalar_lea.sflag [#allocation4], %s920
        %s922 = sand.u32 %s566, 1
        %s923 = smul.addr %s922, 8
        %s924 = scalar_lea.vmem [#allocation23], %s923
        %p925 = scmp.lt.s32.totalorder %s48, 1
        %s926 = scalar_select %p925, %s48, 1
        %p927 = scmp.lt.s32.totalorder %s49, 0
        %s928 = scalar_select %p927, %s49, 0
        %s929 = sadd.s32 %s928, %s926
        %s930 = smul.addr %s929, 8
        %s931 = scalar_lea.vmem %s0, %s930
        %p932 = scmp.lt.s32.totalorder %s48, 1
        %s933 = scalar_select %p932, %s48, 1
        %s934 = smul.addr %s933, 8
        %s935 = scalar_lea.vmem %s1, %s934
        %p936 = scmp.lt.s32.totalorder %s48, 1
        %s937 = scalar_select %p936, %s48, 1
        %s938 = smul.addr %s937, 8
        %s939 = scalar_lea.vmem %s2, %s938
        %v941 = vld [vmem:[%s931] sm:$0xff]
        %v942 = vld [vmem:[%s935] sm:$0xff]
        %v943 = vld [vmem:[%s939] sm:$0xff]
        %v944 = vld [vmem:[#allocation2] sm:$0xf]
        %v945 = vld [vmem:[#allocation2 + $0x4] sm:$0xf]
        %v946 = vld [vmem:[#allocation2 + $0x8] sm:$0xf]
        %v947 = vld [vmem:[#allocation2 + $0xc] sm:$0xf]
        %v948 = vld [vmem:[#allocation5] sm:$0x1]
        %v949 = vld [vmem:[#allocation7] sm:$0xf]
        %v950 = vld [vmem:[#allocation7 + $0x4] sm:$0xf]
        %v951 = vld [vmem:[#allocation7 + $0x8] sm:$0xf]
        %v952 = vld [vmem:[#allocation7 + $0xc] sm:$0xf]
        %v953 = vld [vmem:[#allocation8] sm:$0x1]
        %v954 = vld [vmem:[#allocation10] sm:$0xf]
        %v955 = vld [vmem:[#allocation10 + $0x4] sm:$0xf]
        %v956 = vld [vmem:[#allocation10 + $0x8] sm:$0xf]
        %v957 = vld [vmem:[#allocation10 + $0xc] sm:$0xf]
        %v958 = vld [vmem:[#allocation11] sm:$0x1]
        %v959 = vld [vmem:[%s9] sm:$0xf]
        %v960 = vld [vmem:[%s9 + $0x4] sm:$0xf]
        %v961 = vld [vmem:[%s9 + $0x8] sm:$0xf]
        %v962 = vld [vmem:[%s9 + $0xc] sm:$0xf]
        %v963 = vld [vmem:[#allocation13] sm:$0x1]
        %v964 = vpack.c.bf16 %v941, %v941
        %v965 = vpack.c.bf16 %v942, %v942
        %v967 = vlaneseq
        %v968 = vshrl.u32 %v967, 7
        %v969 = vsub.s32 0, %v968
        %v970 = vrot.slane %v948, %v969
        %v976 = vunpack.c.l.b16 %v944
        %v977 = vunpack.c.l.b16 %v945
        %v978 = vunpack.c.l.b16 %v946
        %v979 = vunpack.c.l.b16 %v947
        %v980 = vpack.c.b16 %v977, %v976
        %v981 = vpack.c.b16 %v979, %v978
        %vm984 = vcmask 261120
        %v986 = vsel %vm984, %v964, 0
        %988 = vmatprep.subr.bf16.mxu0 0
        %989 = vmatpush1.bf16.msra.mxu0 %v980
        %990 = vmatprep.subr.bf16.mxu0 0
        %991 = vmatpush1.bf16.msra.mxu0 %v981
        %992 = vmatprep.subr.bf16.mxu0 0
        %993 = vmatpush1.bf16.msra.mxu0 0
        %994 = vmatprep.subr.bf16.mxu0 0
        %995 = vmatpush1.bf16.msra.mxu0 0
        %996 = vmatprep.subr.bf16.mxu0 0
        %997 = vmatpush1.bf16.msra.mxu0 0
        %998 = vmatprep.subr.bf16.mxu0 0
        %999 = vmatpush1.bf16.msra.mxu0 0
        %1000 = vmatprep.subr.bf16.mxu0 0
        %1001 = vmatpush1.bf16.msra.mxu0 0
        %1002 = vmatprep.subr.bf16.mxu0 0
        %1003 = vmatpush1.bf16.msra.mxu0 0
        %1004 = vmatprep.subr.bf16.mxu0 0
        %1005 = vmatpush1.bf16.msra.mxu0 0
        %1006 = vmatprep.subr.bf16.mxu0 0
        %1007 = vmatpush1.bf16.msra.mxu0 0
        %1008 = vmatprep.subr.bf16.mxu0 0
        %1009 = vmatpush1.bf16.msra.mxu0 0
        %1010 = vmatprep.subr.bf16.mxu0 0
        %1011 = vmatpush1.bf16.msra.mxu0 0
        %1012 = vmatprep.subr.bf16.mxu0 0
        %1013 = vmatpush1.bf16.msra.mxu0 0
        %1014 = vmatprep.subr.bf16.mxu0 0
        %1015 = vmatpush1.bf16.msra.mxu0 0
        %1016 = vmatprep.subr.bf16.mxu0 0
        %1017 = vmatpush1.bf16.msra.mxu0 0
        %1018 = vmatprep.subr.bf16.mxu0 0
        %1019 = vmatpush1.bf16.msra.mxu0 0
        %1020 = vmatprep.mubr.bf16.mxu0 0
        %1021 = vmatmul.mubr.bf16.gmra.mrb[0].mxu0 %v986
        %v1022 = vpop.f32.mrb[0].mxu0
        %v1023 = vadd.f32 %v970, %v1022
        %v1024 = vpop.f32.mrb[0].mxu0
        %v1025 = vpop.f32.mrb[0].mxu0
        %v1026 = vpop.f32.mrb[0].mxu0
        %1027 = vdwg.mxu0
        %v1029 = vlaneseq
        %v1030 = vshrl.u32 %v1029, 7
        %v1031 = vsub.s32 0, %v1030
        %v1032 = vrot.slane %v953, %v1031
        %v1038 = vunpack.c.l.b16 %v949
        %v1039 = vunpack.c.l.b16 %v950
        %v1040 = vunpack.c.l.b16 %v951
        %v1041 = vunpack.c.l.b16 %v952
        %v1042 = vpack.c.b16 %v1039, %v1038
        %v1043 = vpack.c.b16 %v1041, %v1040
        %v1047 = vsel %vm984, %v965, 0
        %1049 = vmatprep.subr.bf16.mxu0 0
        %1050 = vmatpush1.bf16.msra.mxu0 %v1042
        %1051 = vmatprep.subr.bf16.mxu0 0
        %1052 = vmatpush1.bf16.msra.mxu0 %v1043
        %1053 = vmatprep.subr.bf16.mxu0 0
        %1054 = vmatpush1.bf16.msra.mxu0 0
        %1055 = vmatprep.subr.bf16.mxu0 0
        %1056 = vmatpush1.bf16.msra.mxu0 0
        %1057 = vmatprep.subr.bf16.mxu0 0
        %1058 = vmatpush1.bf16.msra.mxu0 0
        %1059 = vmatprep.subr.bf16.mxu0 0
        %1060 = vmatpush1.bf16.msra.mxu0 0
        %1061 = vmatprep.subr.bf16.mxu0 0
        %1062 = vmatpush1.bf16.msra.mxu0 0
        %1063 = vmatprep.subr.bf16.mxu0 0
        %1064 = vmatpush1.bf16.msra.mxu0 0
        %1065 = vmatprep.subr.bf16.mxu0 0
        %1066 = vmatpush1.bf16.msra.mxu0 0
        %1067 = vmatprep.subr.bf16.mxu0 0
        %1068 = vmatpush1.bf16.msra.mxu0 0
        %1069 = vmatprep.subr.bf16.mxu0 0
        %1070 = vmatpush1.bf16.msra.mxu0 0
        %1071 = vmatprep.subr.bf16.mxu0 0
        %1072 = vmatpush1.bf16.msra.mxu0 0
        %1073 = vmatprep.subr.bf16.mxu0 0
        %1074 = vmatpush1.bf16.msra.mxu0 0
        %1075 = vmatprep.subr.bf16.mxu0 0
        %1076 = vmatpush1.bf16.msra.mxu0 0
        %1077 = vmatprep.subr.bf16.mxu0 0
        %1078 = vmatpush1.bf16.msra.mxu0 0
        %1079 = vmatprep.subr.bf16.mxu0 0
        %1080 = vmatpush1.bf16.msra.mxu0 0
        %1081 = vmatprep.mubr.bf16.mxu0 0
        %1082 = vmatmul.mubr.bf16.gmra.mrb[0].mxu0 %v1047
        %v1083 = vpop.f32.mrb[0].mxu0
        %v1084 = vadd.f32 %v1032, %v1083
        %v1085 = vpop.f32.mrb[0].mxu0
        %v1086 = vpop.f32.mrb[0].mxu0
        %v1087 = vpop.f32.mrb[0].mxu0
        %1088 = vdwg.mxu0
        %v1090 = vlaneseq
        %v1091 = vshrl.u32 %v1090, 7
        %v1092 = vsub.s32 0, %v1091
        %v1093 = vrot.slane %v958, %v1092
        %v1099 = vunpack.c.l.b16 %v954
        %v1100 = vunpack.c.l.b16 %v955
        %v1101 = vunpack.c.l.b16 %v956
        %v1102 = vunpack.c.l.b16 %v957
        %v1103 = vpack.c.b16 %v1100, %v1099
        %v1104 = vpack.c.b16 %v1102, %v1101
        %1107 = vmatprep.subr.bf16.mxu0 0
        %1108 = vmatpush1.bf16.msra.mxu0 %v1103
        %1109 = vmatprep.subr.bf16.mxu0 0
        %1110 = vmatpush1.bf16.msra.mxu0 %v1104
        %1111 = vmatprep.subr.bf16.mxu0 0
        %1112 = vmatpush1.bf16.msra.mxu0 0
        %1113 = vmatprep.subr.bf16.mxu0 0
        %1114 = vmatpush1.bf16.msra.mxu0 0
        %1115 = vmatprep.subr.bf16.mxu0 0
        %1116 = vmatpush1.bf16.msra.mxu0 0
        %1117 = vmatprep.subr.bf16.mxu0 0
        %1118 = vmatpush1.bf16.msra.mxu0 0
        %1119 = vmatprep.subr.bf16.mxu0 0
        %1120 = vmatpush1.bf16.msra.mxu0 0
        %1121 = vmatprep.subr.bf16.mxu0 0
        %1122 = vmatpush1.bf16.msra.mxu0 0
        %1123 = vmatprep.subr.bf16.mxu0 0
        %1124 = vmatpush1.bf16.msra.mxu0 0
        %1125 = vmatprep.subr.bf16.mxu0 0
        %1126 = vmatpush1.bf16.msra.mxu0 0
        %1127 = vmatprep.subr.bf16.mxu0 0
        %1128 = vmatpush1.bf16.msra.mxu0 0
        %1129 = vmatprep.subr.bf16.mxu0 0
        %1130 = vmatpush1.bf16.msra.mxu0 0
        %1131 = vmatprep.subr.bf16.mxu0 0
        %1132 = vmatpush1.bf16.msra.mxu0 0
        %1133 = vmatprep.subr.bf16.mxu0 0
        %1134 = vmatpush1.bf16.msra.mxu0 0
        %1135 = vmatprep.subr.bf16.mxu0 0
        %1136 = vmatpush1.bf16.msra.mxu0 0
        %1137 = vmatprep.subr.bf16.mxu0 0
        %1138 = vmatpush1.bf16.msra.mxu0 0
        %1139 = vmatprep.mubr.bf16.mxu0 0
        %1140 = vmatmul.mubr.bf16.gmra.mrb[0].mxu0 %v1047
        %v1141 = vpop.f32.mrb[0].mxu0
        %v1142 = vadd.f32 %v1093, %v1141
        %v1143 = vpop.f32.mrb[0].mxu0
        %v1144 = vpop.f32.mrb[0].mxu0
        %v1145 = vpop.f32.mrb[0].mxu0
        %1146 = vdwg.mxu0
        %v1147 = vmul.f32 %v1023, 0.35355338
        %v1148 = vpack.c.bf16 %v1147, %v1147
        %v1149 = vpack.c.bf16 %v1084, %v1084
        %v1150 = vpack.c.bf16 %v1142, %v1142
        %vm1151 = vcmask 64512
        %v1153 = vsel %vm1151, %v1148, 0
        %v1156 = vsel %vm1151, %v1149, 0
        %1158 = vmatprep.subr.bf16.mxu0 0
        %1159 = vmatpush1.bf16.xpose.msra.mxu0 %v1156
        %1160 = vmatprep.subr.bf16.mxu0 0
        %1161 = vmatpush1.bf16.xpose.msra.mxu0 0
        %1162 = vmatprep.subr.bf16.mxu0 0
        %1163 = vmatpush1.bf16.xpose.msra.mxu0 0
        %1164 = vmatprep.subr.bf16.mxu0 0
        %1165 = vmatpush1.bf16.xpose.msra.mxu0 0
        %1166 = vmatprep.subr.bf16.mxu0 0
        %1167 = vmatpush1.bf16.xpose.msra.mxu0 0
        %1168 = vmatprep.subr.bf16.mxu0 0
        %1169 = vmatpush1.bf16.xpose.msra.mxu0 0
        %1170 = vmatprep.subr.bf16.mxu0 0
        %1171 = vmatpush1.bf16.xpose.msra.mxu0 0
        %1172 = vmatprep.subr.bf16.mxu0 0
        %1173 = vmatpush1.bf16.xpose.msra.mxu0 0
        %1174 = vmatprep.subr.bf16.mxu0 0
        %1175 = vmatpush1.bf16.xpose.msra.mxu0 0
        %1176 = vmatprep.subr.bf16.mxu0 0
        %1177 = vmatpush1.bf16.xpose.msra.mxu0 0
        %1178 = vmatprep.subr.bf16.mxu0 0
        %1179 = vmatpush1.bf16.xpose.msra.mxu0 0
        %1180 = vmatprep.subr.bf16.mxu0 0
        %1181 = vmatpush1.bf16.xpose.msra.mxu0 0
        %1182 = vmatprep.subr.bf16.mxu0 0
        %1183 = vmatpush1.bf16.xpose.msra.mxu0 0
        %1184 = vmatprep.subr.bf16.mxu0 0
        %1185 = vmatpush1.bf16.xpose.msra.mxu0 0
        %1186 = vmatprep.subr.bf16.mxu0 0
        %1187 = vmatpush1.bf16.xpose.msra.mxu0 0
        %1188 = vmatprep.subr.bf16.mxu0 0
        %1189 = vmatpush1.bf16.xpose.msra.mxu0 0
        %1190 = vmatprep.mubr.bf16.mxu0 0
        %1191 = vmatmul.mubr.bf16.gmra.mrb[0].mxu0 %v1153
        %v1192 = vpop.f32.mrb[0].mxu0
        %v1193 = vadd.f32 0.0, %v1192
        %v1194 = vpop.f32.mrb[0].mxu0
        %v1195 = vpop.f32.mrb[0].mxu0
        %v1196 = vpop.f32.mrb[0].mxu0
        %1197 = vdwg.mxu0
        %v1198 = vsel %vm1151, %v1193, -inf
        %1199 = vmax.xlane.f32.xlu0 %v1198
        %v1200 = vpop.xlane.xlu0 %1199
        %v1201 = vsub.f32 %v1193, %v1200
        %v1202 = vmul.f32 %v1201, 1.442695
        %v1203 = vpow.pop %v1202
        %v1204 = vsel %vm1151, %v1203, 0.0
        %1205 = vadd.xlane.f32.xlu0 %v1204
        %v1206 = vpop.xlane.xlu0 %1205
        %v1207 = vrcp.pop %v1206
        %v1208 = vmul.f32 %v1203, %v1207
        %v1209 = vpack.c.bf16 %v1208, %v1208
        %v1211 = vsel %vm1151, %v1209, 0
        %vm1213 = vcmask 1043456
        %v1215 = vsel %vm1213, %v1150, 0
        %1217 = vmatprep.subr.bf16.mxu0 0
        %1218 = vmatpush1.bf16.msra.mxu0 %v1215
        %1219 = vmatprep.subr.bf16.mxu0 0
        %1220 = vmatpush1.bf16.msra.mxu0 0
        %1221 = vmatprep.subr.bf16.mxu0 0
        %1222 = vmatpush1.bf16.msra.mxu0 0
        %1223 = vmatprep.subr.bf16.mxu0 0
        %1224 = vmatpush1.bf16.msra.mxu0 0
        %1225 = vmatprep.subr.bf16.mxu0 0
        %1226 = vmatpush1.bf16.msra.mxu0 0
        %1227 = vmatprep.subr.bf16.mxu0 0
        %1228 = vmatpush1.bf16.msra.mxu0 0
        %1229 = vmatprep.subr.bf16.mxu0 0
        %1230 = vmatpush1.bf16.msra.mxu0 0
        %1231 = vmatprep.subr.bf16.mxu0 0
        %1232 = vmatpush1.bf16.msra.mxu0 0
        %1233 = vmatprep.subr.bf16.mxu0 0
        %1234 = vmatpush1.bf16.msra.mxu0 0
        %1235 = vmatprep.subr.bf16.mxu0 0
        %1236 = vmatpush1.bf16.msra.mxu0 0
        %1237 = vmatprep.subr.bf16.mxu0 0
        %1238 = vmatpush1.bf16.msra.mxu0 0
        %1239 = vmatprep.subr.bf16.mxu0 0
        %1240 = vmatpush1.bf16.msra.mxu0 0
        %1241 = vmatprep.subr.bf16.mxu0 0
        %1242 = vmatpush1.bf16.msra.mxu0 0
        %1243 = vmatprep.subr.bf16.mxu0 0
        %1244 = vmatpush1.bf16.msra.mxu0 0
        %1245 = vmatprep.subr.bf16.mxu0 0
        %1246 = vmatpush1.bf16.msra.mxu0 0
        %1247 = vmatprep.subr.bf16.mxu0 0
        %1248 = vmatpush1.bf16.msra.mxu0 0
        %1249 = vmatprep.mubr.bf16.mxu0 0
        %1250 = vmatmul.mubr.bf16.gmra.mrb[0].mxu0 %v1211
        %v1251 = vpop.f32.mrb[0].mxu0
        %v1252 = vadd.f32 0.0, %v1251
        %v1253 = vpop.f32.mrb[0].mxu0
        %v1254 = vpop.f32.mrb[0].mxu0
        %v1255 = vpop.f32.mrb[0].mxu0
        %1256 = vdwg.mxu0
        %1258 = vrot.lane.b32.xlu0 %v1148, 120
        %v1259 = vpop.permute.xlu0 %1258
        %1261 = vrot.lane.b32.xlu0 %v1149, 120
        %v1262 = vpop.permute.xlu0 %1261
        %v1264 = vsel %vm1151, %v1259, 0
        %v1267 = vsel %vm1151, %v1262, 0
        %1269 = vmatprep.subr.bf16.mxu0 0
        %1270 = vmatpush1.bf16.xpose.msra.mxu0 %v1267
        %1271 = vmatprep.subr.bf16.mxu0 0
        %1272 = vmatpush1.bf16.xpose.msra.mxu0 0
        %1273 = vmatprep.subr.bf16.mxu0 0
        %1274 = vmatpush1.bf16.xpose.msra.mxu0 0
        %1275 = vmatprep.subr.bf16.mxu0 0
        %1276 = vmatpush1.bf16.xpose.msra.mxu0 0
        %1277 = vmatprep.subr.bf16.mxu0 0
        %1278 = vmatpush1.bf16.xpose.msra.mxu0 0
        %1279 = vmatprep.subr.bf16.mxu0 0
        %1280 = vmatpush1.bf16.xpose.msra.mxu0 0
        %1281 = vmatprep.subr.bf16.mxu0 0
        %1282 = vmatpush1.bf16.xpose.msra.mxu0 0
        %1283 = vmatprep.subr.bf16.mxu0 0
        %1284 = vmatpush1.bf16.xpose.msra.mxu0 0
        %1285 = vmatprep.subr.bf16.mxu0 0
        %1286 = vmatpush1.bf16.xpose.msra.mxu0 0
        %1287 = vmatprep.subr.bf16.mxu0 0
        %1288 = vmatpush1.bf16.xpose.msra.mxu0 0
        %1289 = vmatprep.subr.bf16.mxu0 0
        %1290 = vmatpush1.bf16.xpose.msra.mxu0 0
        %1291 = vmatprep.subr.bf16.mxu0 0
        %1292 = vmatpush1.bf16.xpose.msra.mxu0 0
        %1293 = vmatprep.subr.bf16.mxu0 0
        %1294 = vmatpush1.bf16.xpose.msra.mxu0 0
        %1295 = vmatprep.subr.bf16.mxu0 0
        %1296 = vmatpush1.bf16.xpose.msra.mxu0 0
        %1297 = vmatprep.subr.bf16.mxu0 0
        %1298 = vmatpush1.bf16.xpose.msra.mxu0 0
        %1299 = vmatprep.subr.bf16.mxu0 0
        %1300 = vmatpush1.bf16.xpose.msra.mxu0 0
        %1301 = vmatprep.mubr.bf16.mxu0 0
        %1302 = vmatmul.mubr.bf16.gmra.mrb[0].mxu0 %v1264
        %v1303 = vpop.f32.mrb[0].mxu0
        %v1304 = vadd.f32 0.0, %v1303
        %v1305 = vpop.f32.mrb[0].mxu0
        %v1306 = vpop.f32.mrb[0].mxu0
        %v1307 = vpop.f32.mrb[0].mxu0
        %1308 = vdwg.mxu0
        %v1309 = vsel %vm1151, %v1304, -inf
        %1310 = vmax.xlane.f32.xlu0 %v1309
        %v1311 = vpop.xlane.xlu0 %1310
        %v1312 = vsub.f32 %v1304, %v1311
        %v1313 = vmul.f32 %v1312, 1.442695
        %v1314 = vpow.pop %v1313
        %v1315 = vsel %vm1151, %v1314, 0.0
        %1316 = vadd.xlane.f32.xlu0 %v1315
        %v1317 = vpop.xlane.xlu0 %1316
        %v1318 = vrcp.pop %v1317
        %v1319 = vmul.f32 %v1314, %v1318
        %v1320 = vpack.c.bf16 %v1319, %v1319
        %1322 = vrot.lane.b32.xlu0 %v1150, 120
        %v1323 = vpop.permute.xlu0 %1322
        %v1325 = vsel %vm1151, %v1320, 0
        %v1328 = vsel %vm1213, %v1323, 0
        %1330 = vmatprep.subr.bf16.mxu0 0
        %1331 = vmatpush1.bf16.msra.mxu0 %v1328
        %1332 = vmatprep.subr.bf16.mxu0 0
        %1333 = vmatpush1.bf16.msra.mxu0 0
        %1334 = vmatprep.subr.bf16.mxu0 0
        %1335 = vmatpush1.bf16.msra.mxu0 0
        %1336 = vmatprep.subr.bf16.mxu0 0
        %1337 = vmatpush1.bf16.msra.mxu0 0
        %1338 = vmatprep.subr.bf16.mxu0 0
        %1339 = vmatpush1.bf16.msra.mxu0 0
        %1340 = vmatprep.subr.bf16.mxu0 0
        %1341 = vmatpush1.bf16.msra.mxu0 0
        %1342 = vmatprep.subr.bf16.mxu0 0
        %1343 = vmatpush1.bf16.msra.mxu0 0
        %1344 = vmatprep.subr.bf16.mxu0 0
        %1345 = vmatpush1.bf16.msra.mxu0 0
        %1346 = vmatprep.subr.bf16.mxu0 0
        %1347 = vmatpush1.bf16.msra.mxu0 0
        %1348 = vmatprep.subr.bf16.mxu0 0
        %1349 = vmatpush1.bf16.msra.mxu0 0
        %1350 = vmatprep.subr.bf16.mxu0 0
        %1351 = vmatpush1.bf16.msra.mxu0 0
        %1352 = vmatprep.subr.bf16.mxu0 0
        %1353 = vmatpush1.bf16.msra.mxu0 0
        %1354 = vmatprep.subr.bf16.mxu0 0
        %1355 = vmatpush1.bf16.msra.mxu0 0
        %1356 = vmatprep.subr.bf16.mxu0 0
        %1357 = vmatpush1.bf16.msra.mxu0 0
        %1358 = vmatprep.subr.bf16.mxu0 0
        %1359 = vmatpush1.bf16.msra.mxu0 0
        %1360 = vmatprep.subr.bf16.mxu0 0
        %1361 = vmatpush1.bf16.msra.mxu0 0
        %1362 = vmatprep.mubr.bf16.mxu0 0
        %1363 = vmatmul.mubr.bf16.gmra.mrb[0].mxu0 %v1325
        %v1364 = vpop.f32.mrb[0].mxu0
        %v1365 = vadd.f32 0.0, %v1364
        %v1366 = vpop.f32.mrb[0].mxu0
        %v1367 = vpop.f32.mrb[0].mxu0
        %v1368 = vpop.f32.mrb[0].mxu0
        %1369 = vdwg.mxu0
        %1370 = vrot.lane.b32.xlu0 %v1148, 112
        %v1371 = vpop.permute.xlu0 %1370
        %1372 = vrot.lane.b32.xlu0 %v1149, 112
        %v1373 = vpop.permute.xlu0 %1372
        %v1375 = vsel %vm1151, %v1371, 0
        %v1378 = vsel %vm1151, %v1373, 0
        %1380 = vmatprep.subr.bf16.mxu0 0
        %1381 = vmatpush1.bf16.xpose.msra.mxu0 %v1378
        %1382 = vmatprep.subr.bf16.mxu0 0
        %1383 = vmatpush1.bf16.xpose.msra.mxu0 0
        %1384 = vmatprep.subr.bf16.mxu0 0
        %1385 = vmatpush1.bf16.xpose.msra.mxu0 0
        %1386 = vmatprep.subr.bf16.mxu0 0
        %1387 = vmatpush1.bf16.xpose.msra.mxu0 0
        %1388 = vmatprep.subr.bf16.mxu0 0
        %1389 = vmatpush1.bf16.xpose.msra.mxu0 0
        %1390 = vmatprep.subr.bf16.mxu0 0
        %1391 = vmatpush1.bf16.xpose.msra.mxu0 0
        %1392 = vmatprep.subr.bf16.mxu0 0
        %1393 = vmatpush1.bf16.xpose.msra.mxu0 0
        %1394 = vmatprep.subr.bf16.mxu0 0
        %1395 = vmatpush1.bf16.xpose.msra.mxu0 0
        %1396 = vmatprep.subr.bf16.mxu0 0
        %1397 = vmatpush1.bf16.xpose.msra.mxu0 0
        %1398 = vmatprep.subr.bf16.mxu0 0
        %1399 = vmatpush1.bf16.xpose.msra.mxu0 0
        %1400 = vmatprep.subr.bf16.mxu0 0
        %1401 = vmatpush1.bf16.xpose.msra.mxu0 0
        %1402 = vmatprep.subr.bf16.mxu0 0
        %1403 = vmatpush1.bf16.xpose.msra.mxu0 0
        %1404 = vmatprep.subr.bf16.mxu0 0
        %1405 = vmatpush1.bf16.xpose.msra.mxu0 0
        %1406 = vmatprep.subr.bf16.mxu0 0
        %1407 = vmatpush1.bf16.xpose.msra.mxu0 0
        %1408 = vmatprep.subr.bf16.mxu0 0
        %1409 = vmatpush1.bf16.xpose.msra.mxu0 0
        %1410 = vmatprep.subr.bf16.mxu0 0
        %1411 = vmatpush1.bf16.xpose.msra.mxu0 0
        %1412 = vmatprep.mubr.bf16.mxu0 0
        %1413 = vmatmul.mubr.bf16.gmra.mrb[0].mxu0 %v1375
        %v1414 = vpop.f32.mrb[0].mxu0
        %v1415 = vadd.f32 0.0, %v1414
        %v1416 = vpop.f32.mrb[0].mxu0
        %v1417 = vpop.f32.mrb[0].mxu0
        %v1418 = vpop.f32.mrb[0].mxu0
        %1419 = vdwg.mxu0
        %v1420 = vsel %vm1151, %v1415, -inf
        %1421 = vmax.xlane.f32.xlu0 %v1420
        %v1422 = vpop.xlane.xlu0 %1421
        %v1423 = vsub.f32 %v1415, %v1422
        %v1424 = vmul.f32 %v1423, 1.442695
        %v1425 = vpow.pop %v1424
        %v1426 = vsel %vm1151, %v1425, 0.0
        %1427 = vadd.xlane.f32.xlu0 %v1426
        %v1428 = vpop.xlane.xlu0 %1427
        %v1429 = vrcp.pop %v1428
        %v1430 = vmul.f32 %v1425, %v1429
        %v1431 = vpack.c.bf16 %v1430, %v1430
        %1432 = vrot.lane.b32.xlu0 %v1150, 112
        %v1433 = vpop.permute.xlu0 %1432
        %v1435 = vsel %vm1151, %v1431, 0
        %v1438 = vsel %vm1213, %v1433, 0
        %1440 = vmatprep.subr.bf16.mxu0 0
        %1441 = vmatpush1.bf16.msra.mxu0 %v1438
        %1442 = vmatprep.subr.bf16.mxu0 0
        %1443 = vmatpush1.bf16.msra.mxu0 0
        %1444 = vmatprep.subr.bf16.mxu0 0
        %1445 = vmatpush1.bf16.msra.mxu0 0
        %1446 = vmatprep.subr.bf16.mxu0 0
        %1447 = vmatpush1.bf16.msra.mxu0 0
        %1448 = vmatprep.subr.bf16.mxu0 0
        %1449 = vmatpush1.bf16.msra.mxu0 0
        %1450 = vmatprep.subr.bf16.mxu0 0
        %1451 = vmatpush1.bf16.msra.mxu0 0
        %1452 = vmatprep.subr.bf16.mxu0 0
        %1453 = vmatpush1.bf16.msra.mxu0 0
        %1454 = vmatprep.subr.bf16.mxu0 0
        %1455 = vmatpush1.bf16.msra.mxu0 0
        %1456 = vmatprep.subr.bf16.mxu0 0
        %1457 = vmatpush1.bf16.msra.mxu0 0
        %1458 = vmatprep.subr.bf16.mxu0 0
        %1459 = vmatpush1.bf16.msra.mxu0 0
        %1460 = vmatprep.subr.bf16.mxu0 0
        %1461 = vmatpush1.bf16.msra.mxu0 0
        %1462 = vmatprep.subr.bf16.mxu0 0
        %1463 = vmatpush1.bf16.msra.mxu0 0
        %1464 = vmatprep.subr.bf16.mxu0 0
        %1465 = vmatpush1.bf16.msra.mxu0 0
        %1466 = vmatprep.subr.bf16.mxu0 0
        %1467 = vmatpush1.bf16.msra.mxu0 0
        %1468 = vmatprep.subr.bf16.mxu0 0
        %1469 = vmatpush1.bf16.msra.mxu0 0
        %1470 = vmatprep.subr.bf16.mxu0 0
        %1471 = vmatpush1.bf16.msra.mxu0 0
        %1472 = vmatprep.mubr.bf16.mxu0 0
        %1473 = vmatmul.mubr.bf16.gmra.mrb[0].mxu0 %v1435
        %v1474 = vpop.f32.mrb[0].mxu0
        %v1475 = vadd.f32 0.0, %v1474
        %v1476 = vpop.f32.mrb[0].mxu0
        %v1477 = vpop.f32.mrb[0].mxu0
        %v1478 = vpop.f32.mrb[0].mxu0
        %1479 = vdwg.mxu0
        %1480 = vrot.lane.b32.xlu0 %v1148, 104
        %v1481 = vpop.permute.xlu0 %1480
        %1482 = vrot.lane.b32.xlu0 %v1149, 104
        %v1483 = vpop.permute.xlu0 %1482
        %v1485 = vsel %vm1151, %v1481, 0
        %v1488 = vsel %vm1151, %v1483, 0
        %1490 = vmatprep.subr.bf16.mxu0 0
        %1491 = vmatpush1.bf16.xpose.msra.mxu0 %v1488
        %1492 = vmatprep.subr.bf16.mxu0 0
        %1493 = vmatpush1.bf16.xpose.msra.mxu0 0
        %1494 = vmatprep.subr.bf16.mxu0 0
        %1495 = vmatpush1.bf16.xpose.msra.mxu0 0
        %1496 = vmatprep.subr.bf16.mxu0 0
        %1497 = vmatpush1.bf16.xpose.msra.mxu0 0
        %1498 = vmatprep.subr.bf16.mxu0 0
        %1499 = vmatpush1.bf16.xpose.msra.mxu0 0
        %1500 = vmatprep.subr.bf16.mxu0 0
        %1501 = vmatpush1.bf16.xpose.msra.mxu0 0
        %1502 = vmatprep.subr.bf16.mxu0 0
        %1503 = vmatpush1.bf16.xpose.msra.mxu0 0
        %1504 = vmatprep.subr.bf16.mxu0 0
        %1505 = vmatpush1.bf16.xpose.msra.mxu0 0
        %1506 = vmatprep.subr.bf16.mxu0 0
        %1507 = vmatpush1.bf16.xpose.msra.mxu0 0
        %1508 = vmatprep.subr.bf16.mxu0 0
        %1509 = vmatpush1.bf16.xpose.msra.mxu0 0
        %1510 = vmatprep.subr.bf16.mxu0 0
        %1511 = vmatpush1.bf16.xpose.msra.mxu0 0
        %1512 = vmatprep.subr.bf16.mxu0 0
        %1513 = vmatpush1.bf16.xpose.msra.mxu0 0
        %1514 = vmatprep.subr.bf16.mxu0 0
        %1515 = vmatpush1.bf16.xpose.msra.mxu0 0
        %1516 = vmatprep.subr.bf16.mxu0 0
        %1517 = vmatpush1.bf16.xpose.msra.mxu0 0
        %1518 = vmatprep.subr.bf16.mxu0 0
        %1519 = vmatpush1.bf16.xpose.msra.mxu0 0
        %1520 = vmatprep.subr.bf16.mxu0 0
        %1521 = vmatpush1.bf16.xpose.msra.mxu0 0
        %1522 = vmatprep.mubr.bf16.mxu0 0
        %1523 = vmatmul.mubr.bf16.gmra.mrb[0].mxu0 %v1485
        %v1524 = vpop.f32.mrb[0].mxu0
        %v1525 = vadd.f32 0.0, %v1524
        %v1526 = vpop.f32.mrb[0].mxu0
        %v1527 = vpop.f32.mrb[0].mxu0
        %v1528 = vpop.f32.mrb[0].mxu0
        %1529 = vdwg.mxu0
        %v1530 = vsel %vm1151, %v1525, -inf
        %1531 = vmax.xlane.f32.xlu0 %v1530
        %v1532 = vpop.xlane.xlu0 %1531
        %v1533 = vsub.f32 %v1525, %v1532
        %v1534 = vmul.f32 %v1533, 1.442695
        %v1535 = vpow.pop %v1534
        %v1536 = vsel %vm1151, %v1535, 0.0
        %1537 = vadd.xlane.f32.xlu0 %v1536
        %v1538 = vpop.xlane.xlu0 %1537
        %v1539 = vrcp.pop %v1538
        %v1540 = vmul.f32 %v1535, %v1539
        %v1541 = vpack.c.bf16 %v1540, %v1540
        %1542 = vrot.lane.b32.xlu0 %v1150, 104
        %v1543 = vpop.permute.xlu0 %1542
        %v1545 = vsel %vm1151, %v1541, 0
        %v1548 = vsel %vm1213, %v1543, 0
        %1550 = vmatprep.subr.bf16.mxu0 0
        %1551 = vmatpush1.bf16.msra.mxu0 %v1548
        %1552 = vmatprep.subr.bf16.mxu0 0
        %1553 = vmatpush1.bf16.msra.mxu0 0
        %1554 = vmatprep.subr.bf16.mxu0 0
        %1555 = vmatpush1.bf16.msra.mxu0 0
        %1556 = vmatprep.subr.bf16.mxu0 0
        %1557 = vmatpush1.bf16.msra.mxu0 0
        %1558 = vmatprep.subr.bf16.mxu0 0
        %1559 = vmatpush1.bf16.msra.mxu0 0
        %1560 = vmatprep.subr.bf16.mxu0 0
        %1561 = vmatpush1.bf16.msra.mxu0 0
        %1562 = vmatprep.subr.bf16.mxu0 0
        %1563 = vmatpush1.bf16.msra.mxu0 0
        %1564 = vmatprep.subr.bf16.mxu0 0
        %1565 = vmatpush1.bf16.msra.mxu0 0
        %1566 = vmatprep.subr.bf16.mxu0 0
        %1567 = vmatpush1.bf16.msra.mxu0 0
        %1568 = vmatprep.subr.bf16.mxu0 0
        %1569 = vmatpush1.bf16.msra.mxu0 0
        %1570 = vmatprep.subr.bf16.mxu0 0
        %1571 = vmatpush1.bf16.msra.mxu0 0
        %1572 = vmatprep.subr.bf16.mxu0 0
        %1573 = vmatpush1.bf16.msra.mxu0 0
        %1574 = vmatprep.subr.bf16.mxu0 0
        %1575 = vmatpush1.bf16.msra.mxu0 0
        %1576 = vmatprep.subr.bf16.mxu0 0
        %1577 = vmatpush1.bf16.msra.mxu0 0
        %1578 = vmatprep.subr.bf16.mxu0 0
        %1579 = vmatpush1.bf16.msra.mxu0 0
        %1580 = vmatprep.subr.bf16.mxu0 0
        %1581 = vmatpush1.bf16.msra.mxu0 0
        %1582 = vmatprep.mubr.bf16.mxu0 0
        %1583 = vmatmul.mubr.bf16.gmra.mrb[0].mxu0 %v1545
        %v1584 = vpop.f32.mrb[0].mxu0
        %v1585 = vadd.f32 0.0, %v1584
        %v1586 = vpop.f32.mrb[0].mxu0
        %v1587 = vpop.f32.mrb[0].mxu0
        %v1588 = vpop.f32.mrb[0].mxu0
        %1589 = vdwg.mxu0
        %1591 = vrot.lane.b32.xlu0 %v1365, 8
        %v1592 = vpop.permute.xlu0 %1591
        %1595 = vrot.lane.b32.xlu0 %v1475, 16
        %v1596 = vpop.permute.xlu0 %1595
        %1599 = vrot.lane.b32.xlu0 %v1585, 24
        %v1600 = vpop.permute.xlu0 %1599
        %v1602 = vsel %vm1151, %v1252, %v1592
        %vm1603 = vcmask 130048
        %v1604 = vsel %vm1603, %v1602, %v1596
        %vm1605 = vcmask 195584
        %v1606 = vsel %vm1605, %v1604, %v1600
        %v1607 = vpack.c.bf16 %v1606, %v1606
        %v1609 = vlaneseq
        %v1610 = vshrl.u32 %v1609, 7
        %v1611 = vsub.s32 0, %v1610
        %v1612 = vrot.slane %v963, %v1611
        %v1618 = vunpack.c.l.b16 %v959
        %v1619 = vunpack.c.l.b16 %v960
        %v1620 = vunpack.c.l.b16 %v961
        %v1621 = vunpack.c.l.b16 %v962
        %v1622 = vpack.c.b16 %v1619, %v1618
        %v1623 = vpack.c.b16 %v1621, %v1620
        %v1627 = vsel %vm984, %v1607, 0
        %1629 = vmatprep.subr.bf16.mxu0 0
        %1630 = vmatpush1.bf16.msra.mxu0 %v1622
        %1631 = vmatprep.subr.bf16.mxu0 0
        %1632 = vmatpush1.bf16.msra.mxu0 %v1623
        %1633 = vmatprep.subr.bf16.mxu0 0
        %1634 = vmatpush1.bf16.msra.mxu0 0
        %1635 = vmatprep.subr.bf16.mxu0 0
        %1636 = vmatpush1.bf16.msra.mxu0 0
        %1637 = vmatprep.subr.bf16.mxu0 0
        %1638 = vmatpush1.bf16.msra.mxu0 0
        %1639 = vmatprep.subr.bf16.mxu0 0
        %1640 = vmatpush1.bf16.msra.mxu0 0
        %1641 = vmatprep.subr.bf16.mxu0 0
        %1642 = vmatpush1.bf16.msra.mxu0 0
        %1643 = vmatprep.subr.bf16.mxu0 0
        %1644 = vmatpush1.bf16.msra.mxu0 0
        %1645 = vmatprep.subr.bf16.mxu0 0
        %1646 = vmatpush1.bf16.msra.mxu0 0
        %1647 = vmatprep.subr.bf16.mxu0 0
        %1648 = vmatpush1.bf16.msra.mxu0 0
        %1649 = vmatprep.subr.bf16.mxu0 0
        %1650 = vmatpush1.bf16.msra.mxu0 0
        %1651 = vmatprep.subr.bf16.mxu0 0
        %1652 = vmatpush1.bf16.msra.mxu0 0
        %1653 = vmatprep.subr.bf16.mxu0 0
        %1654 = vmatpush1.bf16.msra.mxu0 0
        %1655 = vmatprep.subr.bf16.mxu0 0
        %1656 = vmatpush1.bf16.msra.mxu0 0
        %1657 = vmatprep.subr.bf16.mxu0 0
        %1658 = vmatpush1.bf16.msra.mxu0 0
        %1659 = vmatprep.subr.bf16.mxu0 0
        %1660 = vmatpush1.bf16.msra.mxu0 0
        %1661 = vmatprep.mubr.bf16.mxu0 0
        %1662 = vmatmul.mubr.bf16.gmra.mrb[0].mxu0 %v1627
        %v1663 = vpop.f32.mrb[0].mxu0
        %v1664 = vadd.f32 %v1612, %v1663
        %v1665 = vpop.f32.mrb[0].mxu0
        %v1666 = vpop.f32.mrb[0].mxu0
        %v1667 = vpop.f32.mrb[0].mxu0
        %1668 = vdwg.mxu0
        %v1669 = vadd.f32 %v941, %v1664
        %v1670 = vmul.f32 %v1669, %v1669
        %v1671 = vsel %vm984, %v1670, 0.0
        %1672 = vadd.xlane.f32.xlu0 %v1671
        %v1673 = vpop.xlane.xlu0 %1672
        %v1674 = vmax.f32 %v1673, 1e-24
        %v1675 = vrsqrt.pop %v1674
        %v1676 = vmul.f32 %v1669, %v1675
        %v1677 = vld [vmem:[#allocation14] sm:$0xf]
        %v1678 = vld [vmem:[#allocation14 + $0x4] sm:$0xf]
        %v1679 = vld [vmem:[#allocation14 + $0x8] sm:$0xf]
        %v1680 = vld [vmem:[#allocation14 + $0xc] sm:$0xf]
        %v1681 = vld [vmem:[#allocation16] sm:$0x1]
        %v1682 = vld [vmem:[%s13] sm:$0xf]
        %v1683 = vld [vmem:[%s13 + $0x4] sm:$0xf]
        %v1684 = vld [vmem:[%s13 + $0x8] sm:$0xf]
        %v1685 = vld [vmem:[%s13 + $0xc] sm:$0xf]
        %v1686 = vld [vmem:[#allocation17] sm:$0x1]
        %v1687 = vld [vmem:[#allocation19] sm:$0xf]
        %v1688 = vld [vmem:[#allocation19 + $0x4] sm:$0xf]
        %v1689 = vld [vmem:[#allocation19 + $0x8] sm:$0xf]
        %v1690 = vld [vmem:[#allocation19 + $0xc] sm:$0xf]
        %v1691 = vld [vmem:[#allocation20] sm:$0x1]
        %v1692 = vld [vmem:[%s17] sm:$0xf]
        %v1693 = vld [vmem:[%s17 + $0x4] sm:$0xf]
        %v1694 = vld [vmem:[%s17 + $0x8] sm:$0xf]
        %v1695 = vld [vmem:[%s17 + $0xc] sm:$0xf]
        %v1696 = vld [vmem:[%s18] sm:$0x1]
        %v1697 = vpack.c.bf16 %v1676, %v1676
        %v1698 = vpack.c.bf16 %v943, %v943
        %v1700 = vlaneseq
        %v1701 = vshrl.u32 %v1700, 7
        %v1702 = vsub.s32 0, %v1701
        %v1703 = vrot.slane %v1681, %v1702
        %v1709 = vunpack.c.l.b16 %v1677
        %v1710 = vunpack.c.l.b16 %v1678
        %v1711 = vunpack.c.l.b16 %v1679
        %v1712 = vunpack.c.l.b16 %v1680
        %v1713 = vpack.c.b16 %v1710, %v1709
        %v1714 = vpack.c.b16 %v1712, %v1711
        %v1718 = vsel %vm984, %v1697, 0
        %1720 = vmatprep.subr.bf16.mxu0 0
        %1721 = vmatpush1.bf16.msra.mxu0 %v1713
        %1722 = vmatprep.subr.bf16.mxu0 0
        %1723 = vmatpush1.bf16.msra.mxu0 %v1714
        %1724 = vmatprep.subr.bf16.mxu0 0
        %1725 = vmatpush1.bf16.msra.mxu0 0
        %1726 = vmatprep.subr.bf16.mxu0 0
        %1727 = vmatpush1.bf16.msra.mxu0 0
        %1728 = vmatprep.subr.bf16.mxu0 0
        %1729 = vmatpush1.bf16.msra.mxu0 0
        %1730 = vmatprep.subr.bf16.mxu0 0
        %1731 = vmatpush1.bf16.msra.mxu0 0
        %1732 = vmatprep.subr.bf16.mxu0 0
        %1733 = vmatpush1.bf16.msra.mxu0 0
        %1734 = vmatprep.subr.bf16.mxu0 0
        %1735 = vmatpush1.bf16.msra.mxu0 0
        %1736 = vmatprep.subr.bf16.mxu0 0
        %1737 = vmatpush1.bf16.msra.mxu0 0
        %1738 = vmatprep.subr.bf16.mxu0 0
        %1739 = vmatpush1.bf16.msra.mxu0 0
        %1740 = vmatprep.subr.bf16.mxu0 0
        %1741 = vmatpush1.bf16.msra.mxu0 0
        %1742 = vmatprep.subr.bf16.mxu0 0
        %1743 = vmatpush1.bf16.msra.mxu0 0
        %1744 = vmatprep.subr.bf16.mxu0 0
        %1745 = vmatpush1.bf16.msra.mxu0 0
        %1746 = vmatprep.subr.bf16.mxu0 0
        %1747 = vmatpush1.bf16.msra.mxu0 0
        %1748 = vmatprep.subr.bf16.mxu0 0
        %1749 = vmatpush1.bf16.msra.mxu0 0
        %1750 = vmatprep.subr.bf16.mxu0 0
        %1751 = vmatpush1.bf16.msra.mxu0 0
        %1752 = vmatprep.mubr.bf16.mxu0 0
        %1753 = vmatmul.mubr.bf16.gmra.mrb[0].mxu0 %v1718
        %v1754 = vpop.f32.mrb[0].mxu0
        %v1755 = vadd.f32 %v1703, %v1754
        %v1756 = vpop.f32.mrb[0].mxu0
        %v1757 = vpop.f32.mrb[0].mxu0
        %v1758 = vpop.f32.mrb[0].mxu0
        %1759 = vdwg.mxu0
        %v1761 = vlaneseq
        %v1762 = vshrl.u32 %v1761, 7
        %v1763 = vsub.s32 0, %v1762
        %v1764 = vrot.slane %v1686, %v1763
        %v1770 = vunpack.c.l.b16 %v1682
        %v1771 = vunpack.c.l.b16 %v1683
        %v1772 = vunpack.c.l.b16 %v1684
        %v1773 = vunpack.c.l.b16 %v1685
        %v1774 = vpack.c.b16 %v1771, %v1770
        %v1775 = vpack.c.b16 %v1773, %v1772
        %v1779 = vsel %vm984, %v1698, 0
        %1781 = vmatprep.subr.bf16.mxu0 0
        %1782 = vmatpush1.bf16.msra.mxu0 %v1774
        %1783 = vmatprep.subr.bf16.mxu0 0
        %1784 = vmatpush1.bf16.msra.mxu0 %v1775
        %1785 = vmatprep.subr.bf16.mxu0 0
        %1786 = vmatpush1.bf16.msra.mxu0 0
        %1787 = vmatprep.subr.bf16.mxu0 0
        %1788 = vmatpush1.bf16.msra.mxu0 0
        %1789 = vmatprep.subr.bf16.mxu0 0
        %1790 = vmatpush1.bf16.msra.mxu0 0
        %1791 = vmatprep.subr.bf16.mxu0 0
        %1792 = vmatpush1.bf16.msra.mxu0 0
        %1793 = vmatprep.subr.bf16.mxu0 0
        %1794 = vmatpush1.bf16.msra.mxu0 0
        %1795 = vmatprep.subr.bf16.mxu0 0
        %1796 = vmatpush1.bf16.msra.mxu0 0
        %1797 = vmatprep.subr.bf16.mxu0 0
        %1798 = vmatpush1.bf16.msra.mxu0 0
        %1799 = vmatprep.subr.bf16.mxu0 0
        %1800 = vmatpush1.bf16.msra.mxu0 0
        %1801 = vmatprep.subr.bf16.mxu0 0
        %1802 = vmatpush1.bf16.msra.mxu0 0
        %1803 = vmatprep.subr.bf16.mxu0 0
        %1804 = vmatpush1.bf16.msra.mxu0 0
        %1805 = vmatprep.subr.bf16.mxu0 0
        %1806 = vmatpush1.bf16.msra.mxu0 0
        %1807 = vmatprep.subr.bf16.mxu0 0
        %1808 = vmatpush1.bf16.msra.mxu0 0
        %1809 = vmatprep.subr.bf16.mxu0 0
        %1810 = vmatpush1.bf16.msra.mxu0 0
        %1811 = vmatprep.subr.bf16.mxu0 0
        %1812 = vmatpush1.bf16.msra.mxu0 0
        %1813 = vmatprep.mubr.bf16.mxu0 0
        %1814 = vmatmul.mubr.bf16.gmra.mrb[0].mxu0 %v1779
        %v1815 = vpop.f32.mrb[0].mxu0
        %v1816 = vadd.f32 %v1764, %v1815
        %v1817 = vpop.f32.mrb[0].mxu0
        %v1818 = vpop.f32.mrb[0].mxu0
        %v1819 = vpop.f32.mrb[0].mxu0
        %1820 = vdwg.mxu0
        %v1822 = vlaneseq
        %v1823 = vshrl.u32 %v1822, 7
        %v1824 = vsub.s32 0, %v1823
        %v1825 = vrot.slane %v1691, %v1824
        %v1831 = vunpack.c.l.b16 %v1687
        %v1832 = vunpack.c.l.b16 %v1688
        %v1833 = vunpack.c.l.b16 %v1689
        %v1834 = vunpack.c.l.b16 %v1690
        %v1835 = vpack.c.b16 %v1832, %v1831
        %v1836 = vpack.c.b16 %v1834, %v1833
        %1839 = vmatprep.subr.bf16.mxu0 0
        %1840 = vmatpush1.bf16.msra.mxu0 %v1835
        %1841 = vmatprep.subr.bf16.mxu0 0
        %1842 = vmatpush1.bf16.msra.mxu0 %v1836
        %1843 = vmatprep.subr.bf16.mxu0 0
        %1844 = vmatpush1.bf16.msra.mxu0 0
        %1845 = vmatprep.subr.bf16.mxu0 0
        %1846 = vmatpush1.bf16.msra.mxu0 0
        %1847 = vmatprep.subr.bf16.mxu0 0
        %1848 = vmatpush1.bf16.msra.mxu0 0
        %1849 = vmatprep.subr.bf16.mxu0 0
        %1850 = vmatpush1.bf16.msra.mxu0 0
        %1851 = vmatprep.subr.bf16.mxu0 0
        %1852 = vmatpush1.bf16.msra.mxu0 0
        %1853 = vmatprep.subr.bf16.mxu0 0
        %1854 = vmatpush1.bf16.msra.mxu0 0
        %1855 = vmatprep.subr.bf16.mxu0 0
        %1856 = vmatpush1.bf16.msra.mxu0 0
        %1857 = vmatprep.subr.bf16.mxu0 0
        %1858 = vmatpush1.bf16.msra.mxu0 0
        %1859 = vmatprep.subr.bf16.mxu0 0
        %1860 = vmatpush1.bf16.msra.mxu0 0
        %1861 = vmatprep.subr.bf16.mxu0 0
        %1862 = vmatpush1.bf16.msra.mxu0 0
        %1863 = vmatprep.subr.bf16.mxu0 0
        %1864 = vmatpush1.bf16.msra.mxu0 0
        %1865 = vmatprep.subr.bf16.mxu0 0
        %1866 = vmatpush1.bf16.msra.mxu0 0
        %1867 = vmatprep.subr.bf16.mxu0 0
        %1868 = vmatpush1.bf16.msra.mxu0 0
        %1869 = vmatprep.subr.bf16.mxu0 0
        %1870 = vmatpush1.bf16.msra.mxu0 0
        %1871 = vmatprep.mubr.bf16.mxu0 0
        %1872 = vmatmul.mubr.bf16.gmra.mrb[0].mxu0 %v1779
        %v1873 = vpop.f32.mrb[0].mxu0
        %v1874 = vadd.f32 %v1825, %v1873
        %v1875 = vpop.f32.mrb[0].mxu0
        %v1876 = vpop.f32.mrb[0].mxu0
        %v1877 = vpop.f32.mrb[0].mxu0
        %1878 = vdwg.mxu0
        %v1879 = vmul.f32 %v1755, 0.35355338
        %v1880 = vpack.c.bf16 %v1879, %v1879
        %v1881 = vpack.c.bf16 %v1816, %v1816
        %v1882 = vpack.c.bf16 %v1874, %v1874
        %v1884 = vsel %vm1151, %v1880, 0
        %v1887 = vsel %vm1151, %v1881, 0
        %1889 = vmatprep.subr.bf16.mxu0 0
        %1890 = vmatpush1.bf16.xpose.msra.mxu0 %v1887
        %1891 = vmatprep.subr.bf16.mxu0 0
        %1892 = vmatpush1.bf16.xpose.msra.mxu0 0
        %1893 = vmatprep.subr.bf16.mxu0 0
        %1894 = vmatpush1.bf16.xpose.msra.mxu0 0
        %1895 = vmatprep.subr.bf16.mxu0 0
        %1896 = vmatpush1.bf16.xpose.msra.mxu0 0
        %1897 = vmatprep.subr.bf16.mxu0 0
        %1898 = vmatpush1.bf16.xpose.msra.mxu0 0
        %1899 = vmatprep.subr.bf16.mxu0 0
        %1900 = vmatpush1.bf16.xpose.msra.mxu0 0
        %1901 = vmatprep.subr.bf16.mxu0 0
        %1902 = vmatpush1.bf16.xpose.msra.mxu0 0
        %1903 = vmatprep.subr.bf16.mxu0 0
        %1904 = vmatpush1.bf16.xpose.msra.mxu0 0
        %1905 = vmatprep.subr.bf16.mxu0 0
        %1906 = vmatpush1.bf16.xpose.msra.mxu0 0
        %1907 = vmatprep.subr.bf16.mxu0 0
        %1908 = vmatpush1.bf16.xpose.msra.mxu0 0
        %1909 = vmatprep.subr.bf16.mxu0 0
        %1910 = vmatpush1.bf16.xpose.msra.mxu0 0
        %1911 = vmatprep.subr.bf16.mxu0 0
        %1912 = vmatpush1.bf16.xpose.msra.mxu0 0
        %1913 = vmatprep.subr.bf16.mxu0 0
        %1914 = vmatpush1.bf16.xpose.msra.mxu0 0
        %1915 = vmatprep.subr.bf16.mxu0 0
        %1916 = vmatpush1.bf16.xpose.msra.mxu0 0
        %1917 = vmatprep.subr.bf16.mxu0 0
        %1918 = vmatpush1.bf16.xpose.msra.mxu0 0
        %1919 = vmatprep.subr.bf16.mxu0 0
        %1920 = vmatpush1.bf16.xpose.msra.mxu0 0
        %1921 = vmatprep.mubr.bf16.mxu0 0
        %1922 = vmatmul.mubr.bf16.gmra.mrb[0].mxu0 %v1884
        %v1923 = vpop.f32.mrb[0].mxu0
        %v1924 = vadd.f32 0.0, %v1923
        %v1925 = vpop.f32.mrb[0].mxu0
        %v1926 = vpop.f32.mrb[0].mxu0
        %v1927 = vpop.f32.mrb[0].mxu0
        %1928 = vdwg.mxu0
        %v1929 = vsel %vm1151, %v1924, -inf
        %1930 = vmax.xlane.f32.xlu0 %v1929
        %v1931 = vpop.xlane.xlu0 %1930
        %v1932 = vsub.f32 %v1924, %v1931
        %v1933 = vmul.f32 %v1932, 1.442695
        %v1934 = vpow.pop %v1933
        %v1935 = vsel %vm1151, %v1934, 0.0
        %1936 = vadd.xlane.f32.xlu0 %v1935
        %v1937 = vpop.xlane.xlu0 %1936
        %v1938 = vrcp.pop %v1937
        %v1939 = vmul.f32 %v1934, %v1938
        %v1940 = vpack.c.bf16 %v1939, %v1939
        %v1942 = vsel %vm1151, %v1940, 0
        %v1945 = vsel %vm1213, %v1882, 0
        %1947 = vmatprep.subr.bf16.mxu0 0
        %1948 = vmatpush1.bf16.msra.mxu0 %v1945
        %1949 = vmatprep.subr.bf16.mxu0 0
        %1950 = vmatpush1.bf16.msra.mxu0 0
        %1951 = vmatprep.subr.bf16.mxu0 0
        %1952 = vmatpush1.bf16.msra.mxu0 0
        %1953 = vmatprep.subr.bf16.mxu0 0
        %1954 = vmatpush1.bf16.msra.mxu0 0
        %1955 = vmatprep.subr.bf16.mxu0 0
        %1956 = vmatpush1.bf16.msra.mxu0 0
        %1957 = vmatprep.subr.bf16.mxu0 0
        %1958 = vmatpush1.bf16.msra.mxu0 0
        %1959 = vmatprep.subr.bf16.mxu0 0
        %1960 = vmatpush1.bf16.msra.mxu0 0
        %1961 = vmatprep.subr.bf16.mxu0 0
        %1962 = vmatpush1.bf16.msra.mxu0 0
        %1963 = vmatprep.subr.bf16.mxu0 0
        %1964 = vmatpush1.bf16.msra.mxu0 0
        %1965 = vmatprep.subr.bf16.mxu0 0
        %1966 = vmatpush1.bf16.msra.mxu0 0
        %1967 = vmatprep.subr.bf16.mxu0 0
        %1968 = vmatpush1.bf16.msra.mxu0 0
        %1969 = vmatprep.subr.bf16.mxu0 0
        %1970 = vmatpush1.bf16.msra.mxu0 0
        %1971 = vmatprep.subr.bf16.mxu0 0
        %1972 = vmatpush1.bf16.msra.mxu0 0
        %1973 = vmatprep.subr.bf16.mxu0 0
        %1974 = vmatpush1.bf16.msra.mxu0 0
        %1975 = vmatprep.subr.bf16.mxu0 0
        %1976 = vmatpush1.bf16.msra.mxu0 0
        %1977 = vmatprep.subr.bf16.mxu0 0
        %1978 = vmatpush1.bf16.msra.mxu0 0
        %1979 = vmatprep.mubr.bf16.mxu0 0
        %1980 = vmatmul.mubr.bf16.gmra.mrb[0].mxu0 %v1942
        %v1981 = vpop.f32.mrb[0].mxu0
        %v1982 = vadd.f32 0.0, %v1981
        %v1983 = vpop.f32.mrb[0].mxu0
        %v1984 = vpop.f32.mrb[0].mxu0
        %v1985 = vpop.f32.mrb[0].mxu0
        %1986 = vdwg.mxu0
        %1988 = vrot.lane.b32.xlu0 %v1880, 120
        %v1989 = vpop.permute.xlu0 %1988
        %1991 = vrot.lane.b32.xlu0 %v1881, 120
        %v1992 = vpop.permute.xlu0 %1991
        %v1994 = vsel %vm1151, %v1989, 0
        %v1997 = vsel %vm1151, %v1992, 0
        %1999 = vmatprep.subr.bf16.mxu0 0
        %2000 = vmatpush1.bf16.xpose.msra.mxu0 %v1997
        %2001 = vmatprep.subr.bf16.mxu0 0
        %2002 = vmatpush1.bf16.xpose.msra.mxu0 0
        %2003 = vmatprep.subr.bf16.mxu0 0
        %2004 = vmatpush1.bf16.xpose.msra.mxu0 0
        %2005 = vmatprep.subr.bf16.mxu0 0
        %2006 = vmatpush1.bf16.xpose.msra.mxu0 0
        %2007 = vmatprep.subr.bf16.mxu0 0
        %2008 = vmatpush1.bf16.xpose.msra.mxu0 0
        %2009 = vmatprep.subr.bf16.mxu0 0
        %2010 = vmatpush1.bf16.xpose.msra.mxu0 0
        %2011 = vmatprep.subr.bf16.mxu0 0
        %2012 = vmatpush1.bf16.xpose.msra.mxu0 0
        %2013 = vmatprep.subr.bf16.mxu0 0
        %2014 = vmatpush1.bf16.xpose.msra.mxu0 0
        %2015 = vmatprep.subr.bf16.mxu0 0
        %2016 = vmatpush1.bf16.xpose.msra.mxu0 0
        %2017 = vmatprep.subr.bf16.mxu0 0
        %2018 = vmatpush1.bf16.xpose.msra.mxu0 0
        %2019 = vmatprep.subr.bf16.mxu0 0
        %2020 = vmatpush1.bf16.xpose.msra.mxu0 0
        %2021 = vmatprep.subr.bf16.mxu0 0
        %2022 = vmatpush1.bf16.xpose.msra.mxu0 0
        %2023 = vmatprep.subr.bf16.mxu0 0
        %2024 = vmatpush1.bf16.xpose.msra.mxu0 0
        %2025 = vmatprep.subr.bf16.mxu0 0
        %2026 = vmatpush1.bf16.xpose.msra.mxu0 0
        %2027 = vmatprep.subr.bf16.mxu0 0
        %2028 = vmatpush1.bf16.xpose.msra.mxu0 0
        %2029 = vmatprep.subr.bf16.mxu0 0
        %2030 = vmatpush1.bf16.xpose.msra.mxu0 0
        %2031 = vmatprep.mubr.bf16.mxu0 0
        %2032 = vmatmul.mubr.bf16.gmra.mrb[0].mxu0 %v1994
        %v2033 = vpop.f32.mrb[0].mxu0
        %v2034 = vadd.f32 0.0, %v2033
        %v2035 = vpop.f32.mrb[0].mxu0
        %v2036 = vpop.f32.mrb[0].mxu0
        %v2037 = vpop.f32.mrb[0].mxu0
        %2038 = vdwg.mxu0
        %v2039 = vsel %vm1151, %v2034, -inf
        %2040 = vmax.xlane.f32.xlu0 %v2039
        %v2041 = vpop.xlane.xlu0 %2040
        %v2042 = vsub.f32 %v2034, %v2041
        %v2043 = vmul.f32 %v2042, 1.442695
        %v2044 = vpow.pop %v2043
        %v2045 = vsel %vm1151, %v2044, 0.0
        %2046 = vadd.xlane.f32.xlu0 %v2045
        %v2047 = vpop.xlane.xlu0 %2046
        %v2048 = vrcp.pop %v2047
        %v2049 = vmul.f32 %v2044, %v2048
        %v2050 = vpack.c.bf16 %v2049, %v2049
        %2052 = vrot.lane.b32.xlu0 %v1882, 120
        %v2053 = vpop.permute.xlu0 %2052
        %v2055 = vsel %vm1151, %v2050, 0
        %v2058 = vsel %vm1213, %v2053, 0
        %2060 = vmatprep.subr.bf16.mxu0 0
        %2061 = vmatpush1.bf16.msra.mxu0 %v2058
        %2062 = vmatprep.subr.bf16.mxu0 0
        %2063 = vmatpush1.bf16.msra.mxu0 0
        %2064 = vmatprep.subr.bf16.mxu0 0
        %2065 = vmatpush1.bf16.msra.mxu0 0
        %2066 = vmatprep.subr.bf16.mxu0 0
        %2067 = vmatpush1.bf16.msra.mxu0 0
        %2068 = vmatprep.subr.bf16.mxu0 0
        %2069 = vmatpush1.bf16.msra.mxu0 0
        %2070 = vmatprep.subr.bf16.mxu0 0
        %2071 = vmatpush1.bf16.msra.mxu0 0
        %2072 = vmatprep.subr.bf16.mxu0 0
        %2073 = vmatpush1.bf16.msra.mxu0 0
        %2074 = vmatprep.subr.bf16.mxu0 0
        %2075 = vmatpush1.bf16.msra.mxu0 0
        %2076 = vmatprep.subr.bf16.mxu0 0
        %2077 = vmatpush1.bf16.msra.mxu0 0
        %2078 = vmatprep.subr.bf16.mxu0 0
        %2079 = vmatpush1.bf16.msra.mxu0 0
        %2080 = vmatprep.subr.bf16.mxu0 0
        %2081 = vmatpush1.bf16.msra.mxu0 0
        %2082 = vmatprep.subr.bf16.mxu0 0
        %2083 = vmatpush1.bf16.msra.mxu0 0
        %2084 = vmatprep.subr.bf16.mxu0 0
        %2085 = vmatpush1.bf16.msra.mxu0 0
        %2086 = vmatprep.subr.bf16.mxu0 0
        %2087 = vmatpush1.bf16.msra.mxu0 0
        %2088 = vmatprep.subr.bf16.mxu0 0
        %2089 = vmatpush1.bf16.msra.mxu0 0
        %2090 = vmatprep.subr.bf16.mxu0 0
        %2091 = vmatpush1.bf16.msra.mxu0 0
        %2092 = vmatprep.mubr.bf16.mxu0 0
        %2093 = vmatmul.mubr.bf16.gmra.mrb[0].mxu0 %v2055
        %v2094 = vpop.f32.mrb[0].mxu0
        %v2095 = vadd.f32 0.0, %v2094
        %v2096 = vpop.f32.mrb[0].mxu0
        %v2097 = vpop.f32.mrb[0].mxu0
        %v2098 = vpop.f32.mrb[0].mxu0
        %2099 = vdwg.mxu0
        %2100 = vrot.lane.b32.xlu0 %v1880, 112
        %v2101 = vpop.permute.xlu0 %2100
        %2102 = vrot.lane.b32.xlu0 %v1881, 112
        %v2103 = vpop.permute.xlu0 %2102
        %v2105 = vsel %vm1151, %v2101, 0
        %v2108 = vsel %vm1151, %v2103, 0
        %2110 = vmatprep.subr.bf16.mxu0 0
        %2111 = vmatpush1.bf16.xpose.msra.mxu0 %v2108
        %2112 = vmatprep.subr.bf16.mxu0 0
        %2113 = vmatpush1.bf16.xpose.msra.mxu0 0
        %2114 = vmatprep.subr.bf16.mxu0 0
        %2115 = vmatpush1.bf16.xpose.msra.mxu0 0
        %2116 = vmatprep.subr.bf16.mxu0 0
        %2117 = vmatpush1.bf16.xpose.msra.mxu0 0
        %2118 = vmatprep.subr.bf16.mxu0 0
        %2119 = vmatpush1.bf16.xpose.msra.mxu0 0
        %2120 = vmatprep.subr.bf16.mxu0 0
        %2121 = vmatpush1.bf16.xpose.msra.mxu0 0
        %2122 = vmatprep.subr.bf16.mxu0 0
        %2123 = vmatpush1.bf16.xpose.msra.mxu0 0
        %2124 = vmatprep.subr.bf16.mxu0 0
        %2125 = vmatpush1.bf16.xpose.msra.mxu0 0
        %2126 = vmatprep.subr.bf16.mxu0 0
        %2127 = vmatpush1.bf16.xpose.msra.mxu0 0
        %2128 = vmatprep.subr.bf16.mxu0 0
        %2129 = vmatpush1.bf16.xpose.msra.mxu0 0
        %2130 = vmatprep.subr.bf16.mxu0 0
        %2131 = vmatpush1.bf16.xpose.msra.mxu0 0
        %2132 = vmatprep.subr.bf16.mxu0 0
        %2133 = vmatpush1.bf16.xpose.msra.mxu0 0
        %2134 = vmatprep.subr.bf16.mxu0 0
        %2135 = vmatpush1.bf16.xpose.msra.mxu0 0
        %2136 = vmatprep.subr.bf16.mxu0 0
        %2137 = vmatpush1.bf16.xpose.msra.mxu0 0
        %2138 = vmatprep.subr.bf16.mxu0 0
        %2139 = vmatpush1.bf16.xpose.msra.mxu0 0
        %2140 = vmatprep.subr.bf16.mxu0 0
        %2141 = vmatpush1.bf16.xpose.msra.mxu0 0
        %2142 = vmatprep.mubr.bf16.mxu0 0
        %2143 = vmatmul.mubr.bf16.gmra.mrb[0].mxu0 %v2105
        %v2144 = vpop.f32.mrb[0].mxu0
        %v2145 = vadd.f32 0.0, %v2144
        %v2146 = vpop.f32.mrb[0].mxu0
        %v2147 = vpop.f32.mrb[0].mxu0
        %v2148 = vpop.f32.mrb[0].mxu0
        %2149 = vdwg.mxu0
        %v2150 = vsel %vm1151, %v2145, -inf
        %2151 = vmax.xlane.f32.xlu0 %v2150
        %v2152 = vpop.xlane.xlu0 %2151
        %v2153 = vsub.f32 %v2145, %v2152
        %v2154 = vmul.f32 %v2153, 1.442695
        %v2155 = vpow.pop %v2154
        %v2156 = vsel %vm1151, %v2155, 0.0
        %2157 = vadd.xlane.f32.xlu0 %v2156
        %v2158 = vpop.xlane.xlu0 %2157
        %v2159 = vrcp.pop %v2158
        %v2160 = vmul.f32 %v2155, %v2159
        %v2161 = vpack.c.bf16 %v2160, %v2160
        %2162 = vrot.lane.b32.xlu0 %v1882, 112
        %v2163 = vpop.permute.xlu0 %2162
        %v2165 = vsel %vm1151, %v2161, 0
        %v2168 = vsel %vm1213, %v2163, 0
        %2170 = vmatprep.subr.bf16.mxu0 0
        %2171 = vmatpush1.bf16.msra.mxu0 %v2168
        %2172 = vmatprep.subr.bf16.mxu0 0
        %2173 = vmatpush1.bf16.msra.mxu0 0
        %2174 = vmatprep.subr.bf16.mxu0 0
        %2175 = vmatpush1.bf16.msra.mxu0 0
        %2176 = vmatprep.subr.bf16.mxu0 0
        %2177 = vmatpush1.bf16.msra.mxu0 0
        %2178 = vmatprep.subr.bf16.mxu0 0
        %2179 = vmatpush1.bf16.msra.mxu0 0
        %2180 = vmatprep.subr.bf16.mxu0 0
        %2181 = vmatpush1.bf16.msra.mxu0 0
        %2182 = vmatprep.subr.bf16.mxu0 0
        %2183 = vmatpush1.bf16.msra.mxu0 0
        %2184 = vmatprep.subr.bf16.mxu0 0
        %2185 = vmatpush1.bf16.msra.mxu0 0
        %2186 = vmatprep.subr.bf16.mxu0 0
        %2187 = vmatpush1.bf16.msra.mxu0 0
        %2188 = vmatprep.subr.bf16.mxu0 0
        %2189 = vmatpush1.bf16.msra.mxu0 0
        %2190 = vmatprep.subr.bf16.mxu0 0
        %2191 = vmatpush1.bf16.msra.mxu0 0
        %2192 = vmatprep.subr.bf16.mxu0 0
        %2193 = vmatpush1.bf16.msra.mxu0 0
        %2194 = vmatprep.subr.bf16.mxu0 0
        %2195 = vmatpush1.bf16.msra.mxu0 0
        %2196 = vmatprep.subr.bf16.mxu0 0
        %2197 = vmatpush1.bf16.msra.mxu0 0
        %2198 = vmatprep.subr.bf16.mxu0 0
        %2199 = vmatpush1.bf16.msra.mxu0 0
        %2200 = vmatprep.subr.bf16.mxu0 0
        %2201 = vmatpush1.bf16.msra.mxu0 0
        %2202 = vmatprep.mubr.bf16.mxu0 0
        %2203 = vmatmul.mubr.bf16.gmra.mrb[0].mxu0 %v2165
        %v2204 = vpop.f32.mrb[0].mxu0
        %v2205 = vadd.f32 0.0, %v2204
        %v2206 = vpop.f32.mrb[0].mxu0
        %v2207 = vpop.f32.mrb[0].mxu0
        %v2208 = vpop.f32.mrb[0].mxu0
        %2209 = vdwg.mxu0
        %2210 = vrot.lane.b32.xlu0 %v1880, 104
        %v2211 = vpop.permute.xlu0 %2210
        %2212 = vrot.lane.b32.xlu0 %v1881, 104
        %v2213 = vpop.permute.xlu0 %2212
        %v2215 = vsel %vm1151, %v2211, 0
        %v2218 = vsel %vm1151, %v2213, 0
        %2220 = vmatprep.subr.bf16.mxu0 0
        %2221 = vmatpush1.bf16.xpose.msra.mxu0 %v2218
        %2222 = vmatprep.subr.bf16.mxu0 0
        %2223 = vmatpush1.bf16.xpose.msra.mxu0 0
        %2224 = vmatprep.subr.bf16.mxu0 0
        %2225 = vmatpush1.bf16.xpose.msra.mxu0 0
        %2226 = vmatprep.subr.bf16.mxu0 0
        %2227 = vmatpush1.bf16.xpose.msra.mxu0 0
        %2228 = vmatprep.subr.bf16.mxu0 0
        %2229 = vmatpush1.bf16.xpose.msra.mxu0 0
        %2230 = vmatprep.subr.bf16.mxu0 0
        %2231 = vmatpush1.bf16.xpose.msra.mxu0 0
        %2232 = vmatprep.subr.bf16.mxu0 0
        %2233 = vmatpush1.bf16.xpose.msra.mxu0 0
        %2234 = vmatprep.subr.bf16.mxu0 0
        %2235 = vmatpush1.bf16.xpose.msra.mxu0 0
        %2236 = vmatprep.subr.bf16.mxu0 0
        %2237 = vmatpush1.bf16.xpose.msra.mxu0 0
        %2238 = vmatprep.subr.bf16.mxu0 0
        %2239 = vmatpush1.bf16.xpose.msra.mxu0 0
        %2240 = vmatprep.subr.bf16.mxu0 0
        %2241 = vmatpush1.bf16.xpose.msra.mxu0 0
        %2242 = vmatprep.subr.bf16.mxu0 0
        %2243 = vmatpush1.bf16.xpose.msra.mxu0 0
        %2244 = vmatprep.subr.bf16.mxu0 0
        %2245 = vmatpush1.bf16.xpose.msra.mxu0 0
        %2246 = vmatprep.subr.bf16.mxu0 0
        %2247 = vmatpush1.bf16.xpose.msra.mxu0 0
        %2248 = vmatprep.subr.bf16.mxu0 0
        %2249 = vmatpush1.bf16.xpose.msra.mxu0 0
        %2250 = vmatprep.subr.bf16.mxu0 0
        %2251 = vmatpush1.bf16.xpose.msra.mxu0 0
        %2252 = vmatprep.mubr.bf16.mxu0 0
        %2253 = vmatmul.mubr.bf16.gmra.mrb[0].mxu0 %v2215
        %v2254 = vpop.f32.mrb[0].mxu0
        %v2255 = vadd.f32 0.0, %v2254
        %v2256 = vpop.f32.mrb[0].mxu0
        %v2257 = vpop.f32.mrb[0].mxu0
        %v2258 = vpop.f32.mrb[0].mxu0
        %2259 = vdwg.mxu0
        %v2260 = vsel %vm1151, %v2255, -inf
        %2261 = vmax.xlane.f32.xlu0 %v2260
        %v2262 = vpop.xlane.xlu0 %2261
        %v2263 = vsub.f32 %v2255, %v2262
        %v2264 = vmul.f32 %v2263, 1.442695
        %v2265 = vpow.pop %v2264
        %v2266 = vsel %vm1151, %v2265, 0.0
        %2267 = vadd.xlane.f32.xlu0 %v2266
        %v2268 = vpop.xlane.xlu0 %2267
        %v2269 = vrcp.pop %v2268
        %v2270 = vmul.f32 %v2265, %v2269
        %v2271 = vpack.c.bf16 %v2270, %v2270
        %2272 = vrot.lane.b32.xlu0 %v1882, 104
        %v2273 = vpop.permute.xlu0 %2272
        %v2275 = vsel %vm1151, %v2271, 0
        %v2278 = vsel %vm1213, %v2273, 0
        %2280 = vmatprep.subr.bf16.mxu0 0
        %2281 = vmatpush1.bf16.msra.mxu0 %v2278
        %2282 = vmatprep.subr.bf16.mxu0 0
        %2283 = vmatpush1.bf16.msra.mxu0 0
        %2284 = vmatprep.subr.bf16.mxu0 0
        %2285 = vmatpush1.bf16.msra.mxu0 0
        %2286 = vmatprep.subr.bf16.mxu0 0
        %2287 = vmatpush1.bf16.msra.mxu0 0
        %2288 = vmatprep.subr.bf16.mxu0 0
        %2289 = vmatpush1.bf16.msra.mxu0 0
        %2290 = vmatprep.subr.bf16.mxu0 0
        %2291 = vmatpush1.bf16.msra.mxu0 0
        %2292 = vmatprep.subr.bf16.mxu0 0
        %2293 = vmatpush1.bf16.msra.mxu0 0
        %2294 = vmatprep.subr.bf16.mxu0 0
        %2295 = vmatpush1.bf16.msra.mxu0 0
        %2296 = vmatprep.subr.bf16.mxu0 0
        %2297 = vmatpush1.bf16.msra.mxu0 0
        %2298 = vmatprep.subr.bf16.mxu0 0
        %2299 = vmatpush1.bf16.msra.mxu0 0
        %2300 = vmatprep.subr.bf16.mxu0 0
        %2301 = vmatpush1.bf16.msra.mxu0 0
        %2302 = vmatprep.subr.bf16.mxu0 0
        %2303 = vmatpush1.bf16.msra.mxu0 0
        %2304 = vmatprep.subr.bf16.mxu0 0
        %2305 = vmatpush1.bf16.msra.mxu0 0
        %2306 = vmatprep.subr.bf16.mxu0 0
        %2307 = vmatpush1.bf16.msra.mxu0 0
        %2308 = vmatprep.subr.bf16.mxu0 0
        %2309 = vmatpush1.bf16.msra.mxu0 0
        %2310 = vmatprep.subr.bf16.mxu0 0
        %2311 = vmatpush1.bf16.msra.mxu0 0
        %2312 = vmatprep.mubr.bf16.mxu0 0
        %2313 = vmatmul.mubr.bf16.gmra.mrb[0].mxu0 %v2275
        %v2314 = vpop.f32.mrb[0].mxu0
        %v2315 = vadd.f32 0.0, %v2314
        %v2316 = vpop.f32.mrb[0].mxu0
        %v2317 = vpop.f32.mrb[0].mxu0
        %v2318 = vpop.f32.mrb[0].mxu0
        %2319 = vdwg.mxu0
        %2321 = vrot.lane.b32.xlu0 %v2095, 8
        %v2322 = vpop.permute.xlu0 %2321
        %2325 = vrot.lane.b32.xlu0 %v2205, 16
        %v2326 = vpop.permute.xlu0 %2325
        %2329 = vrot.lane.b32.xlu0 %v2315, 24
        %v2330 = vpop.permute.xlu0 %2329
        %v2332 = vsel %vm1151, %v1982, %v2322
        %v2333 = vsel %vm1603, %v2332, %v2326
        %v2334 = vsel %vm1605, %v2333, %v2330
        %v2335 = vpack.c.bf16 %v2334, %v2334
        %v2337 = vlaneseq
        %v2338 = vshrl.u32 %v2337, 7
        %v2339 = vsub.s32 0, %v2338
        %v2340 = vrot.slane %v1696, %v2339
        %v2346 = vunpack.c.l.b16 %v1692
        %v2347 = vunpack.c.l.b16 %v1693
        %v2348 = vunpack.c.l.b16 %v1694
        %v2349 = vunpack.c.l.b16 %v1695
        %v2350 = vpack.c.b16 %v2347, %v2346
        %v2351 = vpack.c.b16 %v2349, %v2348
        %v2355 = vsel %vm984, %v2335, 0
        %2357 = vmatprep.subr.bf16.mxu0 0
        %2358 = vmatpush1.bf16.msra.mxu0 %v2350
        %2359 = vmatprep.subr.bf16.mxu0 0
        %2360 = vmatpush1.bf16.msra.mxu0 %v2351
        %2361 = vmatprep.subr.bf16.mxu0 0
        %2362 = vmatpush1.bf16.msra.mxu0 0
        %2363 = vmatprep.subr.bf16.mxu0 0
        %2364 = vmatpush1.bf16.msra.mxu0 0
        %2365 = vmatprep.subr.bf16.mxu0 0
        %2366 = vmatpush1.bf16.msra.mxu0 0
        %2367 = vmatprep.subr.bf16.mxu0 0
        %2368 = vmatpush1.bf16.msra.mxu0 0
        %2369 = vmatprep.subr.bf16.mxu0 0
        %2370 = vmatpush1.bf16.msra.mxu0 0
        %2371 = vmatprep.subr.bf16.mxu0 0
        %2372 = vmatpush1.bf16.msra.mxu0 0
        %2373 = vmatprep.subr.bf16.mxu0 0
        %2374 = vmatpush1.bf16.msra.mxu0 0
        %2375 = vmatprep.subr.bf16.mxu0 0
        %2376 = vmatpush1.bf16.msra.mxu0 0
        %2377 = vmatprep.subr.bf16.mxu0 0
        %2378 = vmatpush1.bf16.msra.mxu0 0
        %2379 = vmatprep.subr.bf16.mxu0 0
        %2380 = vmatpush1.bf16.msra.mxu0 0
        %2381 = vmatprep.subr.bf16.mxu0 0
        %2382 = vmatpush1.bf16.msra.mxu0 0
        %2383 = vmatprep.subr.bf16.mxu0 0
        %2384 = vmatpush1.bf16.msra.mxu0 0
        %2385 = vmatprep.subr.bf16.mxu0 0
        %2386 = vmatpush1.bf16.msra.mxu0 0
        %2387 = vmatprep.subr.bf16.mxu0 0
        %2388 = vmatpush1.bf16.msra.mxu0 0
        %2389 = vmatprep.mubr.bf16.mxu0 0
        %2390 = vmatmul.mubr.bf16.gmra.mrb[0].mxu0 %v2355
        %v2391 = vpop.f32.mrb[0].mxu0
        %v2392 = vadd.f32 %v2340, %v2391
        %v2393 = vpop.f32.mrb[0].mxu0
        %v2394 = vpop.f32.mrb[0].mxu0
        %v2395 = vpop.f32.mrb[0].mxu0
        %2396 = vdwg.mxu0
        %v2397 = vadd.f32 %v1676, %v2392
        %v2398 = vmul.f32 %v2397, %v2397
        %v2399 = vsel %vm984, %v2398, 0.0
        %2400 = vadd.xlane.f32.xlu0 %v2399
        %v2401 = vpop.xlane.xlu0 %2400
        %v2402 = vmax.f32 %v2401, 1e-24
        %v2403 = vrsqrt.pop %v2402
        %v2404 = vmul.f32 %v2397, %v2403
        %v2405 = vpack.c.bf16 %v2404, %v2404
        %v2406 = vld [vmem:[#allocation22] sm:$0xf]
        %v2407 = vld [vmem:[#allocation22 + $0x4] sm:$0xf]
        %v2408 = vld [vmem:[#allocation22 + $0x8] sm:$0xf]
        %v2409 = vld [vmem:[#allocation22 + $0xc] sm:$0xf]
        %v2410 = vld [vmem:[%s20] sm:$0x1]
        %v2412 = vlaneseq
        %v2413 = vshrl.u32 %v2412, 7
        %v2414 = vsub.s32 0, %v2413
        %v2415 = vrot.slane %v2410, %v2414
        %v2421 = vunpack.c.l.b16 %v2406
        %v2422 = vunpack.c.l.b16 %v2407
        %v2423 = vunpack.c.l.b16 %v2408
        %v2424 = vunpack.c.l.b16 %v2409
        %v2425 = vpack.c.b16 %v2422, %v2421
        %v2426 = vpack.c.b16 %v2424, %v2423
        %v2430 = vsel %vm984, %v2405, 0
        %2432 = vmatprep.subr.bf16.mxu0 0
        %2433 = vmatpush1.bf16.msra.mxu0 %v2425
        %2434 = vmatprep.subr.bf16.mxu0 0
        %2435 = vmatpush1.bf16.msra.mxu0 %v2426
        %2436 = vmatprep.subr.bf16.mxu0 0
        %2437 = vmatpush1.bf16.msra.mxu0 0
        %2438 = vmatprep.subr.bf16.mxu0 0
        %2439 = vmatpush1.bf16.msra.mxu0 0
        %2440 = vmatprep.subr.bf16.mxu0 0
        %2441 = vmatpush1.bf16.msra.mxu0 0
        %2442 = vmatprep.subr.bf16.mxu0 0
        %2443 = vmatpush1.bf16.msra.mxu0 0
        %2444 = vmatprep.subr.bf16.mxu0 0
        %2445 = vmatpush1.bf16.msra.mxu0 0
        %2446 = vmatprep.subr.bf16.mxu0 0
        %2447 = vmatpush1.bf16.msra.mxu0 0
        %2448 = vmatprep.subr.bf16.mxu0 0
        %2449 = vmatpush1.bf16.msra.mxu0 0
        %2450 = vmatprep.subr.bf16.mxu0 0
        %2451 = vmatpush1.bf16.msra.mxu0 0
        %2452 = vmatprep.subr.bf16.mxu0 0
        %2453 = vmatpush1.bf16.msra.mxu0 0
        %2454 = vmatprep.subr.bf16.mxu0 0
        %2455 = vmatpush1.bf16.msra.mxu0 0
        %2456 = vmatprep.subr.bf16.mxu0 0
        %2457 = vmatpush1.bf16.msra.mxu0 0
        %2458 = vmatprep.subr.bf16.mxu0 0
        %2459 = vmatpush1.bf16.msra.mxu0 0
        %2460 = vmatprep.subr.bf16.mxu0 0
        %2461 = vmatpush1.bf16.msra.mxu0 0
        %2462 = vmatprep.subr.bf16.mxu0 0
        %2463 = vmatpush1.bf16.msra.mxu0 0
        %2464 = vmatprep.mubr.bf16.mxu0 0
        %2465 = vmatmul.mubr.bf16.gmra.mrb[0].mxu0 %v2430
        %v2466 = vpop.f32.mrb[0].mxu0
        %v2467 = vadd.f32 %v2415, %v2466
        %v2468 = vpop.f32.mrb[0].mxu0
        %v2469 = vpop.f32.mrb[0].mxu0
        %v2470 = vpop.f32.mrb[0].mxu0
        %2471 = vdwg.mxu0
        %v2472 = vmax.f32 %v2467, 0.0
        %v2473 = vpack.c.bf16 %v2472, %v2472
        %v2474 = vld [vmem:[%s21] sm:$0xf]
        %v2475 = vld [vmem:[%s21 + $0x4] sm:$0xf]
        %v2476 = vld [vmem:[%s21 + $0x8] sm:$0xf]
        %v2477 = vld [vmem:[%s21 + $0xc] sm:$0xf]
        %v2478 = vld [vmem:[%s21 + $0x10] sm:$0xf]
        %v2479 = vld [vmem:[%s21 + $0x14] sm:$0xf]
        %v2480 = vld [vmem:[%s21 + $0x18] sm:$0xf]
        %v2481 = vld [vmem:[%s21 + $0x1c] sm:$0xf]
        %v2482 = vld [vmem:[%s22] sm:$0x1]
        %v2484 = vlaneseq
        %v2485 = vshrl.u32 %v2484, 7
        %v2486 = vsub.s32 0, %v2485
        %v2487 = vrot.slane %v2482, %v2486
        %v2497 = vunpack.c.l.b16 %v2474
        %v2498 = vunpack.c.l.b16 %v2475
        %v2499 = vunpack.c.l.b16 %v2476
        %v2500 = vunpack.c.l.b16 %v2477
        %v2501 = vunpack.c.l.b16 %v2478
        %v2502 = vunpack.c.l.b16 %v2479
        %v2503 = vunpack.c.l.b16 %v2480
        %v2504 = vunpack.c.l.b16 %v2481
        %v2505 = vpack.c.b16 %v2498, %v2497
        %v2506 = vpack.c.b16 %v2500, %v2499
        %v2507 = vpack.c.b16 %v2502, %v2501
        %v2508 = vpack.c.b16 %v2504, %v2503
        %vm2513 = vcmask 523264
        %v2515 = vsel %vm2513, %v2473, 0
        %2517 = vmatprep.subr.bf16.mxu0 0
        %2518 = vmatpush1.bf16.msra.mxu0 %v2505
        %2519 = vmatprep.subr.bf16.mxu0 0
        %2520 = vmatpush1.bf16.msra.mxu0 %v2506
        %2521 = vmatprep.subr.bf16.mxu0 0
        %2522 = vmatpush1.bf16.msra.mxu0 %v2507
        %2523 = vmatprep.subr.bf16.mxu0 0
        %2524 = vmatpush1.bf16.msra.mxu0 %v2508
        %2525 = vmatprep.subr.bf16.mxu0 0
        %2526 = vmatpush1.bf16.msra.mxu0 0
        %2527 = vmatprep.subr.bf16.mxu0 0
        %2528 = vmatpush1.bf16.msra.mxu0 0
        %2529 = vmatprep.subr.bf16.mxu0 0
        %2530 = vmatpush1.bf16.msra.mxu0 0
        %2531 = vmatprep.subr.bf16.mxu0 0
        %2532 = vmatpush1.bf16.msra.mxu0 0
        %2533 = vmatprep.subr.bf16.mxu0 0
        %2534 = vmatpush1.bf16.msra.mxu0 0
        %2535 = vmatprep.subr.bf16.mxu0 0
        %2536 = vmatpush1.bf16.msra.mxu0 0
        %2537 = vmatprep.subr.bf16.mxu0 0
        %2538 = vmatpush1.bf16.msra.mxu0 0
        %2539 = vmatprep.subr.bf16.mxu0 0
        %2540 = vmatpush1.bf16.msra.mxu0 0
        %2541 = vmatprep.subr.bf16.mxu0 0
        %2542 = vmatpush1.bf16.msra.mxu0 0
        %2543 = vmatprep.subr.bf16.mxu0 0
        %2544 = vmatpush1.bf16.msra.mxu0 0
        %2545 = vmatprep.subr.bf16.mxu0 0
        %2546 = vmatpush1.bf16.msra.mxu0 0
        %2547 = vmatprep.subr.bf16.mxu0 0
        %2548 = vmatpush1.bf16.msra.mxu0 0
        %2549 = vmatprep.mubr.bf16.mxu0 0
        %2550 = vmatmul.mubr.bf16.gmra.mrb[0].mxu0 %v2515
        %v2551 = vpop.f32.mrb[0].mxu0
        %v2552 = vadd.f32 %v2487, %v2551
        %v2553 = vpop.f32.mrb[0].mxu0
        %v2554 = vpop.f32.mrb[0].mxu0
        %v2555 = vpop.f32.mrb[0].mxu0
        %2556 = vdwg.mxu0
        %v2557 = vadd.f32 %v2404, %v2552
        %v2558 = vmul.f32 %v2557, %v2557
        %v2559 = vsel %vm984, %v2558, 0.0
        %2560 = vadd.xlane.f32.xlu0 %v2559
        %v2561 = vpop.xlane.xlu0 %2560
        %v2562 = vmax.f32 %v2561, 1e-24
        %v2563 = vrsqrt.pop %v2562
        %v2564 = vmul.f32 %v2557, %v2563
        %2565 = vst.msk [vmem:[%s924] sm:$0xff] %vm984, %v2564
        %s2566 = sand.u32 %s566, 1
        %s2567 = scalar_lea.sflag [#allocation4], %s2566
        %s2568 = sand.u32 %s566, 1
        %s2569 = smul.addr %s2568, 8
        %s2570 = scalar_lea.vmem [#allocation23], %s2569
        // Predicated region
        $region165: #{tpu_custom_call.1} parent=111 // pred_check
          %p2571 = pneg %p576
        $region166: #{tpu_custom_call.1} parent=111 // pred_check_branch
          %2573 = sbr.rel (%p2571) target = $region168
        $region167: #{tpu_custom_call.1} parent=111 // pred_region
          %s2575 = ssub.s32 128, 128
          %2576 = vsyncadd %s2567, %s2575
          %s2577 = sadd.s32 %s49, %s48
          %s2578 = smul.addr %s2577, 128
          %s2579 = scalar_lea.hbm %s23, %s2578
          %s2581 = sshll.u32 %s2570, 4
          %s2582 = int_to_ptr.vmem [resolvable:$true] %s2581
          %2584 = dma.vmem_to_hbm [thread:$0]  %s2582, 128, %s2579, %s2567
        $region168: #{tpu_custom_call.1} parent=111 // pred_fallthru
          _
      $region112: #{tpu_custom_call.1} parent=5 // pred_fallthru
        _
      %p2585 = scmp.le.s32.totalorder 2, %s39
      // Predicated region
      $region169: #{tpu_custom_call.1} parent=5 // pred_check
        %p2586 = pneg %p2585
      $region170: #{tpu_custom_call.1} parent=5 // pred_check_branch
        %2588 = sbr.rel (%p2586) target = $region172
      $region171: #{tpu_custom_call.1} parent=5 // pred_region
        %s2589 = ssub.s32 %s39, 2
        // Predicated region
        $region173: #{tpu_custom_call.1} parent=171 // pred_check
          %p2590 = pneg %p582
        $region174: #{tpu_custom_call.1} parent=171 // pred_check_branch
          %2592 = sbr.rel (%p2590) target = $region176
        $region175: #{tpu_custom_call.1} parent=171 // pred_region
          %s2593 = sand.u32 %s567, 1
          %s2594 = scalar_lea.sflag [#allocation4], %s2593
          %s2595 = sand.u32 %s567, 1
          %s2596 = smul.addr %s2595, 8
          %s2597 = scalar_lea.vmem [#allocation23], %s2596
          %2598 = dma.done %s2594, 128
        $region176: #{tpu_custom_call.1} parent=171 // pred_fallthru
          _
      $region172: #{tpu_custom_call.1} parent=5 // pred_fallthru
        _
    $region6: #{tpu_custom_call.1} parent=1 // loop_footer
      %s43 = sadd.s32 1, %s39
    $region7: #{tpu_custom_call.1} parent=1 // loop_footer_branch
      %38 = sbr.rel target = $region3
    $region8: #{tpu_custom_call.1} parent=1 // loop_exit
      _
    %2599 = vsyncpa [#allocation3], 1
    %s2600 = scalar_lea.sflag [#allocation3], 1
    %2601 = vsyncpa %s2600, 1
    %2602 = vsyncpa [#allocation6], 1
    %2603 = vsyncpa [#allocation9], 1
    %2604 = vsyncpa [#allocation12], 1
    %2605 = vsyncpa [#allocation15], 1
    %2606 = vsyncpa [#allocation18], 1
    %2607 = vsyncpa [#allocation21], 1
    %2608 = vsyncpa [#allocation4], 1
    %s2609 = scalar_lea.sflag [#allocation4], 1
    %2610 = vsyncpa %s2609, 1

</llo_original>
